<compile_context>
chip_gen: v7x
topology: tpu7x:2x2x1
jax: 0.10.0
libtpu: 0.0.40
codegen_flags: <defaults>
</compile_context>

<pallas_src>
import functools

import jax
import jax.numpy as jnp
from jax.experimental import pallas as pl
from jax.experimental.pallas import tpu as pltpu


# Matmul operands (im2col patches & conv weights) use this dtype; accumulation
# is always f32 on the MXU.  Set to jnp.float32 to recover full-f32 conv math.
MATMUL_DTYPE = jnp.bfloat16

_BN_EPS = 1e-5                       # nn.BatchNorm2d default
_VMEM_LIMIT = 32 * 1024 * 1024       # v7x scoped-VMEM budget (ok on v5e/v6e too)


def _compiler_params():
    return pltpu.CompilerParams(
        dimension_semantics=("parallel",),
        vmem_limit_bytes=_VMEM_LIMIT,
    )


def _padded_vmem_bytes(shape, dtype):
    """Rough per-buffer VMEM footprint incl. (8,128) tile padding."""
    itemsize = jnp.dtype(dtype).itemsize
    if len(shape) >= 2:
        sub = -(-shape[-2] // 8) * 8
        lane = -(-shape[-1] // 128) * 128
        lead = 1
        for d in shape[:-2]:
            lead *= d
        return lead * sub * lane * itemsize
    return max(int(shape[0]) if shape else 1, 1) * itemsize


def _check_vmem_budget(pipelined, scratch):
    """pipelined blocks are double-buffered by the Pallas pipeline."""
    total = 2 * sum(_padded_vmem_bytes(s, d) for s, d in pipelined)
    total += sum(_padded_vmem_bytes(s, d) for s, d in scratch)
    assert total <= _VMEM_LIMIT, (
        f"per-step VMEM estimate {total} B exceeds budget {_VMEM_LIMIT} B; "
        "shrink the per-image block (add spatial tiling with a halo)")


def _pick_row_tile(m, target=512):
    """Largest row-tile <= target that divides m (multiple of 8 preferred)."""
    if m <= target:
        return m
    divs = [t for t in range(1, target + 1) if m % t == 0]
    mult8 = [t for t in divs if t % 8 == 0]
    return max(mult8) if mult8 else m


# ---------------------------------------------------------------------------
# Shared in-kernel body: 3x3 "same" conv via one im2col matmul + BN partials.
# ---------------------------------------------------------------------------
def _conv3x3_im2col(xin, w_ref, y_ref, s_ref, pad_ref, patch_ref,
                    *, Hp, Wp, Cin, Cout):
    """xin: (Hp, Wp, Cin) activation; w_ref: (9*Cin, Cout) flattened weights.

    Writes the pre-BN conv output to y_ref[0] (f32) and per-image per-channel
    [sum, sum_of_squares] partials to s_ref[0] for the two-pass BatchNorm.
    """
    # Zero-padded halo lives in a VMEM scratch: no wrapper-side jnp.pad, so the
    # activation tensor is never re-written to HBM just to add the border.
    pad_ref[...] = jnp.zeros_like(pad_ref)
    pad_ref[1:Hp + 1, 1:Wp + 1, :] = xin.astype(pad_ref.dtype)

    # im2col: build ONE (Hp, Wp, 9*Cin) patch tensor, then a single MXU matmul
    # with K = 9*Cin (instead of 9 tiny K=Cin pushes).
    for ky in range(3):
        for kx in range(3):
            t = ky * 3 + kx
            patch_ref[:, :, t * Cin:(t + 1) * Cin] = \
                pad_ref[ky:ky + Hp, kx:kx + Wp, :]

    patches = patch_ref[...].reshape(Hp * Wp, 9 * Cin)
    acc = jnp.dot(patches, w_ref[...], preferred_element_type=jnp.float32)

    y_ref[0] = acc.reshape(Hp, Wp, Cout)
    # BN partials (finalized across the batch in the next kernel).  NOTE: the
    # conv bias is omitted on purpose -- it cancels exactly in train-mode BN.
    s_ref[0, 0:1, :] = jnp.sum(acc, axis=0, keepdims=True)
    s_ref[0, 1:2, :] = jnp.sum(acc * acc, axis=0, keepdims=True)


def _bn_scale_shift(stats, g, b, inv_count):
    """stats: (N, 2, C) partials -> per-channel affine (scale, shift), f32."""
    s = jnp.sum(stats, axis=0)                    # (2, C)
    mean = s[0:1, :] * inv_count                  # (1, C)
    var = jnp.maximum(s[1:2, :] * inv_count - mean * mean, 0.0)  # biased var
    scale = g * jax.lax.rsqrt(var + _BN_EPS)
    shift = b - mean * scale
    return scale, shift


# ---------------------------------------------------------------------------
# Kernel 1: fused MaxPool2d(2) -> Conv3x3(W1) -> BN1 partial sums.
# ---------------------------------------------------------------------------
def _pool_conv_kernel(x_ref, w_ref, y_ref, s_ref, pad_ref, patch_ref,
                      *, Hp, Wp, Cin, Cout):
    # x_ref: (Hp, 2, Wp, 2*Cin) -- the pre-pool image rows for this batch
    # element, presented via a free wrapper-side reshape so the 2x2 pooling
    # window is two major-dim picks plus two lane sub-slices (no strided loads).
    a0 = x_ref[:, 0, :, 0:Cin]            # h even, w even
    a1 = x_ref[:, 0, :, Cin:2 * Cin]      # h even, w odd
    b0 = x_ref[:, 1, :, 0:Cin]            # h odd,  w even
    b1 = x_ref[:, 1, :, Cin:2 * Cin]      # h odd,  w odd
    pooled = jnp.maximum(jnp.maximum(a0, a1), jnp.maximum(b0, b1))
    _conv3x3_im2col(pooled, w_ref, y_ref, s_ref, pad_ref, patch_ref,
                    Hp=Hp, Wp=Wp, Cin=Cin, Cout=Cout)


def _pool_conv_call(x_nhwc, w_flat):
    N, H, W, Cin = x_nhwc.shape
    Hp, Wp = H // 2, W // 2
    Cout = w_flat.shape[-1]
    # Free row-major reshape: (N, H, W, Cin) -> (N*Hp, 2, Wp, 2*Cin).
    x_r = x_nhwc.reshape(N * Hp, 2, Wp, 2 * Cin)

    _check_vmem_budget(
        pipelined=[((Hp, 2, Wp, 2 * Cin), x_nhwc.dtype),
                   (w_flat.shape, w_flat.dtype),
                   ((1, Hp, Wp, Cout), jnp.float32),
                   ((1, 2, Cout), jnp.float32)],
        scratch=[((Hp + 2, Wp + 2, Cin), MATMUL_DTYPE),
                 ((Hp, Wp, 9 * Cin), MATMUL_DTYPE)])

    kernel = functools.partial(_pool_conv_kernel, Hp=Hp, Wp=Wp,
                               Cin=Cin, Cout=Cout)
    grid_spec = pltpu.PrefetchScalarGridSpec(
        num_scalar_prefetch=0,
        grid=(N,),
        in_specs=[
            pl.BlockSpec((Hp, 2, Wp, 2 * Cin), lambda n: (n, 0, 0, 0)),
            pl.BlockSpec((9 * Cin, Cout), lambda n: (0, 0)),
        ],
        out_specs=(
            pl.BlockSpec((1, Hp, Wp, Cout), lambda n: (n, 0, 0, 0)),
            pl.BlockSpec((1, 2, Cout), lambda n: (n, 0, 0)),
        ),
        scratch_shapes=[
            pltpu.VMEM((Hp + 2, Wp + 2, Cin), MATMUL_DTYPE),
            pltpu.VMEM((Hp, Wp, 9 * Cin), MATMUL_DTYPE),
        ],
    )
    return pl.pallas_call(
        kernel,
        grid_spec=grid_spec,
        out_shape=(jax.ShapeDtypeStruct((N, Hp, Wp, Cout), jnp.float32),
                   jax.ShapeDtypeStruct((N, 2, Cout), jnp.float32)),
        compiler_params=_compiler_params(),
    )(x_r, w_flat)


# ---------------------------------------------------------------------------
# Kernel 2: fused BN1(finalize) -> ReLU -> Conv3x3(W2) -> BN2 partial sums.
# ---------------------------------------------------------------------------
def _bn_relu_conv_kernel(y1_ref, s1_ref, g_ref, b_ref, w_ref, y2_ref, s2_ref,
                         pad_ref, patch_ref, *, Hp, Wp, Cin, Cout, inv_count):
    scale, shift = _bn_scale_shift(s1_ref[...], g_ref[...], b_ref[...],
                                   inv_count)
    a = jnp.maximum(y1_ref[0] * scale.reshape(1, 1, Cin)
                    + shift.reshape(1, 1, Cin), 0.0)
    _conv3x3_im2col(a, w_ref, y2_ref, s2_ref, pad_ref, patch_ref,
                    Hp=Hp, Wp=Wp, Cin=Cin, Cout=Cout)


def _bn_relu_conv_call(y1, s1, gamma, beta, w_flat, inv_count):
    N, Hp, Wp, Cin = y1.shape
    Cout = w_flat.shape[-1]

    _check_vmem_budget(
        pipelined=[((1, Hp, Wp, Cin), y1.dtype), (s1.shape, s1.dtype),
                   (gamma.shape, gamma.dtype), (beta.shape, beta.dtype),
                   (w_flat.shape, w_flat.dtype),
                   ((1, Hp, Wp, Cout), jnp.float32),
                   ((1, 2, Cout), jnp.float32)],
        scratch=[((Hp + 2, Wp + 2, Cin), MATMUL_DTYPE),
                 ((Hp, Wp, 9 * Cin), MATMUL_DTYPE)])

    kernel = functools.partial(_bn_relu_conv_kernel, Hp=Hp, Wp=Wp, Cin=Cin,
                               Cout=Cout, inv_count=inv_count)
    grid_spec = pltpu.PrefetchScalarGridSpec(
        num_scalar_prefetch=0,
        grid=(N,),
        in_specs=[
            pl.BlockSpec((1, Hp, Wp, Cin), lambda n: (n, 0, 0, 0)),
            pl.BlockSpec((N, 2, Cin), lambda n: (0, 0, 0)),
            pl.BlockSpec((1, Cin), lambda n: (0, 0)),
            pl.BlockSpec((1, Cin), lambda n: (0, 0)),
            pl.BlockSpec((9 * Cin, Cout), lambda n: (0, 0)),
        ],
        out_specs=(
            pl.BlockSpec((1, Hp, Wp, Cout), lambda n: (n, 0, 0, 0)),
            pl.BlockSpec((1, 2, Cout), lambda n: (n, 0, 0)),
        ),
        scratch_shapes=[
            pltpu.VMEM((Hp + 2, Wp + 2, Cin), MATMUL_DTYPE),
            pltpu.VMEM((Hp, Wp, 9 * Cin), MATMUL_DTYPE),
        ],
    )
    return pl.pallas_call(
        kernel,
        grid_spec=grid_spec,
        out_shape=(jax.ShapeDtypeStruct((N, Hp, Wp, Cout), jnp.float32),
                   jax.ShapeDtypeStruct((N, 2, Cout), jnp.float32)),
        compiler_params=_compiler_params(),
    )(y1, s1, gamma, beta, w_flat)


# ---------------------------------------------------------------------------
# Kernel 3: BN2(finalize) -> ReLU, tiled over the flattened (N*Hp*Wp) rows.
# ---------------------------------------------------------------------------
def _bn_relu_kernel(y_ref, s_ref, g_ref, b_ref, o_ref, *, inv_count):
    scale, shift = _bn_scale_shift(s_ref[...], g_ref[...], b_ref[...],
                                   inv_count)
    o_ref[...] = jnp.maximum(y_ref[...] * scale + shift, 0.0)


def _bn_relu_call(y, stats, gamma, beta, inv_count):
    N, Hp, Wp, C = y.shape
    M = N * Hp * Wp
    y2d = y.reshape(M, C)                 # free reshape in HBM
    TM = _pick_row_tile(M)

    _check_vmem_budget(
        pipelined=[((TM, C), y.dtype), (stats.shape, stats.dtype),
                   (gamma.shape, gamma.dtype), (beta.shape, beta.dtype),
                   ((TM, C), jnp.float32)],
        scratch=[])

    kernel = functools.partial(_bn_relu_kernel, inv_count=inv_count)
    grid_spec = pltpu.PrefetchScalarGridSpec(
        num_scalar_prefetch=0,
        grid=(M // TM,),
        in_specs=[
            pl.BlockSpec((TM, C), lambda i: (i, 0)),
            pl.BlockSpec((N, 2, C), lambda i: (0, 0, 0)),
            pl.BlockSpec((1, C), lambda i: (0, 0)),
            pl.BlockSpec((1, C), lambda i: (0, 0)),
        ],
        out_specs=pl.BlockSpec((TM, C), lambda i: (i, 0)),
    )
    out = pl.pallas_call(
        kernel,
        grid_spec=grid_spec,
        out_shape=jax.ShapeDtypeStruct((M, C), jnp.float32),
        compiler_params=_compiler_params(),
    )(y2d, stats, gamma, beta)
    return out.reshape(N, Hp, Wp, C)


# ---------------------------------------------------------------------------
# Down module: MaxPool2d(2) -> (Conv3x3 -> BN -> ReLU) x 2
# ---------------------------------------------------------------------------
def down_forward(x_nchw, params):
    x = jnp.transpose(x_nchw, (0, 2, 3, 1)).astype(jnp.float32)  # NCHW -> NHWC
    N, H, W, Cin = x.shape
    assert H % 2 == 0 and W % 2 == 0, "MaxPool2d(2) needs even H and W"
    Hp, Wp = H // 2, W // 2
    inv_count = 1.0 / float(N * Hp * Wp)

    # Weight prep (wrapper glue): HWIO -> (9*Cin, Cout) im2col layout, bf16.
    w1 = params["w1"].reshape(9 * Cin, -1).astype(MATMUL_DTYPE)
    Cmid = w1.shape[-1]
    w2 = params["w2"].reshape(9 * Cmid, -1).astype(MATMUL_DTYPE)
    Cout = w2.shape[-1]
    g1 = params["g1"].reshape(1, Cmid).astype(jnp.float32)
    beta1 = params["beta1"].reshape(1, Cmid).astype(jnp.float32)
    g2 = params["g2"].reshape(1, Cout).astype(jnp.float32)
    beta2 = params["beta2"].reshape(1, Cout).astype(jnp.float32)
    # NOTE: params["b1"] / params["b2"] (conv biases) are intentionally unused:
    # training-mode BatchNorm subtracts the batch mean, which cancels a
    # per-channel bias exactly, so the forward output is identical.

    y1, s1 = _pool_conv_call(x, w1)                       # pool + conv1 + stats
    y2, s2 = _bn_relu_conv_call(y1, s1, g1, beta1, w2, inv_count)
    out = _bn_relu_call(y2, s2, g2, beta2, inv_count)     # bn2 + relu
    return jnp.transpose(out, (0, 3, 1, 2))               # NHWC -> NCHW


def init_down_params(key, in_channels, out_channels):
    mid_channels = out_channels
    k1, k2, kb1, kb2 = jax.random.split(key, 4)
    return {
        "w1": 0.1 * jax.random.normal(k1, (3, 3, in_channels, mid_channels),
                                      jnp.float32),
        "b1": 0.1 * jax.random.normal(kb1, (mid_channels,), jnp.float32),
        "g1": jnp.ones((mid_channels,), jnp.float32),      # BN weight init = 1
        "beta1": jnp.zeros((mid_channels,), jnp.float32),  # BN bias init = 0
        "w2": 0.1 * jax.random.normal(k2, (3, 3, mid_channels, out_channels),
                                      jnp.float32),
        "b2": 0.1 * jax.random.normal(kb2, (out_channels,), jnp.float32),
        "g2": jnp.ones((out_channels,), jnp.float32),
        "beta2": jnp.zeros((out_channels,), jnp.float32),
    }


if __name__ == "__main__":
    key = jax.random.PRNGKey(0)
    kx, kp = jax.random.split(key)

    in_channels, out_channels = 4, 8
    x = jax.random.normal(kx, (2, in_channels, 16, 16), jnp.float32)  # NCHW
    params = init_down_params(kp, in_channels, out_channels)

    out = jax.jit(down_forward)(x, params)   # -> (2, 8, 8, 8) NCHW
    jax.block_until_ready(out)
    assert out.shape == (2, out_channels, 8, 8)
    print("KERNEL_OK")
</pallas_src>

<mosaic_0001>
module attributes {stable_mosaic.version = 11 : i64} {
  func.func @_pool_conv_kernel(%arg0: i32, %arg1: memref<8x2x8x8xf32, #tpu.memory_space<vmem>>, %arg2: memref<36x8xbf16, #tpu.memory_space<vmem>>, %arg3: memref<1x8x8x8xf32, #tpu.memory_space<vmem>>, %arg4: memref<1x2x8xf32, #tpu.memory_space<vmem>>, %arg5: memref<10x10x4xbf16, #tpu.memory_space<vmem>>, %arg6: memref<8x8x36xbf16, #tpu.memory_space<vmem>>) attributes {dimension_semantics = [#tpu.dimension_semantics<parallel>], iteration_bounds = array<i64: 2>, scalar_prefetch = 0 : i64, scratch_operands = 2 : i64, tpu.core_type = #tpu.core_type<tc>, window_params = [{transform_indices = @transform_0, window_bounds = array<i64: 8, 2, 8, 8>}, {pipeline_mode = #tpu.pipeline_mode<synchronous>, transform_indices = @transform_1, window_bounds = array<i64: 36, 8>}, {transform_indices = @transform_2, window_bounds = array<i64: 1, 8, 8, 8>}, {transform_indices = @transform_3, window_bounds = array<i64: 1, 2, 8>}]} {
    %c0 = arith.constant 0 : index
    %c0_0 = arith.constant 0 : index
    %c0_1 = arith.constant 0 : index
    %c0_2 = arith.constant 0 : index
    %0 = vector.load %arg1[%c0, %c0_0, %c0_1, %c0_2] : memref<8x2x8x8xf32, #tpu.memory_space<vmem>>, vector<8x1x8x4xf32>
    %1 = vector.shape_cast %0 : vector<8x1x8x4xf32> to vector<8x8x4xf32>
    %c0_3 = arith.constant 0 : index
    %c0_4 = arith.constant 0 : index
    %c0_5 = arith.constant 0 : index
    %c4 = arith.constant 4 : index
    %2 = vector.load %arg1[%c0_3, %c0_4, %c0_5, %c4] : memref<8x2x8x8xf32, #tpu.memory_space<vmem>>, vector<8x1x8x4xf32>
    %3 = vector.shape_cast %2 : vector<8x1x8x4xf32> to vector<8x8x4xf32>
    %c0_6 = arith.constant 0 : index
    %c1 = arith.constant 1 : index
    %c0_7 = arith.constant 0 : index
    %c0_8 = arith.constant 0 : index
    %4 = vector.load %arg1[%c0_6, %c1, %c0_7, %c0_8] : memref<8x2x8x8xf32, #tpu.memory_space<vmem>>, vector<8x1x8x4xf32>
    %5 = vector.shape_cast %4 : vector<8x1x8x4xf32> to vector<8x8x4xf32>
    %c0_9 = arith.constant 0 : index
    %c1_10 = arith.constant 1 : index
    %c0_11 = arith.constant 0 : index
    %c4_12 = arith.constant 4 : index
    %6 = vector.load %arg1[%c0_9, %c1_10, %c0_11, %c4_12] : memref<8x2x8x8xf32, #tpu.memory_space<vmem>>, vector<8x1x8x4xf32>
    %7 = vector.shape_cast %6 : vector<8x1x8x4xf32> to vector<8x8x4xf32>
    %8 = arith.maximumf %1, %3 : vector<8x8x4xf32>
    %9 = arith.maximumf %5, %7 : vector<8x8x4xf32>
    %10 = arith.maximumf %8, %9 : vector<8x8x4xf32>
    %cst = arith.constant 0.000000e+00 : bf16
    %11 = vector.broadcast %cst : bf16 to vector<10x10x4xbf16>
    %c0_13 = arith.constant 0 : index
    %c0_14 = arith.constant 0 : index
    %c0_15 = arith.constant 0 : index
    %12 = vector.load %arg5[%c0_13, %c0_14, %c0_15] : memref<10x10x4xbf16, #tpu.memory_space<vmem>>, vector<10x10x4xbf16>
    tpu.vector_store %arg5[%c0_13, %c0_14, %c0_15], %11 {strides = array<i32>} : memref<10x10x4xbf16, #tpu.memory_space<vmem>>, vector<10x10x4xbf16>,
    %13 = arith.truncf %10 : vector<8x8x4xf32> to vector<8x8x4xbf16>
    %c1_16 = arith.constant 1 : index
    %c1_17 = arith.constant 1 : index
    %c0_18 = arith.constant 0 : index
    %14 = vector.load %arg5[%c1_16, %c1_17, %c0_18] : memref<10x10x4xbf16, #tpu.memory_space<vmem>>, vector<8x8x4xbf16>
    tpu.vector_store %arg5[%c1_16, %c1_17, %c0_18], %13 {strides = array<i32>} : memref<10x10x4xbf16, #tpu.memory_space<vmem>>, vector<8x8x4xbf16>,
    %c0_19 = arith.constant 0 : index
    %c0_20 = arith.constant 0 : index
    %c0_21 = arith.constant 0 : index
    %15 = vector.load %arg5[%c0_19, %c0_20, %c0_21] : memref<10x10x4xbf16, #tpu.memory_space<vmem>>, vector<8x8x4xbf16>
    %c0_22 = arith.constant 0 : index
    %c0_23 = arith.constant 0 : index
    %c0_24 = arith.constant 0 : index
    %16 = vector.load %arg6[%c0_22, %c0_23, %c0_24] : memref<8x8x36xbf16, #tpu.memory_space<vmem>>, vector<8x8x4xbf16>
    tpu.vector_store %arg6[%c0_22, %c0_23, %c0_24], %15 {strides = array<i32>} : memref<8x8x36xbf16, #tpu.memory_space<vmem>>, vector<8x8x4xbf16>,
    %c0_25 = arith.constant 0 : index
    %c1_26 = arith.constant 1 : index
    %c0_27 = arith.constant 0 : index
    %17 = vector.load %arg5[%c0_25, %c1_26, %c0_27] : memref<10x10x4xbf16, #tpu.memory_space<vmem>>, vector<8x8x4xbf16>
    %c0_28 = arith.constant 0 : index
    %c0_29 = arith.constant 0 : index
    %c4_30 = arith.constant 4 : index
    %18 = vector.load %arg6[%c0_28, %c0_29, %c4_30] : memref<8x8x36xbf16, #tpu.memory_space<vmem>>, vector<8x8x4xbf16>
    tpu.vector_store %arg6[%c0_28, %c0_29, %c4_30], %17 {strides = array<i32>} : memref<8x8x36xbf16, #tpu.memory_space<vmem>>, vector<8x8x4xbf16>,
    %c0_31 = arith.constant 0 : index
    %c2 = arith.constant 2 : index
    %c0_32 = arith.constant 0 : index
    %19 = vector.load %arg5[%c0_31, %c2, %c0_32] : memref<10x10x4xbf16, #tpu.memory_space<vmem>>, vector<8x8x4xbf16>
    %c0_33 = arith.constant 0 : index
    %c0_34 = arith.constant 0 : index
    %c8 = arith.constant 8 : index
    %20 = vector.load %arg6[%c0_33, %c0_34, %c8] : memref<8x8x36xbf16, #tpu.memory_space<vmem>>, vector<8x8x4xbf16>
    tpu.vector_store %arg6[%c0_33, %c0_34, %c8], %19 {strides = array<i32>} : memref<8x8x36xbf16, #tpu.memory_space<vmem>>, vector<8x8x4xbf16>,
    %c1_35 = arith.constant 1 : index
    %c0_36 = arith.constant 0 : index
    %c0_37 = arith.constant 0 : index
    %21 = vector.load %arg5[%c1_35, %c0_36, %c0_37] : memref<10x10x4xbf16, #tpu.memory_space<vmem>>, vector<8x8x4xbf16>
    %c0_38 = arith.constant 0 : index
    %c0_39 = arith.constant 0 : index
    %c12 = arith.constant 12 : index
    %22 = vector.load %arg6[%c0_38, %c0_39, %c12] : memref<8x8x36xbf16, #tpu.memory_space<vmem>>, vector<8x8x4xbf16>
    tpu.vector_store %arg6[%c0_38, %c0_39, %c12], %21 {strides = array<i32>} : memref<8x8x36xbf16, #tpu.memory_space<vmem>>, vector<8x8x4xbf16>,
    %c1_40 = arith.constant 1 : index
    %c1_41 = arith.constant 1 : index
    %c0_42 = arith.constant 0 : index
    %23 = vector.load %arg5[%c1_40, %c1_41, %c0_42] : memref<10x10x4xbf16, #tpu.memory_space<vmem>>, vector<8x8x4xbf16>
    %c0_43 = arith.constant 0 : index
    %c0_44 = arith.constant 0 : index
    %c16 = arith.constant 16 : index
    %24 = vector.load %arg6[%c0_43, %c0_44, %c16] : memref<8x8x36xbf16, #tpu.memory_space<vmem>>, vector<8x8x4xbf16>
    tpu.vector_store %arg6[%c0_43, %c0_44, %c16], %23 {strides = array<i32>} : memref<8x8x36xbf16, #tpu.memory_space<vmem>>, vector<8x8x4xbf16>,
    %c1_45 = arith.constant 1 : index
    %c2_46 = arith.constant 2 : index
    %c0_47 = arith.constant 0 : index
    %25 = vector.load %arg5[%c1_45, %c2_46, %c0_47] : memref<10x10x4xbf16, #tpu.memory_space<vmem>>, vector<8x8x4xbf16>
    %c0_48 = arith.constant 0 : index
    %c0_49 = arith.constant 0 : index
    %c20 = arith.constant 20 : index
    %26 = vector.load %arg6[%c0_48, %c0_49, %c20] : memref<8x8x36xbf16, #tpu.memory_space<vmem>>, vector<8x8x4xbf16>
    tpu.vector_store %arg6[%c0_48, %c0_49, %c20], %25 {strides = array<i32>} : memref<8x8x36xbf16, #tpu.memory_space<vmem>>, vector<8x8x4xbf16>,
    %c2_50 = arith.constant 2 : index
    %c0_51 = arith.constant 0 : index
    %c0_52 = arith.constant 0 : index
    %27 = vector.load %arg5[%c2_50, %c0_51, %c0_52] : memref<10x10x4xbf16, #tpu.memory_space<vmem>>, vector<8x8x4xbf16>
    %c0_53 = arith.constant 0 : index
    %c0_54 = arith.constant 0 : index
    %c24 = arith.constant 24 : index
    %28 = vector.load %arg6[%c0_53, %c0_54, %c24] : memref<8x8x36xbf16, #tpu.memory_space<vmem>>, vector<8x8x4xbf16>
    tpu.vector_store %arg6[%c0_53, %c0_54, %c24], %27 {strides = array<i32>} : memref<8x8x36xbf16, #tpu.memory_space<vmem>>, vector<8x8x4xbf16>,
    %c2_55 = arith.constant 2 : index
    %c1_56 = arith.constant 1 : index
    %c0_57 = arith.constant 0 : index
    %29 = vector.load %arg5[%c2_55, %c1_56, %c0_57] : memref<10x10x4xbf16, #tpu.memory_space<vmem>>, vector<8x8x4xbf16>
    %c0_58 = arith.constant 0 : index
    %c0_59 = arith.constant 0 : index
    %c28 = arith.constant 28 : index
    %30 = vector.load %arg6[%c0_58, %c0_59, %c28] : memref<8x8x36xbf16, #tpu.memory_space<vmem>>, vector<8x8x4xbf16>
    tpu.vector_store %arg6[%c0_58, %c0_59, %c28], %29 {strides = array<i32>} : memref<8x8x36xbf16, #tpu.memory_space<vmem>>, vector<8x8x4xbf16>,
    %c2_60 = arith.constant 2 : index
    %c2_61 = arith.constant 2 : index
    %c0_62 = arith.constant 0 : index
    %31 = vector.load %arg5[%c2_60, %c2_61, %c0_62] : memref<10x10x4xbf16, #tpu.memory_space<vmem>>, vector<8x8x4xbf16>
    %c0_63 = arith.constant 0 : index
    %c0_64 = arith.constant 0 : index
    %c32 = arith.constant 32 : index
    %32 = vector.load %arg6[%c0_63, %c0_64, %c32] : memref<8x8x36xbf16, #tpu.memory_space<vmem>>, vector<8x8x4xbf16>
    tpu.vector_store %arg6[%c0_63, %c0_64, %c32], %31 {strides = array<i32>} : memref<8x8x36xbf16, #tpu.memory_space<vmem>>, vector<8x8x4xbf16>,
    %c0_65 = arith.constant 0 : index
    %c0_66 = arith.constant 0 : index
    %c0_67 = arith.constant 0 : index
    %33 = vector.load %arg6[%c0_65, %c0_66, %c0_67] : memref<8x8x36xbf16, #tpu.memory_space<vmem>>, vector<8x8x36xbf16>
    %34 = vector.shape_cast %33 : vector<8x8x36xbf16> to vector<64x36xbf16>
    %c0_68 = arith.constant 0 : index
    %c0_69 = arith.constant 0 : index
    %35 = vector.load %arg2[%c0_68, %c0_69] : memref<36x8xbf16, #tpu.memory_space<vmem>>, vector<36x8xbf16>
    %cst_70 = arith.constant dense<0.000000e+00> : vector<64x8xf32>
    %36 = tpu.matmul %34, %35, %cst_70 {dimension_numbers = #tpu.dot_dimension_numbers<[1], [0], [0], [1], [0, 0, 1, 1], [], []>} : vector<64x36xbf16>, vector<36x8xbf16>, vector<64x8xf32> -> vector<64x8xf32>
    %37 = vector.shape_cast %36 : vector<64x8xf32> to vector<8x8x8xf32>
    %c0_71 = arith.constant 0 : index
    %c0_72 = arith.constant 0 : index
    %c0_73 = arith.constant 0 : index
    %c0_74 = arith.constant 0 : index
    %38 = vector.load %arg3[%c0_71, %c0_72, %c0_73, %c0_74] : memref<1x8x8x8xf32, #tpu.memory_space<vmem>>, vector<1x8x8x8xf32>
    %39 = vector.shape_cast %38 : vector<1x8x8x8xf32> to vector<8x8x8xf32>
    %40 = vector.shape_cast %37 : vector<8x8x8xf32> to vector<1x8x8x8xf32>
    tpu.vector_store %arg3[%c0_71, %c0_72, %c0_73, %c0_74], %40 {strides = array<i32>} : memref<1x8x8x8xf32, #tpu.memory_space<vmem>>, vector<1x8x8x8xf32>,
    %cst_75 = arith.constant dense<0.000000e+00> : vector<8xf32>
    %41 = vector.multi_reduction <add>, %36, %cst_75 [0] : vector<64x8xf32> to vector<8xf32>
    %42 = vector.shape_cast %41 : vector<8xf32> to vector<1x8xf32>
    %c0_76 = arith.constant 0 : index
    %c0_77 = arith.constant 0 : index
    %c0_78 = arith.constant 0 : index
    %43 = vector.load %arg4[%c0_76, %c0_77, %c0_78] : memref<1x2x8xf32, #tpu.memory_space<vmem>>, vector<1x1x8xf32>
    %44 = vector.shape_cast %43 : vector<1x1x8xf32> to vector<1x8xf32>
    %45 = vector.shape_cast %42 : vector<1x8xf32> to vector<1x1x8xf32>
    tpu.vector_store %arg4[%c0_76, %c0_77, %c0_78], %45 {strides = array<i32>} : memref<1x2x8xf32, #tpu.memory_space<vmem>>, vector<1x1x8xf32>,
    %46 = arith.mulf %36, %36 : vector<64x8xf32>
    %cst_79 = arith.constant dense<0.000000e+00> : vector<8xf32>
    %47 = vector.multi_reduction <add>, %46, %cst_79 [0] : vector<64x8xf32> to vector<8xf32>
    %48 = vector.shape_cast %47 : vector<8xf32> to vector<1x8xf32>
    %c0_80 = arith.constant 0 : index
    %c1_81 = arith.constant 1 : index
    %c0_82 = arith.constant 0 : index
    %49 = vector.load %arg4[%c0_80, %c1_81, %c0_82] : memref<1x2x8xf32, #tpu.memory_space<vmem>>, vector<1x1x8xf32>
    %50 = vector.shape_cast %49 : vector<1x1x8xf32> to vector<1x8xf32>
    %51 = vector.shape_cast %48 : vector<1x8xf32> to vector<1x1x8xf32>
    tpu.vector_store %arg4[%c0_80, %c1_81, %c0_82], %51 {strides = array<i32>} : memref<1x2x8xf32, #tpu.memory_space<vmem>>, vector<1x1x8xf32>,
    return
  }
  func.func @transform_0(%arg0: i32) -> (i32, i32, i32, i32) {
    %c0_i32 = arith.constant 0 : i32
    %c0_i32_0 = arith.constant 0 : i32
    %c0_i32_1 = arith.constant 0 : i32
    %c0_i32_2 = arith.constant 0 : i32
    return %arg0, %c0_i32, %c0_i32_0, %c0_i32_1 : i32, i32, i32, i32
  }
  func.func @transform_1(%arg0: i32) -> (i32, i32) {
    %c0_i32 = arith.constant 0 : i32
    %c0_i32_0 = arith.constant 0 : i32
    %c0_i32_1 = arith.constant 0 : i32
    return %c0_i32, %c0_i32_0 : i32, i32
  }
  func.func @transform_2(%arg0: i32) -> (i32, i32, i32, i32) {
    %c0_i32 = arith.constant 0 : i32
    %c0_i32_0 = arith.constant 0 : i32
    %c0_i32_1 = arith.constant 0 : i32
    %c0_i32_2 = arith.constant 0 : i32
    return %arg0, %c0_i32, %c0_i32_0, %c0_i32_1 : i32, i32, i32, i32
  }
  func.func @transform_3(%arg0: i32) -> (i32, i32, i32) {
    %c0_i32 = arith.constant 0 : i32
    %c0_i32_0 = arith.constant 0 : i32
    %c0_i32_1 = arith.constant 0 : i32
    return %arg0, %c0_i32, %c0_i32_0 : i32, i32, i32
  }
}

module attributes {stable_mosaic.version = 11 : i64} {
  func.func @_bn_relu_conv_kernel(%arg0: i32, %arg1: memref<1x8x8x8xf32, #tpu.memory_space<vmem>>, %arg2: memref<2x2x8xf32, #tpu.memory_space<vmem>>, %arg3: memref<1x8xf32, #tpu.memory_space<vmem>>, %arg4: memref<1x8xf32, #tpu.memory_space<vmem>>, %arg5: memref<72x8xbf16, #tpu.memory_space<vmem>>, %arg6: memref<1x8x8x8xf32, #tpu.memory_space<vmem>>, %arg7: memref<1x2x8xf32, #tpu.memory_space<vmem>>, %arg8: memref<10x10x8xbf16, #tpu.memory_space<vmem>>, %arg9: memref<8x8x72xbf16, #tpu.memory_space<vmem>>) attributes {dimension_semantics = [#tpu.dimension_semantics<parallel>], iteration_bounds = array<i64: 2>, scalar_prefetch = 0 : i64, scratch_operands = 2 : i64, tpu.core_type = #tpu.core_type<tc>, window_params = [{transform_indices = @transform_0, window_bounds = array<i64: 1, 8, 8, 8>}, {pipeline_mode = #tpu.pipeline_mode<synchronous>, transform_indices = @transform_1, window_bounds = array<i64: 2, 2, 8>}, {pipeline_mode = #tpu.pipeline_mode<synchronous>, transform_indices = @transform_2, window_bounds = array<i64: 1, 8>}, {pipeline_mode = #tpu.pipeline_mode<synchronous>, transform_indices = @transform_3, window_bounds = array<i64: 1, 8>}, {pipeline_mode = #tpu.pipeline_mode<synchronous>, transform_indices = @transform_4, window_bounds = array<i64: 72, 8>}, {transform_indices = @transform_5, window_bounds = array<i64: 1, 8, 8, 8>}, {transform_indices = @transform_6, window_bounds = array<i64: 1, 2, 8>}]} {
    %c0 = arith.constant 0 : index
    %c0_0 = arith.constant 0 : index
    %c0_1 = arith.constant 0 : index
    %0 = vector.load %arg2[%c0, %c0_0, %c0_1] : memref<2x2x8xf32, #tpu.memory_space<vmem>>, vector<2x2x8xf32>
    %c0_2 = arith.constant 0 : index
    %c0_3 = arith.constant 0 : index
    %1 = vector.load %arg3[%c0_2, %c0_3] : memref<1x8xf32, #tpu.memory_space<vmem>>, vector<1x8xf32>
    %c0_4 = arith.constant 0 : index
    %c0_5 = arith.constant 0 : index
    %2 = vector.load %arg4[%c0_4, %c0_5] : memref<1x8xf32, #tpu.memory_space<vmem>>, vector<1x8xf32>
    %cst = arith.constant dense<0.000000e+00> : vector<2x8xf32>
    %3 = vector.multi_reduction <add>, %0, %cst [0] : vector<2x2x8xf32> to vector<2x8xf32>
    %4 = vector.extract_strided_slice %3 {offsets = [0, 0], sizes = [1, 8], strides = [1, 1]} : vector<2x8xf32> to vector<1x8xf32>
    %cst_6 = arith.constant 7.812500e-03 : f32
    %5 = vector.broadcast %cst_6 : f32 to vector<1x8xf32>
    %6 = arith.mulf %4, %5 : vector<1x8xf32>
    %7 = vector.extract_strided_slice %3 {offsets = [1, 0], sizes = [1, 8], strides = [1, 1]} : vector<2x8xf32> to vector<1x8xf32>
    %cst_7 = arith.constant 7.812500e-03 : f32
    %8 = vector.broadcast %cst_7 : f32 to vector<1x8xf32>
    %9 = arith.mulf %7, %8 : vector<1x8xf32>
    %10 = arith.mulf %6, %6 : vector<1x8xf32>
    %11 = arith.subf %9, %10 : vector<1x8xf32>
    %cst_8 = arith.constant 0.000000e+00 : f32
    %12 = vector.broadcast %cst_8 : f32 to vector<1x8xf32>
    %13 = arith.maximumf %11, %12 : vector<1x8xf32>
    %cst_9 = arith.constant 9.99999974E-6 : f32
    %14 = vector.broadcast %cst_9 : f32 to vector<1x8xf32>
    %15 = arith.addf %13, %14 : vector<1x8xf32>
    %16 = math.rsqrt %15 : vector<1x8xf32>
    %17 = arith.mulf %1, %16 : vector<1x8xf32>
    %18 = arith.mulf %6, %17 : vector<1x8xf32>
    %19 = arith.subf %2, %18 : vector<1x8xf32>
    %c0_10 = arith.constant 0 : index
    %c0_11 = arith.constant 0 : index
    %c0_12 = arith.constant 0 : index
    %c0_13 = arith.constant 0 : index
    %20 = vector.load %arg1[%c0_10, %c0_11, %c0_12, %c0_13] : memref<1x8x8x8xf32, #tpu.memory_space<vmem>>, vector<1x8x8x8xf32>
    %21 = vector.shape_cast %20 : vector<1x8x8x8xf32> to vector<8x8x8xf32>
    %22 = vector.shape_cast %17 : vector<1x8xf32> to vector<1x1x8xf32>
    %23 = vector.broadcast %22 : vector<1x1x8xf32> to vector<8x8x8xf32>
    %24 = arith.mulf %21, %23 : vector<8x8x8xf32>
    %25 = vector.shape_cast %19 : vector<1x8xf32> to vector<1x1x8xf32>
    %26 = vector.broadcast %25 : vector<1x1x8xf32> to vector<8x8x8xf32>
    %27 = arith.addf %24, %26 : vector<8x8x8xf32>
    %cst_14 = arith.constant 0.000000e+00 : f32
    %28 = vector.broadcast %cst_14 : f32 to vector<8x8x8xf32>
    %29 = arith.maximumf %27, %28 : vector<8x8x8xf32>
    %cst_15 = arith.constant 0.000000e+00 : bf16
    %30 = vector.broadcast %cst_15 : bf16 to vector<10x10x8xbf16>
    %c0_16 = arith.constant 0 : index
    %c0_17 = arith.constant 0 : index
    %c0_18 = arith.constant 0 : index
    %31 = vector.load %arg8[%c0_16, %c0_17, %c0_18] : memref<10x10x8xbf16, #tpu.memory_space<vmem>>, vector<10x10x8xbf16>
    tpu.vector_store %arg8[%c0_16, %c0_17, %c0_18], %30 {strides = array<i32>} : memref<10x10x8xbf16, #tpu.memory_space<vmem>>, vector<10x10x8xbf16>,
    %32 = arith.truncf %29 : vector<8x8x8xf32> to vector<8x8x8xbf16>
    %c1 = arith.constant 1 : index
    %c1_19 = arith.constant 1 : index
    %c0_20 = arith.constant 0 : index
    %33 = vector.load %arg8[%c1, %c1_19, %c0_20] : memref<10x10x8xbf16, #tpu.memory_space<vmem>>, vector<8x8x8xbf16>
    tpu.vector_store %arg8[%c1, %c1_19, %c0_20], %32 {strides = array<i32>} : memref<10x10x8xbf16, #tpu.memory_space<vmem>>, vector<8x8x8xbf16>,
    %c0_21 = arith.constant 0 : index
    %c0_22 = arith.constant 0 : index
    %c0_23 = arith.constant 0 : index
    %34 = vector.load %arg8[%c0_21, %c0_22, %c0_23] : memref<10x10x8xbf16, #tpu.memory_space<vmem>>, vector<8x8x8xbf16>
    %c0_24 = arith.constant 0 : index
    %c0_25 = arith.constant 0 : index
    %c0_26 = arith.constant 0 : index
    %35 = vector.load %arg9[%c0_24, %c0_25, %c0_26] : memref<8x8x72xbf16, #tpu.memory_space<vmem>>, vector<8x8x8xbf16>
    tpu.vector_store %arg9[%c0_24, %c0_25, %c0_26], %34 {strides = array<i32>} : memref<8x8x72xbf16, #tpu.memory_space<vmem>>, vector<8x8x8xbf16>,
    %c0_27 = arith.constant 0 : index
    %c1_28 = arith.constant 1 : index
    %c0_29 = arith.constant 0 : index
    %36 = vector.load %arg8[%c0_27, %c1_28, %c0_29] : memref<10x10x8xbf16, #tpu.memory_space<vmem>>, vector<8x8x8xbf16>
    %c0_30 = arith.constant 0 : index
    %c0_31 = arith.constant 0 : index
    %c8 = arith.constant 8 : index
    %37 = vector.load %arg9[%c0_30, %c0_31, %c8] : memref<8x8x72xbf16, #tpu.memory_space<vmem>>, vector<8x8x8xbf16>
    tpu.vector_store %arg9[%c0_30, %c0_31, %c8], %36 {strides = array<i32>} : memref<8x8x72xbf16, #tpu.memory_space<vmem>>, vector<8x8x8xbf16>,
    %c0_32 = arith.constant 0 : index
    %c2 = arith.constant 2 : index
    %c0_33 = arith.constant 0 : index
    %38 = vector.load %arg8[%c0_32, %c2, %c0_33] : memref<10x10x8xbf16, #tpu.memory_space<vmem>>, vector<8x8x8xbf16>
    %c0_34 = arith.constant 0 : index
    %c0_35 = arith.constant 0 : index
    %c16 = arith.constant 16 : index
    %39 = vector.load %arg9[%c0_34, %c0_35, %c16] : memref<8x8x72xbf16, #tpu.memory_space<vmem>>, vector<8x8x8xbf16>
    tpu.vector_store %arg9[%c0_34, %c0_35, %c16], %38 {strides = array<i32>} : memref<8x8x72xbf16, #tpu.memory_space<vmem>>, vector<8x8x8xbf16>,
    %c1_36 = arith.constant 1 : index
    %c0_37 = arith.constant 0 : index
    %c0_38 = arith.constant 0 : index
    %40 = vector.load %arg8[%c1_36, %c0_37, %c0_38] : memref<10x10x8xbf16, #tpu.memory_space<vmem>>, vector<8x8x8xbf16>
    %c0_39 = arith.constant 0 : index
    %c0_40 = arith.constant 0 : index
    %c24 = arith.constant 24 : index
    %41 = vector.load %arg9[%c0_39, %c0_40, %c24] : memref<8x8x72xbf16, #tpu.memory_space<vmem>>, vector<8x8x8xbf16>
    tpu.vector_store %arg9[%c0_39, %c0_40, %c24], %40 {strides = array<i32>} : memref<8x8x72xbf16, #tpu.memory_space<vmem>>, vector<8x8x8xbf16>,
    %c1_41 = arith.constant 1 : index
    %c1_42 = arith.constant 1 : index
    %c0_43 = arith.constant 0 : index
    %42 = vector.load %arg8[%c1_41, %c1_42, %c0_43] : memref<10x10x8xbf16, #tpu.memory_space<vmem>>, vector<8x8x8xbf16>
    %c0_44 = arith.constant 0 : index
    %c0_45 = arith.constant 0 : index
    %c32 = arith.constant 32 : index
    %43 = vector.load %arg9[%c0_44, %c0_45, %c32] : memref<8x8x72xbf16, #tpu.memory_space<vmem>>, vector<8x8x8xbf16>
    tpu.vector_store %arg9[%c0_44, %c0_45, %c32], %42 {strides = array<i32>} : memref<8x8x72xbf16, #tpu.memory_space<vmem>>, vector<8x8x8xbf16>,
    %c1_46 = arith.constant 1 : index
    %c2_47 = arith.constant 2 : index
    %c0_48 = arith.constant 0 : index
    %44 = vector.load %arg8[%c1_46, %c2_47, %c0_48] : memref<10x10x8xbf16, #tpu.memory_space<vmem>>, vector<8x8x8xbf16>
    %c0_49 = arith.constant 0 : index
    %c0_50 = arith.constant 0 : index
    %c40 = arith.constant 40 : index
    %45 = vector.load %arg9[%c0_49, %c0_50, %c40] : memref<8x8x72xbf16, #tpu.memory_space<vmem>>, vector<8x8x8xbf16>
    tpu.vector_store %arg9[%c0_49, %c0_50, %c40], %44 {strides = array<i32>} : memref<8x8x72xbf16, #tpu.memory_space<vmem>>, vector<8x8x8xbf16>,
    %c2_51 = arith.constant 2 : index
    %c0_52 = arith.constant 0 : index
    %c0_53 = arith.constant 0 : index
    %46 = vector.load %arg8[%c2_51, %c0_52, %c0_53] : memref<10x10x8xbf16, #tpu.memory_space<vmem>>, vector<8x8x8xbf16>
    %c0_54 = arith.constant 0 : index
    %c0_55 = arith.constant 0 : index
    %c48 = arith.constant 48 : index
    %47 = vector.load %arg9[%c0_54, %c0_55, %c48] : memref<8x8x72xbf16, #tpu.memory_space<vmem>>, vector<8x8x8xbf16>
    tpu.vector_store %arg9[%c0_54, %c0_55, %c48], %46 {strides = array<i32>} : memref<8x8x72xbf16, #tpu.memory_space<vmem>>, vector<8x8x8xbf16>,
    %c2_56 = arith.constant 2 : index
    %c1_57 = arith.constant 1 : index
    %c0_58 = arith.constant 0 : index
    %48 = vector.load %arg8[%c2_56, %c1_57, %c0_58] : memref<10x10x8xbf16, #tpu.memory_space<vmem>>, vector<8x8x8xbf16>
    %c0_59 = arith.constant 0 : index
    %c0_60 = arith.constant 0 : index
    %c56 = arith.constant 56 : index
    %49 = vector.load %arg9[%c0_59, %c0_60, %c56] : memref<8x8x72xbf16, #tpu.memory_space<vmem>>, vector<8x8x8xbf16>
    tpu.vector_store %arg9[%c0_59, %c0_60, %c56], %48 {strides = array<i32>} : memref<8x8x72xbf16, #tpu.memory_space<vmem>>, vector<8x8x8xbf16>,
    %c2_61 = arith.constant 2 : index
    %c2_62 = arith.constant 2 : index
    %c0_63 = arith.constant 0 : index
    %50 = vector.load %arg8[%c2_61, %c2_62, %c0_63] : memref<10x10x8xbf16, #tpu.memory_space<vmem>>, vector<8x8x8xbf16>
    %c0_64 = arith.constant 0 : index
    %c0_65 = arith.constant 0 : index
    %c64 = arith.constant 64 : index
    %51 = vector.load %arg9[%c0_64, %c0_65, %c64] : memref<8x8x72xbf16, #tpu.memory_space<vmem>>, vector<8x8x8xbf16>
    tpu.vector_store %arg9[%c0_64, %c0_65, %c64], %50 {strides = array<i32>} : memref<8x8x72xbf16, #tpu.memory_space<vmem>>, vector<8x8x8xbf16>,
    %c0_66 = arith.constant 0 : index
    %c0_67 = arith.constant 0 : index
    %c0_68 = arith.constant 0 : index
    %52 = vector.load %arg9[%c0_66, %c0_67, %c0_68] : memref<8x8x72xbf16, #tpu.memory_space<vmem>>, vector<8x8x72xbf16>
    %53 = vector.shape_cast %52 : vector<8x8x72xbf16> to vector<64x72xbf16>
    %c0_69 = arith.constant 0 : index
    %c0_70 = arith.constant 0 : index
    %54 = vector.load %arg5[%c0_69, %c0_70] : memref<72x8xbf16, #tpu.memory_space<vmem>>, vector<72x8xbf16>
    %cst_71 = arith.constant dense<0.000000e+00> : vector<64x8xf32>
    %55 = tpu.matmul %53, %54, %cst_71 {dimension_numbers = #tpu.dot_dimension_numbers<[1], [0], [0], [1], [0, 0, 1, 1], [], []>} : vector<64x72xbf16>, vector<72x8xbf16>, vector<64x8xf32> -> vector<64x8xf32>
    %56 = vector.shape_cast %55 : vector<64x8xf32> to vector<8x8x8xf32>
    %c0_72 = arith.constant 0 : index
    %c0_73 = arith.constant 0 : index
    %c0_74 = arith.constant 0 : index
    %c0_75 = arith.constant 0 : index
    %57 = vector.load %arg6[%c0_72, %c0_73, %c0_74, %c0_75] : memref<1x8x8x8xf32, #tpu.memory_space<vmem>>, vector<1x8x8x8xf32>
    %58 = vector.shape_cast %57 : vector<1x8x8x8xf32> to vector<8x8x8xf32>
    %59 = vector.shape_cast %56 : vector<8x8x8xf32> to vector<1x8x8x8xf32>
    tpu.vector_store %arg6[%c0_72, %c0_73, %c0_74, %c0_75], %59 {strides = array<i32>} : memref<1x8x8x8xf32, #tpu.memory_space<vmem>>, vector<1x8x8x8xf32>,
    %cst_76 = arith.constant dense<0.000000e+00> : vector<8xf32>
    %60 = vector.multi_reduction <add>, %55, %cst_76 [0] : vector<64x8xf32> to vector<8xf32>
    %61 = vector.shape_cast %60 : vector<8xf32> to vector<1x8xf32>
    %c0_77 = arith.constant 0 : index
    %c0_78 = arith.constant 0 : index
    %c0_79 = arith.constant 0 : index
    %62 = vector.load %arg7[%c0_77, %c0_78, %c0_79] : memref<1x2x8xf32, #tpu.memory_space<vmem>>, vector<1x1x8xf32>
    %63 = vector.shape_cast %62 : vector<1x1x8xf32> to vector<1x8xf32>
    %64 = vector.shape_cast %61 : vector<1x8xf32> to vector<1x1x8xf32>
    tpu.vector_store %arg7[%c0_77, %c0_78, %c0_79], %64 {strides = array<i32>} : memref<1x2x8xf32, #tpu.memory_space<vmem>>, vector<1x1x8xf32>,
    %65 = arith.mulf %55, %55 : vector<64x8xf32>
    %cst_80 = arith.constant dense<0.000000e+00> : vector<8xf32>
    %66 = vector.multi_reduction <add>, %65, %cst_80 [0] : vector<64x8xf32> to vector<8xf32>
    %67 = vector.shape_cast %66 : vector<8xf32> to vector<1x8xf32>
    %c0_81 = arith.constant 0 : index
    %c1_82 = arith.constant 1 : index
    %c0_83 = arith.constant 0 : index
    %68 = vector.load %arg7[%c0_81, %c1_82, %c0_83] : memref<1x2x8xf32, #tpu.memory_space<vmem>>, vector<1x1x8xf32>
    %69 = vector.shape_cast %68 : vector<1x1x8xf32> to vector<1x8xf32>
    %70 = vector.shape_cast %67 : vector<1x8xf32> to vector<1x1x8xf32>
    tpu.vector_store %arg7[%c0_81, %c1_82, %c0_83], %70 {strides = array<i32>} : memref<1x2x8xf32, #tpu.memory_space<vmem>>, vector<1x1x8xf32>,
    return
  }
  func.func @transform_0(%arg0: i32) -> (i32, i32, i32, i32) {
    %c0_i32 = arith.constant 0 : i32
    %c0_i32_0 = arith.constant 0 : i32
    %c0_i32_1 = arith.constant 0 : i32
    %c0_i32_2 = arith.constant 0 : i32
    return %arg0, %c0_i32, %c0_i32_0, %c0_i32_1 : i32, i32, i32, i32
  }
  func.func @transform_1(%arg0: i32) -> (i32, i32, i32) {
    %c0_i32 = arith.constant 0 : i32
    %c0_i32_0 = arith.constant 0 : i32
    %c0_i32_1 = arith.constant 0 : i32
    %c0_i32_2 = arith.constant 0 : i32
    return %c0_i32, %c0_i32_0, %c0_i32_1 : i32, i32, i32
  }
  func.func @transform_2(%arg0: i32) -> (i32, i32) {
    %c0_i32 = arith.constant 0 : i32
    %c0_i32_0 = arith.constant 0 : i32
    %c0_i32_1 = arith.constant 0 : i32
    return %c0_i32, %c0_i32_0 : i32, i32
  }
  func.func @transform_3(%arg0: i32) -> (i32, i32) {
    %c0_i32 = arith.constant 0 : i32
    %c0_i32_0 = arith.constant 0 : i32
    %c0_i32_1 = arith.constant 0 : i32
    return %c0_i32, %c0_i32_0 : i32, i32
  }
  func.func @transform_4(%arg0: i32) -> (i32, i32) {
    %c0_i32 = arith.constant 0 : i32
    %c0_i32_0 = arith.constant 0 : i32
    %c0_i32_1 = arith.constant 0 : i32
    return %c0_i32, %c0_i32_0 : i32, i32
  }
  func.func @transform_5(%arg0: i32) -> (i32, i32, i32, i32) {
    %c0_i32 = arith.constant 0 : i32
    %c0_i32_0 = arith.constant 0 : i32
    %c0_i32_1 = arith.constant 0 : i32
    %c0_i32_2 = arith.constant 0 : i32
    return %arg0, %c0_i32, %c0_i32_0, %c0_i32_1 : i32, i32, i32, i32
  }
  func.func @transform_6(%arg0: i32) -> (i32, i32, i32) {
    %c0_i32 = arith.constant 0 : i32
    %c0_i32_0 = arith.constant 0 : i32
    %c0_i32_1 = arith.constant 0 : i32
    return %arg0, %c0_i32, %c0_i32_0 : i32, i32, i32
  }
}

module attributes {stable_mosaic.version = 11 : i64} {
  func.func @_bn_relu_kernel(%arg0: i32, %arg1: memref<128x8xf32, #tpu.memory_space<vmem>>, %arg2: memref<2x2x8xf32, #tpu.memory_space<vmem>>, %arg3: memref<1x8xf32, #tpu.memory_space<vmem>>, %arg4: memref<1x8xf32, #tpu.memory_space<vmem>>, %arg5: memref<128x8xf32, #tpu.memory_space<vmem>>) attributes {dimension_semantics = [#tpu.dimension_semantics<parallel>], iteration_bounds = array<i64: 1>, scalar_prefetch = 0 : i64, scratch_operands = 0 : i64, tpu.core_type = #tpu.core_type<tc>, window_params = [{transform_indices = @transform_0, window_bounds = array<i64: 128, 8>}, {pipeline_mode = #tpu.pipeline_mode<synchronous>, transform_indices = @transform_1, window_bounds = array<i64: 2, 2, 8>}, {pipeline_mode = #tpu.pipeline_mode<synchronous>, transform_indices = @transform_2, window_bounds = array<i64: 1, 8>}, {pipeline_mode = #tpu.pipeline_mode<synchronous>, transform_indices = @transform_3, window_bounds = array<i64: 1, 8>}, {transform_indices = @transform_4, window_bounds = array<i64: 128, 8>}]} {
    %c0 = arith.constant 0 : index
    %c0_0 = arith.constant 0 : index
    %c0_1 = arith.constant 0 : index
    %0 = vector.load %arg2[%c0, %c0_0, %c0_1] : memref<2x2x8xf32, #tpu.memory_space<vmem>>, vector<2x2x8xf32>
    %c0_2 = arith.constant 0 : index
    %c0_3 = arith.constant 0 : index
    %1 = vector.load %arg3[%c0_2, %c0_3] : memref<1x8xf32, #tpu.memory_space<vmem>>, vector<1x8xf32>
    %c0_4 = arith.constant 0 : index
    %c0_5 = arith.constant 0 : index
    %2 = vector.load %arg4[%c0_4, %c0_5] : memref<1x8xf32, #tpu.memory_space<vmem>>, vector<1x8xf32>
    %cst = arith.constant dense<0.000000e+00> : vector<2x8xf32>
    %3 = vector.multi_reduction <add>, %0, %cst [0] : vector<2x2x8xf32> to vector<2x8xf32>
    %4 = vector.extract_strided_slice %3 {offsets = [0, 0], sizes = [1, 8], strides = [1, 1]} : vector<2x8xf32> to vector<1x8xf32>
    %cst_6 = arith.constant 7.812500e-03 : f32
    %5 = vector.broadcast %cst_6 : f32 to vector<1x8xf32>
    %6 = arith.mulf %4, %5 : vector<1x8xf32>
    %7 = vector.extract_strided_slice %3 {offsets = [1, 0], sizes = [1, 8], strides = [1, 1]} : vector<2x8xf32> to vector<1x8xf32>
    %cst_7 = arith.constant 7.812500e-03 : f32
    %8 = vector.broadcast %cst_7 : f32 to vector<1x8xf32>
    %9 = arith.mulf %7, %8 : vector<1x8xf32>
    %10 = arith.mulf %6, %6 : vector<1x8xf32>
    %11 = arith.subf %9, %10 : vector<1x8xf32>
    %cst_8 = arith.constant 0.000000e+00 : f32
    %12 = vector.broadcast %cst_8 : f32 to vector<1x8xf32>
    %13 = arith.maximumf %11, %12 : vector<1x8xf32>
    %cst_9 = arith.constant 9.99999974E-6 : f32
    %14 = vector.broadcast %cst_9 : f32 to vector<1x8xf32>
    %15 = arith.addf %13, %14 : vector<1x8xf32>
    %16 = math.rsqrt %15 : vector<1x8xf32>
    %17 = arith.mulf %1, %16 : vector<1x8xf32>
    %18 = arith.mulf %6, %17 : vector<1x8xf32>
    %19 = arith.subf %2, %18 : vector<1x8xf32>
    %c0_10 = arith.constant 0 : index
    %c0_11 = arith.constant 0 : index
    %20 = vector.load %arg1[%c0_10, %c0_11] : memref<128x8xf32, #tpu.memory_space<vmem>>, vector<128x8xf32>
    %21 = vector.broadcast %17 : vector<1x8xf32> to vector<128x8xf32>
    %22 = arith.mulf %20, %21 : vector<128x8xf32>
    %23 = vector.broadcast %19 : vector<1x8xf32> to vector<128x8xf32>
    %24 = arith.addf %22, %23 : vector<128x8xf32>
    %cst_12 = arith.constant 0.000000e+00 : f32
    %25 = vector.broadcast %cst_12 : f32 to vector<128x8xf32>
    %26 = arith.maximumf %24, %25 : vector<128x8xf32>
    %c0_13 = arith.constant 0 : index
    %c0_14 = arith.constant 0 : index
    %27 = vector.load %arg5[%c0_13, %c0_14] : memref<128x8xf32, #tpu.memory_space<vmem>>, vector<128x8xf32>
    tpu.vector_store %arg5[%c0_13, %c0_14], %26 {strides = array<i32>} : memref<128x8xf32, #tpu.memory_space<vmem>>, vector<128x8xf32>,
    return
  }
  func.func @transform_0(%arg0: i32) -> (i32, i32) {
    %c0_i32 = arith.constant 0 : i32
    %c0_i32_0 = arith.constant 0 : i32
    return %arg0, %c0_i32 : i32, i32
  }
  func.func @transform_1(%arg0: i32) -> (i32, i32, i32) {
    %c0_i32 = arith.constant 0 : i32
    %c0_i32_0 = arith.constant 0 : i32
    %c0_i32_1 = arith.constant 0 : i32
    %c0_i32_2 = arith.constant 0 : i32
    return %c0_i32, %c0_i32_0, %c0_i32_1 : i32, i32, i32
  }
  func.func @transform_2(%arg0: i32) -> (i32, i32) {
    %c0_i32 = arith.constant 0 : i32
    %c0_i32_0 = arith.constant 0 : i32
    %c0_i32_1 = arith.constant 0 : i32
    return %c0_i32, %c0_i32_0 : i32, i32
  }
  func.func @transform_3(%arg0: i32) -> (i32, i32) {
    %c0_i32 = arith.constant 0 : i32
    %c0_i32_0 = arith.constant 0 : i32
    %c0_i32_1 = arith.constant 0 : i32
    return %c0_i32, %c0_i32_0 : i32, i32
  }
  func.func @transform_4(%arg0: i32) -> (i32, i32) {
    %c0_i32 = arith.constant 0 : i32
    %c0_i32_0 = arith.constant 0 : i32
    return %arg0, %c0_i32 : i32, i32
  }
}

</mosaic_0001>

<llo_original>
// kernel: down_forward.5
$region0: #{down_forward.5}
  #allocation0 [shape = 'u32[]', space=smem, size = 0x4, offset = 0x4, fixed_abs, tag = 'smem constant byte address 0x4 - core index']
  #allocation1 [shape = 'u32[144,128]{1,0:T(1,128)}', space=vmem, size = 0x12000, scoped, tag = 'internal scratch']
  %s0 = inlined_call_operand.vmem [shape: f32[128,8], index: 0, kind: input, shape index: {}]
  %s1 = inlined_call_operand.vmem [shape: f32[2,2,8], index: 1, kind: input, shape index: {}]
  %s2 = inlined_call_operand.vmem [shape: f32[1,8], index: 2, kind: input, shape index: {}]
  %s3 = inlined_call_operand.vmem [shape: f32[1,8], index: 3, kind: input, shape index: {}]
  %s4 = inlined_call_operand.vmem [shape: f32[128,8], index: 4, kind: output, shape index: {}]
  %s5 = sld [smem:[#allocation0]]
  $region26: #{down_forward.5} parent=0
    _
  %s7 = ssub.s32 1, %s5
  %s8 = scalar_select 0, %s7, %s5
  // Predicated region
  $region2: #{down_forward.5} parent=0 // pred_check
    _
  $region3: #{down_forward.5} parent=0 // pred_check_branch
    %10 = sbr.rel (0) target = $region5
  $region4: #{down_forward.5} parent=0 // pred_region
    _
  $region5: #{down_forward.5} parent=0 // pred_fallthru
    _
  // Predicated region
  $region6: #{down_forward.5} parent=0 // pred_check
    _
  $region7: #{down_forward.5} parent=0 // pred_check_branch
    %12 = sbr.rel (0) target = $region9
  $region8: #{down_forward.5} parent=0 // pred_region
    _
  $region9: #{down_forward.5} parent=0 // pred_fallthru
    _
  // Predicated region
  $region10: #{down_forward.5} parent=0 // pred_check
    _
  $region11: #{down_forward.5} parent=0 // pred_check_branch
    %14 = sbr.rel (0) target = $region13
  $region12: #{down_forward.5} parent=0 // pred_region
    _
  $region13: #{down_forward.5} parent=0 // pred_fallthru
    _
  // Predicated region
  $region14: #{down_forward.5} parent=0 // pred_check
    _
  $region15: #{down_forward.5} parent=0 // pred_check_branch
    %16 = sbr.rel (0) target = $region17
  $region16: #{down_forward.5} parent=0 // pred_region
    _
  $region17: #{down_forward.5} parent=0 // pred_fallthru
    _
  %v17 = vld [vmem:[%s1] sm:$0x3]
  %v18 = vld [vmem:[%s1 + $0x2] sm:$0x3]
  %v19 = vld [vmem:[%s2] sm:$0x1]
  %v20 = vld [vmem:[%s3] sm:$0x1]
  %vm21 = vcmask 58368
  %v22 = vsel %vm21, %v17, 0.0
  %v23 = vsel %vm21, %v18, 0.0
  %v24 = vadd.f32 %v22, %v23
  %v25 = vmul.f32 %v24, 0.0078125
  %v26 = vmul.f32 %v25, %v25
  %v28 = vrot.slane %v26, 7
  %v30 = vsub.f32 %v25, %v28
  %v31 = vmax.f32 %v30, 0.0
  %v32 = vadd.f32 %v31, 1e-05
  %v33 = vrsqrt.pop %v32
  %v36 = vunpack.c.l.s4 1966171168
  %v37 = vunpack.c.0.s8 %v36
  %v38 = vlaneseq
  %v39 = vshrl.u32 %v38, 7
  %v40 = vsub.s32 %v37, %v39
  %v41 = vrot.slane %v33, %v40
  %v42 = vcombine.high %v41, %v41
  %v44 = vunpack.c.l.s4 1966171168
  %v45 = vunpack.c.0.s8 %v44
  %v46 = vlaneseq
  %v47 = vshrl.u32 %v46, 7
  %v48 = vsub.s32 %v45, %v47
  %v49 = vrot.slane %v42, %v48
  %v51 = vmul.f32 %v19, %v49
  %v52 = vmul.f32 %v25, %v51
  %v53 = vsub.f32 %v20, %v52
  %v54 = vld [vmem:[%s0] sm:$0xff]
  %v55 = vld [vmem:[%s0 + $0x8] sm:$0xff]
  %v56 = vld [vmem:[%s0 + $0x10] sm:$0xff]
  %v57 = vld [vmem:[%s0 + $0x18] sm:$0xff]
  %v58 = vld [vmem:[%s0 + $0x20] sm:$0xff]
  %v59 = vld [vmem:[%s0 + $0x28] sm:$0xff]
  %v60 = vld [vmem:[%s0 + $0x30] sm:$0xff]
  %v61 = vld [vmem:[%s0 + $0x38] sm:$0xff]
  %v62 = vld [vmem:[%s0 + $0x40] sm:$0xff]
  %v63 = vld [vmem:[%s0 + $0x48] sm:$0xff]
  %v64 = vld [vmem:[%s0 + $0x50] sm:$0xff]
  %v65 = vld [vmem:[%s0 + $0x58] sm:$0xff]
  %v66 = vld [vmem:[%s0 + $0x60] sm:$0xff]
  %v67 = vld [vmem:[%s0 + $0x68] sm:$0xff]
  %v68 = vld [vmem:[%s0 + $0x70] sm:$0xff]
  %v69 = vld [vmem:[%s0 + $0x78] sm:$0xff]
  %v71 = vlaneseq
  %v72 = vshrl.u32 %v71, 7
  %v73 = vsub.s32 0, %v72
  %v74 = vrot.slane %v51, %v73
  %v76 = vmul.f32 %v54, %v74
  %v77 = vmul.f32 %v55, %v74
  %v78 = vmul.f32 %v56, %v74
  %v79 = vmul.f32 %v57, %v74
  %v80 = vmul.f32 %v58, %v74
  %v81 = vmul.f32 %v59, %v74
  %v82 = vmul.f32 %v60, %v74
  %v83 = vmul.f32 %v61, %v74
  %v84 = vmul.f32 %v62, %v74
  %v85 = vmul.f32 %v63, %v74
  %v86 = vmul.f32 %v64, %v74
  %v87 = vmul.f32 %v65, %v74
  %v88 = vmul.f32 %v66, %v74
  %v89 = vmul.f32 %v67, %v74
  %v90 = vmul.f32 %v68, %v74
  %v91 = vmul.f32 %v69, %v74
  %v93 = vlaneseq
  %v94 = vshrl.u32 %v93, 7
  %v95 = vsub.s32 0, %v94
  %v96 = vrot.slane %v53, %v95
  %v98 = vadd.f32 %v76, %v96
  %v99 = vadd.f32 %v77, %v96
  %v100 = vadd.f32 %v78, %v96
  %v101 = vadd.f32 %v79, %v96
  %v102 = vadd.f32 %v80, %v96
  %v103 = vadd.f32 %v81, %v96
  %v104 = vadd.f32 %v82, %v96
  %v105 = vadd.f32 %v83, %v96
  %v106 = vadd.f32 %v84, %v96
  %v107 = vadd.f32 %v85, %v96
  %v108 = vadd.f32 %v86, %v96
  %v109 = vadd.f32 %v87, %v96
  %v110 = vadd.f32 %v88, %v96
  %v111 = vadd.f32 %v89, %v96
  %v112 = vadd.f32 %v90, %v96
  %v113 = vadd.f32 %v91, %v96
  %v114 = vmax.f32 %v98, 0.0
  %v115 = vmax.f32 %v99, 0.0
  %v116 = vmax.f32 %v100, 0.0
  %v117 = vmax.f32 %v101, 0.0
  %v118 = vmax.f32 %v102, 0.0
  %v119 = vmax.f32 %v103, 0.0
  %v120 = vmax.f32 %v104, 0.0
  %v121 = vmax.f32 %v105, 0.0
  %v122 = vmax.f32 %v106, 0.0
  %v123 = vmax.f32 %v107, 0.0
  %v124 = vmax.f32 %v108, 0.0
  %v125 = vmax.f32 %v109, 0.0
  %v126 = vmax.f32 %v110, 0.0
  %v127 = vmax.f32 %v111, 0.0
  %v128 = vmax.f32 %v112, 0.0
  %v129 = vmax.f32 %v113, 0.0
  %vm130 = vcmask 64512
  %131 = vst.msk [vmem:[%s4] sm:$0xff] %vm130, %v114
  %132 = vst.msk [vmem:[%s4 + $0x8] sm:$0xff] %vm130, %v115
  %133 = vst.msk [vmem:[%s4 + $0x10] sm:$0xff] %vm130, %v116
  %134 = vst.msk [vmem:[%s4 + $0x18] sm:$0xff] %vm130, %v117
  %135 = vst.msk [vmem:[%s4 + $0x20] sm:$0xff] %vm130, %v118
  %136 = vst.msk [vmem:[%s4 + $0x28] sm:$0xff] %vm130, %v119
  %137 = vst.msk [vmem:[%s4 + $0x30] sm:$0xff] %vm130, %v120
  %138 = vst.msk [vmem:[%s4 + $0x38] sm:$0xff] %vm130, %v121
  %139 = vst.msk [vmem:[%s4 + $0x40] sm:$0xff] %vm130, %v122
  %140 = vst.msk [vmem:[%s4 + $0x48] sm:$0xff] %vm130, %v123
  %141 = vst.msk [vmem:[%s4 + $0x50] sm:$0xff] %vm130, %v124
  %142 = vst.msk [vmem:[%s4 + $0x58] sm:$0xff] %vm130, %v125
  %143 = vst.msk [vmem:[%s4 + $0x60] sm:$0xff] %vm130, %v126
  %144 = vst.msk [vmem:[%s4 + $0x68] sm:$0xff] %vm130, %v127
  %145 = vst.msk [vmem:[%s4 + $0x70] sm:$0xff] %vm130, %v128
  %146 = vst.msk [vmem:[%s4 + $0x78] sm:$0xff] %vm130, %v129
  // Predicated region
  $region18: #{down_forward.5} parent=0 // pred_check
    _
  $region19: #{down_forward.5} parent=0 // pred_check_branch
    %148 = sbr.rel (0) target = $region21
  $region20: #{down_forward.5} parent=0 // pred_region
    _
  $region21: #{down_forward.5} parent=0 // pred_fallthru
    _
  // Predicated region
  $region22: #{down_forward.5} parent=0 // pred_check
    _
  $region23: #{down_forward.5} parent=0 // pred_check_branch
    %150 = sbr.rel (0) target = $region25
  $region24: #{down_forward.5} parent=0 // pred_region
    _
  $region25: #{down_forward.5} parent=0 // pred_fallthru
    _

// kernel: down_forward.3
$region0: #{down_forward.3}
  #allocation0 [shape = 'u32[]', space=smem, size = 0x4, offset = 0x4, fixed_abs, tag = 'smem constant byte address 0x4 - core index']
  #allocation1 [shape = 'u32[144,128]{1,0:T(1,128)}', space=vmem, size = 0x12000, scoped, tag = 'internal scratch']
  #allocation2 [shape = 'bf16[10,10,4]{2,1,0:T(8,128)(2,1)}', space=vmem, size = 0xa000, scoped, tag = 'scratch operand']
  #allocation3 [shape = 'bf16[8,8,36]{2,1,0:T(8,128)(2,1)}', space=vmem, size = 0x4000, scoped, tag = 'scratch operand']
  %s0 = inlined_call_operand.vmem [shape: f32[16,2,8,8], index: 0, kind: input, shape index: {}]
  %s1 = inlined_call_operand.vmem [shape: bf16[36,8], index: 1, kind: input, shape index: {}]
  %s2 = inlined_call_operand.vmem [shape: f32[2,8,8,8], index: 2, kind: output, shape index: {0}]
  %s3 = inlined_call_operand.vmem [shape: f32[2,2,8], index: 3, kind: output, shape index: {1}]
  %4 = xla_tuple %s2, %s3
  %s5 = sld [smem:[#allocation0]]
  $region49: #{down_forward.3} parent=0
    _
  %s7 = ssub.s32 1, %s5
  %s8 = scalar_select 0, %s7, %s5
  loop: start=0, step=1, limit=4
  $region2: #{down_forward.3} parent=0 // loop_pre_header
    _
  $region3: #{down_forward.3} parent=0 // loop_header
    %s10 = sphi 0, %s14
    %p11 = scmp.ge.s32.totalorder %s10, 4
    %s20 = sphi 0, %s22
    %s23 = sphi 0, %s20
    %s24 = sphi 0, %s23
    %s40 = sphi 0, %s24
    %s44 = sphi 0, %s44
    %s46 = sphi 0, %s44
    %s47 = sphi 0, %s46
    %s61 = sphi 0, %s47
    %s67 = sphi 0, %s69
    %s70 = sphi 0, %s67
    %s71 = sphi 0, %s70
    %s87 = sphi 0, %s71
    %s93 = sphi 0, %s95
    %s96 = sphi 0, %s93
    %s97 = sphi 0, %s96
    %s113 = sphi 0, %s97
  $region4: #{down_forward.3} parent=0 // loop_header_branch
    %13 = sbr.rel (%p11) target = $region8
  $region5: #{down_forward.3} parent=0 // loop_body
    %s15 = ssub.s32 %s10, 1
    %s16 = ssub.s32 %s10, 2
    %s17 = sadd.s32 %s10, 1
    %s18 = ssub.s32 %s10, %s17
    %p19 = scmp.eq.s32.totalorder %s18, 0
    %s21 = sadd.s32 %s20, 1
    %s22 = scalar_select %p19, %s20, %s21
    %p25 = pneg %p19
    %p26 = scmp.eq.s32.totalorder %s10, 1
    %p27 = por %p25, %p26
    %p28 = scmp.ne.s32.totalorder %s20, %s23
    %p29 = scmp.eq.s32.totalorder %s10, 0
    %p30 = por %p28, %p29
    %p31 = scmp.ne.s32.totalorder %s20, %s23
    %p32 = scmp.eq.s32.totalorder %s15, 1
    %p33 = por %p31, %p32
    %p34 = scmp.ne.s32.totalorder %s23, %s24
    %p35 = scmp.eq.s32.totalorder %s15, 0
    %p36 = por %p34, %p35
    %p37 = scmp.ne.s32.totalorder %s23, %s24
    %p38 = scmp.eq.s32.totalorder %s16, 1
    %p39 = por %p37, %p38
    %p41 = scmp.ne.s32.totalorder %s24, %s40
    %p42 = scmp.eq.s32.totalorder %s16, 0
    %p43 = por %p41, %p42
    %s45 = sadd.s32 %s44, 1
    %p48 = scmp.eq.s32.totalorder %s10, 1
    %p49 = scmp.ne.s32.totalorder %s44, %s46
    %p50 = scmp.eq.s32.totalorder %s10, 0
    %p51 = por %p49, %p50
    %p52 = scmp.ne.s32.totalorder %s44, %s46
    %p53 = scmp.eq.s32.totalorder %s15, 1
    %p54 = por %p52, %p53
    %p55 = scmp.ne.s32.totalorder %s46, %s47
    %p56 = scmp.eq.s32.totalorder %s15, 0
    %p57 = por %p55, %p56
    %p58 = scmp.ne.s32.totalorder %s46, %s47
    %p59 = scmp.eq.s32.totalorder %s16, 1
    %p60 = por %p58, %p59
    %p62 = scmp.ne.s32.totalorder %s47, %s61
    %p63 = scmp.eq.s32.totalorder %s16, 0
    %p64 = por %p62, %p63
    %s65 = ssub.s32 %s10, %s17
    %p66 = scmp.eq.s32.totalorder %s65, 0
    %s68 = sadd.s32 %s67, 1
    %s69 = scalar_select %p66, %s67, %s68
    %p72 = pneg %p66
    %p73 = scmp.eq.s32.totalorder %s10, 1
    %p74 = por %p72, %p73
    %p75 = scmp.ne.s32.totalorder %s67, %s70
    %p76 = scmp.eq.s32.totalorder %s10, 0
    %p77 = por %p75, %p76
    %p78 = scmp.ne.s32.totalorder %s67, %s70
    %p79 = scmp.eq.s32.totalorder %s15, 1
    %p80 = por %p78, %p79
    %p81 = scmp.ne.s32.totalorder %s70, %s71
    %p82 = scmp.eq.s32.totalorder %s15, 0
    %p83 = por %p81, %p82
    %p84 = scmp.ne.s32.totalorder %s70, %s71
    %p85 = scmp.eq.s32.totalorder %s16, 1
    %p86 = por %p84, %p85
    %p88 = scmp.ne.s32.totalorder %s71, %s87
    %p89 = scmp.eq.s32.totalorder %s16, 0
    %p90 = por %p88, %p89
    %s91 = ssub.s32 %s10, %s17
    %p92 = scmp.eq.s32.totalorder %s91, 0
    %s94 = sadd.s32 %s93, 1
    %s95 = scalar_select %p92, %s93, %s94
    %p98 = pneg %p92
    %p99 = scmp.eq.s32.totalorder %s10, 1
    %p100 = por %p98, %p99
    %p101 = scmp.ne.s32.totalorder %s93, %s96
    %p102 = scmp.eq.s32.totalorder %s10, 0
    %p103 = por %p101, %p102
    %p104 = scmp.ne.s32.totalorder %s93, %s96
    %p105 = scmp.eq.s32.totalorder %s15, 1
    %p106 = por %p104, %p105
    %p107 = scmp.ne.s32.totalorder %s96, %s97
    %p108 = scmp.eq.s32.totalorder %s15, 0
    %p109 = por %p107, %p108
    %p110 = scmp.ne.s32.totalorder %s96, %s97
    %p111 = scmp.eq.s32.totalorder %s16, 1
    %p112 = por %p110, %p111
    %p114 = scmp.ne.s32.totalorder %s97, %s113
    %p115 = scmp.eq.s32.totalorder %s16, 0
    %p116 = por %p114, %p115
    %p117 = scmp.le.s32.totalorder 1, %s10
    %p118 = scmp.lt.s32.totalorder %s10, 3
    %p119 = pnand %p117, %p118
    %p120 = pneg %p119
    // Predicated region
    $region9: #{down_forward.3} parent=5 // pred_check
      _
    $region10: #{down_forward.3} parent=5 // pred_check_branch
      %122 = sbr.rel (%p119) target = $region12
    $region11: #{down_forward.3} parent=5 // pred_region
      %s123 = ssub.s32 %s10, 1
      // Predicated region
      $region13: #{down_forward.3} parent=11 // pred_check
        %p124 = pneg %p57
      $region14: #{down_forward.3} parent=11 // pred_check_branch
        %126 = sbr.rel (%p124) target = $region16
      $region15: #{down_forward.3} parent=11 // pred_region
        _
      $region16: #{down_forward.3} parent=11 // pred_fallthru
        _
    $region12: #{down_forward.3} parent=5 // pred_fallthru
      _
    %p127 = scmp.lt.s32.totalorder %s10, 2
    // Predicated region
    $region17: #{down_forward.3} parent=5 // pred_check
      %p128 = pneg %p127
    $region18: #{down_forward.3} parent=5 // pred_check_branch
      %130 = sbr.rel (%p128) target = $region20
    $region19: #{down_forward.3} parent=5 // pred_region
      // Predicated region
      $region21: #{down_forward.3} parent=19 // pred_check
        %p131 = pneg %p30
      $region22: #{down_forward.3} parent=19 // pred_check_branch
        %133 = sbr.rel (%p131) target = $region24
      $region23: #{down_forward.3} parent=19 // pred_region
        %s134 = smul.u32 8, %s10
        %p135 = scmp.lt.s32.totalorder %s134, 15
        %s136 = scalar_select %p135, %s134, 15
        %s137 = smul.addr %s136, 2
        %s138 = smul.addr %s137, 8
        %s139 = scalar_lea.vmem %s0, %s138
        %s140 = smul.u32 8, %s10
      $region24: #{down_forward.3} parent=19 // pred_fallthru
        _
    $region20: #{down_forward.3} parent=5 // pred_fallthru
      _
    %p141 = scmp.le.s32.totalorder 1, %s10
    %p142 = scmp.lt.s32.totalorder %s10, 3
    %p143 = pnand %p141, %p142
    %p144 = pneg %p143
    // Predicated region
    $region25: #{down_forward.3} parent=5 // pred_check
      _
    $region26: #{down_forward.3} parent=5 // pred_check_branch
      %146 = sbr.rel (%p143) target = $region28
    $region27: #{down_forward.3} parent=5 // pred_region
      %s147 = ssub.s32 %s10, 1
      %s148 = smul.u32 8, %s15
      %p149 = scmp.lt.s32.totalorder %s148, 15
      %s150 = scalar_select %p149, %s148, 15
      %s151 = smul.addr %s150, 2
      %s152 = smul.addr %s151, 8
      %s153 = scalar_lea.vmem %s0, %s152
      %p154 = pneg %p36
      %p155 = pneg %p33
      %p156 = pneg %p57
      %p157 = pneg %p54
      %p158 = pneg %p83
      %p159 = pneg %p80
      %p160 = scmp.lt.s32.totalorder %s15, 1
      %s161 = scalar_select %p160, %s15, 1
      %s162 = smul.addr %s161, 8
      %s163 = smul.addr %s162, 8
      %s164 = scalar_lea.vmem %s2, %s163
      %p165 = pneg %p109
      %p166 = pneg %p106
      %p167 = scmp.lt.s32.totalorder %s15, 1
      %s168 = scalar_select %p167, %s15, 1
      %s169 = smul.addr %s168, 2
      %s170 = scalar_lea.vmem %s3, %s169
      %s171 = smul.u32 8, %s15
      %p172 = scmp.lt.s32.totalorder %s171, 15
      %s173 = scalar_select %p172, %s171, 15
      %s174 = smul.addr %s173, 2
      %s175 = smul.addr %s174, 8
      %s176 = scalar_lea.vmem %s0, %s175
      %s177 = smul.u32 8, %s15
      %p178 = scmp.lt.s32.totalorder %s15, 1
      %s179 = scalar_select %p178, %s15, 1
      %s180 = smul.addr %s179, 8
      %s181 = smul.addr %s180, 8
      %s182 = scalar_lea.vmem %s2, %s181
      %p183 = scmp.lt.s32.totalorder %s15, 1
      %s184 = scalar_select %p183, %s15, 1
      %s185 = smul.addr %s184, 2
      %s186 = scalar_lea.vmem %s3, %s185
      %v188 = vld [vmem:[%s176] sm:$0xff]
      %v189 = vld [vmem:[%s176 + $0x10] sm:$0xff]
      %v190 = vld [vmem:[%s176 + $0x20] sm:$0xff]
      %v191 = vld [vmem:[%s176 + $0x30] sm:$0xff]
      %v192 = vld [vmem:[%s176 + $0x40] sm:$0xff]
      %v193 = vld [vmem:[%s176 + $0x50] sm:$0xff]
      %v194 = vld [vmem:[%s176 + $0x60] sm:$0xff]
      %v195 = vld [vmem:[%s176 + $0x70] sm:$0xff]
      %s196 = scalar_lea.vmem %s176, 8
      %v197 = vld [vmem:[%s196] sm:$0xff]
      %v198 = vld [vmem:[%s196 + $0x10] sm:$0xff]
      %v199 = vld [vmem:[%s196 + $0x20] sm:$0xff]
      %v200 = vld [vmem:[%s196 + $0x30] sm:$0xff]
      %v201 = vld [vmem:[%s196 + $0x40] sm:$0xff]
      %v202 = vld [vmem:[%s196 + $0x50] sm:$0xff]
      %v203 = vld [vmem:[%s196 + $0x60] sm:$0xff]
      %v204 = vld [vmem:[%s196 + $0x70] sm:$0xff]
      %213 = vrot.lane.b32.xlu0 %v188, 124
      %v214 = vpop.permute.xlu0 %213
      %215 = vrot.lane.b32.xlu0 %v189, 124
      %v216 = vpop.permute.xlu0 %215
      %217 = vrot.lane.b32.xlu0 %v190, 124
      %v218 = vpop.permute.xlu0 %217
      %219 = vrot.lane.b32.xlu0 %v191, 124
      %v220 = vpop.permute.xlu0 %219
      %221 = vrot.lane.b32.xlu0 %v192, 124
      %v222 = vpop.permute.xlu0 %221
      %223 = vrot.lane.b32.xlu0 %v193, 124
      %v224 = vpop.permute.xlu0 %223
      %225 = vrot.lane.b32.xlu0 %v194, 124
      %v226 = vpop.permute.xlu0 %225
      %227 = vrot.lane.b32.xlu0 %v195, 124
      %v228 = vpop.permute.xlu0 %227
      %v237 = vmax.f32 %v188, %v214
      %v238 = vmax.f32 %v189, %v216
      %v239 = vmax.f32 %v190, %v218
      %v240 = vmax.f32 %v191, %v220
      %v241 = vmax.f32 %v192, %v222
      %v242 = vmax.f32 %v193, %v224
      %v243 = vmax.f32 %v194, %v226
      %v244 = vmax.f32 %v195, %v228
      %253 = vrot.lane.b32.xlu0 %v197, 124
      %v254 = vpop.permute.xlu0 %253
      %255 = vrot.lane.b32.xlu0 %v198, 124
      %v256 = vpop.permute.xlu0 %255
      %257 = vrot.lane.b32.xlu0 %v199, 124
      %v258 = vpop.permute.xlu0 %257
      %259 = vrot.lane.b32.xlu0 %v200, 124
      %v260 = vpop.permute.xlu0 %259
      %261 = vrot.lane.b32.xlu0 %v201, 124
      %v262 = vpop.permute.xlu0 %261
      %263 = vrot.lane.b32.xlu0 %v202, 124
      %v264 = vpop.permute.xlu0 %263
      %265 = vrot.lane.b32.xlu0 %v203, 124
      %v266 = vpop.permute.xlu0 %265
      %267 = vrot.lane.b32.xlu0 %v204, 124
      %v268 = vpop.permute.xlu0 %267
      %v277 = vmax.f32 %v197, %v254
      %v278 = vmax.f32 %v198, %v256
      %v279 = vmax.f32 %v199, %v258
      %v280 = vmax.f32 %v200, %v260
      %v281 = vmax.f32 %v201, %v262
      %v282 = vmax.f32 %v202, %v264
      %v283 = vmax.f32 %v203, %v266
      %v284 = vmax.f32 %v204, %v268
      %v285 = vmax.f32 %v237, %v277
      %v286 = vmax.f32 %v238, %v278
      %v287 = vmax.f32 %v239, %v279
      %v288 = vmax.f32 %v240, %v280
      %v289 = vmax.f32 %v241, %v281
      %v290 = vmax.f32 %v242, %v282
      %v291 = vmax.f32 %v243, %v283
      %v292 = vmax.f32 %v244, %v284
      %vm293 = vcmask 27648
      %294 = vst.msk [vmem:[#allocation2] sm:$0xf] %vm293, 0
      %vm295 = vcmask 24576
      %296 = vst.msk [vmem:[#allocation2 + $0x4] sm:$0x1] %vm295, 0
      %297 = vst.msk [vmem:[#allocation2 + $0x8] sm:$0xf] %vm293, 0
      %298 = vst.msk [vmem:[#allocation2 + $0xc] sm:$0x1] %vm295, 0
      %299 = vst.msk [vmem:[#allocation2 + $0x10] sm:$0xf] %vm293, 0
      %300 = vst.msk [vmem:[#allocation2 + $0x14] sm:$0x1] %vm295, 0
      %301 = vst.msk [vmem:[#allocation2 + $0x18] sm:$0xf] %vm293, 0
      %302 = vst.msk [vmem:[#allocation2 + $0x1c] sm:$0x1] %vm295, 0
      %303 = vst.msk [vmem:[#allocation2 + $0x20] sm:$0xf] %vm293, 0
      %304 = vst.msk [vmem:[#allocation2 + $0x24] sm:$0x1] %vm295, 0
      %305 = vst.msk [vmem:[#allocation2 + $0x28] sm:$0xf] %vm293, 0
      %306 = vst.msk [vmem:[#allocation2 + $0x2c] sm:$0x1] %vm295, 0
      %307 = vst.msk [vmem:[#allocation2 + $0x30] sm:$0xf] %vm293, 0
      %308 = vst.msk [vmem:[#allocation2 + $0x34] sm:$0x1] %vm295, 0
      %309 = vst.msk [vmem:[#allocation2 + $0x38] sm:$0xf] %vm293, 0
      %310 = vst.msk [vmem:[#allocation2 + $0x3c] sm:$0x1] %vm295, 0
      %311 = vst.msk [vmem:[#allocation2 + $0x40] sm:$0xf] %vm293, 0
      %312 = vst.msk [vmem:[#allocation2 + $0x44] sm:$0x1] %vm295, 0
      %313 = vst.msk [vmem:[#allocation2 + $0x48] sm:$0xf] %vm293, 0
      %314 = vst.msk [vmem:[#allocation2 + $0x4c] sm:$0x1] %vm295, 0
      %v315 = vpack.c.bf16 %v285, %v285
      %v316 = vpack.c.bf16 %v286, %v286
      %v317 = vpack.c.bf16 %v287, %v287
      %v318 = vpack.c.bf16 %v288, %v288
      %v319 = vpack.c.bf16 %v289, %v289
      %v320 = vpack.c.bf16 %v290, %v290
      %v321 = vpack.c.bf16 %v291, %v291
      %v322 = vpack.c.bf16 %v292, %v292
      %v331 = vunpack.c.l.b16 %v315
      %v332 = vunpack.c.l.b16 %v316
      %v333 = vunpack.c.l.b16 %v317
      %v334 = vunpack.c.l.b16 %v318
      %v335 = vunpack.c.l.b16 %v319
      %v336 = vunpack.c.l.b16 %v320
      %v337 = vunpack.c.l.b16 %v321
      %v338 = vunpack.c.l.b16 %v322
      %v339 = vpack.c.b16 %v331, %v331
      %v340 = vpack.c.b16 %v332, %v332
      %v341 = vpack.c.b16 %v333, %v333
      %v342 = vpack.c.b16 %v334, %v334
      %v343 = vpack.c.b16 %v335, %v335
      %v344 = vpack.c.b16 %v336, %v336
      %v345 = vpack.c.b16 %v337, %v337
      %v346 = vpack.c.b16 %v338, %v338
      %v348 = vshrl.u32 %v339, 16
      %v350 = vrot.slane %v348, 7
      %v351 = vshll.u32 %v339, 16
      %v353 = vor.u32 %v350, %v351
      %v354 = vrot.slane %v350, 4
      %v356 = vshrl.u32 %v340, 16
      %v358 = vrot.slane %v356, 7
      %v359 = vshll.u32 %v340, 16
      %v361 = vor.u32 %v358, %v359
      %v362 = vrot.slane %v358, 4
      %v364 = vshrl.u32 %v341, 16
      %v366 = vrot.slane %v364, 7
      %v367 = vshll.u32 %v341, 16
      %v369 = vor.u32 %v366, %v367
      %v370 = vrot.slane %v366, 4
      %v372 = vshrl.u32 %v342, 16
      %v374 = vrot.slane %v372, 7
      %v375 = vshll.u32 %v342, 16
      %v377 = vor.u32 %v374, %v375
      %v378 = vrot.slane %v374, 4
      %v380 = vshrl.u32 %v343, 16
      %v382 = vrot.slane %v380, 7
      %v383 = vshll.u32 %v343, 16
      %v385 = vor.u32 %v382, %v383
      %v386 = vrot.slane %v382, 4
      %v388 = vshrl.u32 %v344, 16
      %v390 = vrot.slane %v388, 7
      %v391 = vshll.u32 %v344, 16
      %v393 = vor.u32 %v390, %v391
      %v394 = vrot.slane %v390, 4
      %v396 = vshrl.u32 %v345, 16
      %v398 = vrot.slane %v396, 7
      %v399 = vshll.u32 %v345, 16
      %v401 = vor.u32 %v398, %v399
      %v402 = vrot.slane %v398, 4
      %v404 = vshrl.u32 %v346, 16
      %v406 = vrot.slane %v404, 7
      %v407 = vshll.u32 %v346, 16
      %v409 = vor.u32 %v406, %v407
      %v410 = vrot.slane %v406, 4
      %s427 = scalar_lea.vmem [#allocation2], 8
      %vm428 = vcmask 27648
      %vm429 = vsmask.f32 7938
      %vm430 = vmand %vm428, %vm429
      %v431 = vld [vmem:[%s427] sm:$0xf]
      %v432 = vsel %vm430, %v353, %v431
      %433 = vst [vmem:[%s427] sm:$0xf] %v432
      %vm434 = vcmask 24576
      %vm435 = vsmask.f32 256
      %vm436 = vmand %vm434, %vm435
      %v437 = vld [vmem:[%s427 + $0x4] sm:$0x1]
      %v438 = vsel %vm436, %v354, %v437
      %439 = vst [vmem:[%s427 + $0x4] sm:$0x1] %v438
      %v440 = vld [vmem:[%s427 + $0x8] sm:$0xf]
      %v441 = vsel %vm430, %v361, %v440
      %442 = vst [vmem:[%s427 + $0x8] sm:$0xf] %v441
      %v443 = vld [vmem:[%s427 + $0xc] sm:$0x1]
      %v444 = vsel %vm436, %v362, %v443
      %445 = vst [vmem:[%s427 + $0xc] sm:$0x1] %v444
      %v446 = vld [vmem:[%s427 + $0x10] sm:$0xf]
      %v447 = vsel %vm430, %v369, %v446
      %448 = vst [vmem:[%s427 + $0x10] sm:$0xf] %v447
      %v449 = vld [vmem:[%s427 + $0x14] sm:$0x1]
      %v450 = vsel %vm436, %v370, %v449
      %451 = vst [vmem:[%s427 + $0x14] sm:$0x1] %v450
      %v452 = vld [vmem:[%s427 + $0x18] sm:$0xf]
      %v453 = vsel %vm430, %v377, %v452
      %454 = vst [vmem:[%s427 + $0x18] sm:$0xf] %v453
      %v455 = vld [vmem:[%s427 + $0x1c] sm:$0x1]
      %v456 = vsel %vm436, %v378, %v455
      %457 = vst [vmem:[%s427 + $0x1c] sm:$0x1] %v456
      %v458 = vld [vmem:[%s427 + $0x20] sm:$0xf]
      %v459 = vsel %vm430, %v385, %v458
      %460 = vst [vmem:[%s427 + $0x20] sm:$0xf] %v459
      %v461 = vld [vmem:[%s427 + $0x24] sm:$0x1]
      %v462 = vsel %vm436, %v386, %v461
      %463 = vst [vmem:[%s427 + $0x24] sm:$0x1] %v462
      %v464 = vld [vmem:[%s427 + $0x28] sm:$0xf]
      %v465 = vsel %vm430, %v393, %v464
      %466 = vst [vmem:[%s427 + $0x28] sm:$0xf] %v465
      %v467 = vld [vmem:[%s427 + $0x2c] sm:$0x1]
      %v468 = vsel %vm436, %v394, %v467
      %469 = vst [vmem:[%s427 + $0x2c] sm:$0x1] %v468
      %v470 = vld [vmem:[%s427 + $0x30] sm:$0xf]
      %v471 = vsel %vm430, %v401, %v470
      %472 = vst [vmem:[%s427 + $0x30] sm:$0xf] %v471
      %v473 = vld [vmem:[%s427 + $0x34] sm:$0x1]
      %v474 = vsel %vm436, %v402, %v473
      %475 = vst [vmem:[%s427 + $0x34] sm:$0x1] %v474
      %v476 = vld [vmem:[%s427 + $0x38] sm:$0xf]
      %v477 = vsel %vm430, %v409, %v476
      %478 = vst [vmem:[%s427 + $0x38] sm:$0xf] %v477
      %v479 = vld [vmem:[%s427 + $0x3c] sm:$0x1]
      %v480 = vsel %vm436, %v410, %v479
      %481 = vst [vmem:[%s427 + $0x3c] sm:$0x1] %v480
      %v482 = vld [vmem:[#allocation2] sm:$0xf]
      %v483 = vld [vmem:[#allocation2 + $0x8] sm:$0xf]
      %v484 = vld [vmem:[#allocation2 + $0x10] sm:$0xf]
      %v485 = vld [vmem:[#allocation2 + $0x18] sm:$0xf]
      %v486 = vld [vmem:[#allocation2 + $0x20] sm:$0xf]
      %v487 = vld [vmem:[#allocation2 + $0x28] sm:$0xf]
      %v488 = vld [vmem:[#allocation2 + $0x30] sm:$0xf]
      %v489 = vld [vmem:[#allocation2 + $0x38] sm:$0xf]
      %490 = vst.msk [vmem:[#allocation3] sm:$0xf] %vm293, %v482
      %491 = vst.msk [vmem:[#allocation3 + $0x4] sm:$0xf] %vm293, %v483
      %492 = vst.msk [vmem:[#allocation3 + $0x8] sm:$0xf] %vm293, %v484
      %493 = vst.msk [vmem:[#allocation3 + $0xc] sm:$0xf] %vm293, %v485
      %494 = vst.msk [vmem:[#allocation3 + $0x10] sm:$0xf] %vm293, %v486
      %495 = vst.msk [vmem:[#allocation3 + $0x14] sm:$0xf] %vm293, %v487
      %496 = vst.msk [vmem:[#allocation3 + $0x18] sm:$0xf] %vm293, %v488
      %497 = vst.msk [vmem:[#allocation3 + $0x1c] sm:$0xf] %vm293, %v489
      %v498 = vld [vmem:[#allocation2] sm:$0xf]
      %v499 = vld [vmem:[#allocation2 + $0x4] sm:$0x1]
      %v500 = vld [vmem:[#allocation2 + $0x8] sm:$0xf]
      %v501 = vld [vmem:[#allocation2 + $0xc] sm:$0x1]
      %v502 = vld [vmem:[#allocation2 + $0x10] sm:$0xf]
      %v503 = vld [vmem:[#allocation2 + $0x14] sm:$0x1]
      %v504 = vld [vmem:[#allocation2 + $0x18] sm:$0xf]
      %v505 = vld [vmem:[#allocation2 + $0x1c] sm:$0x1]
      %v506 = vld [vmem:[#allocation2 + $0x20] sm:$0xf]
      %v507 = vld [vmem:[#allocation2 + $0x24] sm:$0x1]
      %v508 = vld [vmem:[#allocation2 + $0x28] sm:$0xf]
      %v509 = vld [vmem:[#allocation2 + $0x2c] sm:$0x1]
      %v510 = vld [vmem:[#allocation2 + $0x30] sm:$0xf]
      %v511 = vld [vmem:[#allocation2 + $0x34] sm:$0x1]
      %v512 = vld [vmem:[#allocation2 + $0x38] sm:$0xf]
      %v513 = vld [vmem:[#allocation2 + $0x3c] sm:$0x1]
      %vm514 = vsmask.f32 3328
      %vm515 = vsmask.f32 7440
      %vm516 = vmor %vm514, %vm515
      %v518 = vshrl.u32 %v498, 16
      %v520 = vrot.slane %v518, 4
      %v521 = vshll.u32 %v498, 16
      %v523 = vrot.slane %v521, 5
      %v524 = vor.u32 %v520, %v523
      %v525 = vrot.slane %v524, 4
      %v527 = vshll.u32 %v499, 16
      %v529 = vrot.slane %v527, 5
      %v530 = vsel %vm516, %v525, %v529
      %v532 = vshrl.u32 %v500, 16
      %v534 = vrot.slane %v532, 4
      %v535 = vshll.u32 %v500, 16
      %v537 = vrot.slane %v535, 5
      %v538 = vor.u32 %v534, %v537
      %v539 = vrot.slane %v538, 4
      %v541 = vshll.u32 %v501, 16
      %v543 = vrot.slane %v541, 5
      %v544 = vsel %vm516, %v539, %v543
      %v546 = vshrl.u32 %v502, 16
      %v548 = vrot.slane %v546, 4
      %v549 = vshll.u32 %v502, 16
      %v551 = vrot.slane %v549, 5
      %v552 = vor.u32 %v548, %v551
      %v553 = vrot.slane %v552, 4
      %v555 = vshll.u32 %v503, 16
      %v557 = vrot.slane %v555, 5
      %v558 = vsel %vm516, %v553, %v557
      %v560 = vshrl.u32 %v504, 16
      %v562 = vrot.slane %v560, 4
      %v563 = vshll.u32 %v504, 16
      %v565 = vrot.slane %v563, 5
      %v566 = vor.u32 %v562, %v565
      %v567 = vrot.slane %v566, 4
      %v569 = vshll.u32 %v505, 16
      %v571 = vrot.slane %v569, 5
      %v572 = vsel %vm516, %v567, %v571
      %v574 = vshrl.u32 %v506, 16
      %v576 = vrot.slane %v574, 4
      %v577 = vshll.u32 %v506, 16
      %v579 = vrot.slane %v577, 5
      %v580 = vor.u32 %v576, %v579
      %v581 = vrot.slane %v580, 4
      %v583 = vshll.u32 %v507, 16
      %v585 = vrot.slane %v583, 5
      %v586 = vsel %vm516, %v581, %v585
      %v588 = vshrl.u32 %v508, 16
      %v590 = vrot.slane %v588, 4
      %v591 = vshll.u32 %v508, 16
      %v593 = vrot.slane %v591, 5
      %v594 = vor.u32 %v590, %v593
      %v595 = vrot.slane %v594, 4
      %v597 = vshll.u32 %v509, 16
      %v599 = vrot.slane %v597, 5
      %v600 = vsel %vm516, %v595, %v599
      %v602 = vshrl.u32 %v510, 16
      %v604 = vrot.slane %v602, 4
      %v605 = vshll.u32 %v510, 16
      %v607 = vrot.slane %v605, 5
      %v608 = vor.u32 %v604, %v607
      %v609 = vrot.slane %v608, 4
      %v611 = vshll.u32 %v511, 16
      %v613 = vrot.slane %v611, 5
      %v614 = vsel %vm516, %v609, %v613
      %v616 = vshrl.u32 %v512, 16
      %v618 = vrot.slane %v616, 4
      %v619 = vshll.u32 %v512, 16
      %v621 = vrot.slane %v619, 5
      %v622 = vor.u32 %v618, %v621
      %v623 = vrot.slane %v622, 4
      %v625 = vshll.u32 %v513, 16
      %v627 = vrot.slane %v625, 5
      %v628 = vsel %vm516, %v623, %v627
      %629 = vrot.lane.b32.xlu0 %v530, 4
      %v630 = vpop.permute.xlu0 %629
      %631 = vrot.lane.b32.xlu0 %v544, 4
      %v632 = vpop.permute.xlu0 %631
      %633 = vrot.lane.b32.xlu0 %v558, 4
      %v634 = vpop.permute.xlu0 %633
      %635 = vrot.lane.b32.xlu0 %v572, 4
      %v636 = vpop.permute.xlu0 %635
      %637 = vrot.lane.b32.xlu0 %v586, 4
      %v638 = vpop.permute.xlu0 %637
      %639 = vrot.lane.b32.xlu0 %v600, 4
      %v640 = vpop.permute.xlu0 %639
      %641 = vrot.lane.b32.xlu0 %v614, 4
      %v642 = vpop.permute.xlu0 %641
      %643 = vrot.lane.b32.xlu0 %v628, 4
      %v644 = vpop.permute.xlu0 %643
      %vm653 = vcmask 60448
      %654 = vst.msk [vmem:[#allocation3] sm:$0xf] %vm653, %v630
      %655 = vst.msk [vmem:[#allocation3 + $0x4] sm:$0xf] %vm653, %v632
      %656 = vst.msk [vmem:[#allocation3 + $0x8] sm:$0xf] %vm653, %v634
      %657 = vst.msk [vmem:[#allocation3 + $0xc] sm:$0xf] %vm653, %v636
      %658 = vst.msk [vmem:[#allocation3 + $0x10] sm:$0xf] %vm653, %v638
      %659 = vst.msk [vmem:[#allocation3 + $0x14] sm:$0xf] %vm653, %v640
      %660 = vst.msk [vmem:[#allocation3 + $0x18] sm:$0xf] %vm653, %v642
      %661 = vst.msk [vmem:[#allocation3 + $0x1c] sm:$0xf] %vm653, %v644
      %v662 = vld [vmem:[#allocation2] sm:$0xe]
      %v663 = vld [vmem:[#allocation2 + $0x4] sm:$0x1]
      %v664 = vld [vmem:[#allocation2 + $0x8] sm:$0xe]
      %v665 = vld [vmem:[#allocation2 + $0xc] sm:$0x1]
      %v666 = vld [vmem:[#allocation2 + $0x10] sm:$0xe]
      %v667 = vld [vmem:[#allocation2 + $0x14] sm:$0x1]
      %v668 = vld [vmem:[#allocation2 + $0x18] sm:$0xe]
      %v669 = vld [vmem:[#allocation2 + $0x1c] sm:$0x1]
      %v670 = vld [vmem:[#allocation2 + $0x20] sm:$0xe]
      %v671 = vld [vmem:[#allocation2 + $0x24] sm:$0x1]
      %v672 = vld [vmem:[#allocation2 + $0x28] sm:$0xe]
      %v673 = vld [vmem:[#allocation2 + $0x2c] sm:$0x1]
      %v674 = vld [vmem:[#allocation2 + $0x30] sm:$0xe]
      %v675 = vld [vmem:[#allocation2 + $0x34] sm:$0x1]
      %v676 = vld [vmem:[#allocation2 + $0x38] sm:$0xe]
      %v677 = vld [vmem:[#allocation2 + $0x3c] sm:$0x1]
      %vm694 = vcmask 1042432
      %vm695 = vcmask 1046532
      %vm696 = vmor %vm694, %vm695
      %v697 = vrot.slane %v662, 5
      %v698 = vrot.slane %v697, 4
      %v699 = vrot.slane %v663, 5
      %v700 = vsel %vm696, %v698, %v699
      %v701 = vrot.slane %v664, 5
      %v702 = vrot.slane %v701, 4
      %v703 = vrot.slane %v665, 5
      %v704 = vsel %vm696, %v702, %v703
      %v705 = vrot.slane %v666, 5
      %v706 = vrot.slane %v705, 4
      %v707 = vrot.slane %v667, 5
      %v708 = vsel %vm696, %v706, %v707
      %v709 = vrot.slane %v668, 5
      %v710 = vrot.slane %v709, 4
      %v711 = vrot.slane %v669, 5
      %v712 = vsel %vm696, %v710, %v711
      %v713 = vrot.slane %v670, 5
      %v714 = vrot.slane %v713, 4
      %v715 = vrot.slane %v671, 5
      %v716 = vsel %vm696, %v714, %v715
      %v717 = vrot.slane %v672, 5
      %v718 = vrot.slane %v717, 4
      %v719 = vrot.slane %v673, 5
      %v720 = vsel %vm696, %v718, %v719
      %v721 = vrot.slane %v674, 5
      %v722 = vrot.slane %v721, 4
      %v723 = vrot.slane %v675, 5
      %v724 = vsel %vm696, %v722, %v723
      %v725 = vrot.slane %v676, 5
      %v726 = vrot.slane %v725, 4
      %v727 = vrot.slane %v677, 5
      %v728 = vsel %vm696, %v726, %v727
      %729 = vrot.lane.b32.xlu0 %v700, 8
      %v730 = vpop.permute.xlu0 %729
      %731 = vrot.lane.b32.xlu0 %v704, 8
      %v732 = vpop.permute.xlu0 %731
      %733 = vrot.lane.b32.xlu0 %v708, 8
      %v734 = vpop.permute.xlu0 %733
      %735 = vrot.lane.b32.xlu0 %v712, 8
      %v736 = vpop.permute.xlu0 %735
      %737 = vrot.lane.b32.xlu0 %v716, 8
      %v738 = vpop.permute.xlu0 %737
      %739 = vrot.lane.b32.xlu0 %v720, 8
      %v740 = vpop.permute.xlu0 %739
      %741 = vrot.lane.b32.xlu0 %v724, 8
      %v742 = vpop.permute.xlu0 %741
      %743 = vrot.lane.b32.xlu0 %v728, 8
      %v744 = vpop.permute.xlu0 %743
      %vm753 = vcmask 93248
      %754 = vst.msk [vmem:[#allocation3] sm:$0xf] %vm753, %v730
      %755 = vst.msk [vmem:[#allocation3 + $0x4] sm:$0xf] %vm753, %v732
      %756 = vst.msk [vmem:[#allocation3 + $0x8] sm:$0xf] %vm753, %v734
      %757 = vst.msk [vmem:[#allocation3 + $0xc] sm:$0xf] %vm753, %v736
      %758 = vst.msk [vmem:[#allocation3 + $0x10] sm:$0xf] %vm753, %v738
      %759 = vst.msk [vmem:[#allocation3 + $0x14] sm:$0xf] %vm753, %v740
      %760 = vst.msk [vmem:[#allocation3 + $0x18] sm:$0xf] %vm753, %v742
      %761 = vst.msk [vmem:[#allocation3 + $0x1c] sm:$0xf] %vm753, %v744
      %v762 = vld [vmem:[%s427] sm:$0xf]
      %v763 = vld [vmem:[%s427 + $0x8] sm:$0xf]
      %v764 = vld [vmem:[%s427 + $0x10] sm:$0xf]
      %v765 = vld [vmem:[%s427 + $0x18] sm:$0xf]
      %v766 = vld [vmem:[%s427 + $0x20] sm:$0xf]
      %v767 = vld [vmem:[%s427 + $0x28] sm:$0xf]
      %v768 = vld [vmem:[%s427 + $0x30] sm:$0xf]
      %v769 = vld [vmem:[%s427 + $0x38] sm:$0xf]
      %778 = vrot.lane.b32.xlu0 %v762, 12
      %v779 = vpop.permute.xlu0 %778
      %780 = vrot.lane.b32.xlu0 %v763, 12
      %v781 = vpop.permute.xlu0 %780
      %782 = vrot.lane.b32.xlu0 %v764, 12
      %v783 = vpop.permute.xlu0 %782
      %784 = vrot.lane.b32.xlu0 %v765, 12
      %v785 = vpop.permute.xlu0 %784
      %786 = vrot.lane.b32.xlu0 %v766, 12
      %v787 = vpop.permute.xlu0 %786
      %788 = vrot.lane.b32.xlu0 %v767, 12
      %v789 = vpop.permute.xlu0 %788
      %790 = vrot.lane.b32.xlu0 %v768, 12
      %v791 = vpop.permute.xlu0 %790
      %792 = vrot.lane.b32.xlu0 %v769, 12
      %v793 = vpop.permute.xlu0 %792
      %vm802 = vcmask 126048
      %803 = vst.msk [vmem:[#allocation3] sm:$0xf] %vm802, %v779
      %804 = vst.msk [vmem:[#allocation3 + $0x4] sm:$0xf] %vm802, %v781
      %805 = vst.msk [vmem:[#allocation3 + $0x8] sm:$0xf] %vm802, %v783
      %806 = vst.msk [vmem:[#allocation3 + $0xc] sm:$0xf] %vm802, %v785
      %807 = vst.msk [vmem:[#allocation3 + $0x10] sm:$0xf] %vm802, %v787
      %808 = vst.msk [vmem:[#allocation3 + $0x14] sm:$0xf] %vm802, %v789
      %809 = vst.msk [vmem:[#allocation3 + $0x18] sm:$0xf] %vm802, %v791
      %810 = vst.msk [vmem:[#allocation3 + $0x1c] sm:$0xf] %vm802, %v793
      %v811 = vld [vmem:[%s427] sm:$0xf]
      %v812 = vld [vmem:[%s427 + $0x4] sm:$0x1]
      %v813 = vld [vmem:[%s427 + $0x8] sm:$0xf]
      %v814 = vld [vmem:[%s427 + $0xc] sm:$0x1]
      %v815 = vld [vmem:[%s427 + $0x10] sm:$0xf]
      %v816 = vld [vmem:[%s427 + $0x14] sm:$0x1]
      %v817 = vld [vmem:[%s427 + $0x18] sm:$0xf]
      %v818 = vld [vmem:[%s427 + $0x1c] sm:$0x1]
      %v819 = vld [vmem:[%s427 + $0x20] sm:$0xf]
      %v820 = vld [vmem:[%s427 + $0x24] sm:$0x1]
      %v821 = vld [vmem:[%s427 + $0x28] sm:$0xf]
      %v822 = vld [vmem:[%s427 + $0x2c] sm:$0x1]
      %v823 = vld [vmem:[%s427 + $0x30] sm:$0xf]
      %v824 = vld [vmem:[%s427 + $0x34] sm:$0x1]
      %v825 = vld [vmem:[%s427 + $0x38] sm:$0xf]
      %v826 = vld [vmem:[%s427 + $0x3c] sm:$0x1]
      %v828 = vshrl.u32 %v811, 16
      %v830 = vrot.slane %v828, 4
      %v831 = vshll.u32 %v811, 16
      %v833 = vrot.slane %v831, 5
      %v834 = vor.u32 %v830, %v833
      %v835 = vrot.slane %v834, 4
      %v837 = vshll.u32 %v812, 16
      %v839 = vrot.slane %v837, 5
      %v840 = vsel %vm516, %v835, %v839
      %v842 = vshrl.u32 %v813, 16
      %v844 = vrot.slane %v842, 4
      %v845 = vshll.u32 %v813, 16
      %v847 = vrot.slane %v845, 5
      %v848 = vor.u32 %v844, %v847
      %v849 = vrot.slane %v848, 4
      %v851 = vshll.u32 %v814, 16
      %v853 = vrot.slane %v851, 5
      %v854 = vsel %vm516, %v849, %v853
      %v856 = vshrl.u32 %v815, 16
      %v858 = vrot.slane %v856, 4
      %v859 = vshll.u32 %v815, 16
      %v861 = vrot.slane %v859, 5
      %v862 = vor.u32 %v858, %v861
      %v863 = vrot.slane %v862, 4
      %v865 = vshll.u32 %v816, 16
      %v867 = vrot.slane %v865, 5
      %v868 = vsel %vm516, %v863, %v867
      %v870 = vshrl.u32 %v817, 16
      %v872 = vrot.slane %v870, 4
      %v873 = vshll.u32 %v817, 16
      %v875 = vrot.slane %v873, 5
      %v876 = vor.u32 %v872, %v875
      %v877 = vrot.slane %v876, 4
      %v879 = vshll.u32 %v818, 16
      %v881 = vrot.slane %v879, 5
      %v882 = vsel %vm516, %v877, %v881
      %v884 = vshrl.u32 %v819, 16
      %v886 = vrot.slane %v884, 4
      %v887 = vshll.u32 %v819, 16
      %v889 = vrot.slane %v887, 5
      %v890 = vor.u32 %v886, %v889
      %v891 = vrot.slane %v890, 4
      %v893 = vshll.u32 %v820, 16
      %v895 = vrot.slane %v893, 5
      %v896 = vsel %vm516, %v891, %v895
      %v898 = vshrl.u32 %v821, 16
      %v900 = vrot.slane %v898, 4
      %v901 = vshll.u32 %v821, 16
      %v903 = vrot.slane %v901, 5
      %v904 = vor.u32 %v900, %v903
      %v905 = vrot.slane %v904, 4
      %v907 = vshll.u32 %v822, 16
      %v909 = vrot.slane %v907, 5
      %v910 = vsel %vm516, %v905, %v909
      %v912 = vshrl.u32 %v823, 16
      %v914 = vrot.slane %v912, 4
      %v915 = vshll.u32 %v823, 16
      %v917 = vrot.slane %v915, 5
      %v918 = vor.u32 %v914, %v917
      %v919 = vrot.slane %v918, 4
      %v921 = vshll.u32 %v824, 16
      %v923 = vrot.slane %v921, 5
      %v924 = vsel %vm516, %v919, %v923
      %v926 = vshrl.u32 %v825, 16
      %v928 = vrot.slane %v926, 4
      %v929 = vshll.u32 %v825, 16
      %v931 = vrot.slane %v929, 5
      %v932 = vor.u32 %v928, %v931
      %v933 = vrot.slane %v932, 4
      %v935 = vshll.u32 %v826, 16
      %v937 = vrot.slane %v935, 5
      %v938 = vsel %vm516, %v933, %v937
      %939 = vrot.lane.b32.xlu0 %v840, 16
      %v940 = vpop.permute.xlu0 %939
      %941 = vrot.lane.b32.xlu0 %v854, 16
      %v942 = vpop.permute.xlu0 %941
      %943 = vrot.lane.b32.xlu0 %v868, 16
      %v944 = vpop.permute.xlu0 %943
      %945 = vrot.lane.b32.xlu0 %v882, 16
      %v946 = vpop.permute.xlu0 %945
      %947 = vrot.lane.b32.xlu0 %v896, 16
      %v948 = vpop.permute.xlu0 %947
      %949 = vrot.lane.b32.xlu0 %v910, 16
      %v950 = vpop.permute.xlu0 %949
      %951 = vrot.lane.b32.xlu0 %v924, 16
      %v952 = vpop.permute.xlu0 %951
      %953 = vrot.lane.b32.xlu0 %v938, 16
      %v954 = vpop.permute.xlu0 %953
      %vm963 = vcmask 158848
      %964 = vst.msk [vmem:[#allocation3] sm:$0xf] %vm963, %v940
      %965 = vst.msk [vmem:[#allocation3 + $0x4] sm:$0xf] %vm963, %v942
      %966 = vst.msk [vmem:[#allocation3 + $0x8] sm:$0xf] %vm963, %v944
      %967 = vst.msk [vmem:[#allocation3 + $0xc] sm:$0xf] %vm963, %v946
      %968 = vst.msk [vmem:[#allocation3 + $0x10] sm:$0xf] %vm963, %v948
      %969 = vst.msk [vmem:[#allocation3 + $0x14] sm:$0xf] %vm963, %v950
      %970 = vst.msk [vmem:[#allocation3 + $0x18] sm:$0xf] %vm963, %v952
      %971 = vst.msk [vmem:[#allocation3 + $0x1c] sm:$0xf] %vm963, %v954
      %v972 = vld [vmem:[%s427] sm:$0xe]
      %v973 = vld [vmem:[%s427 + $0x4] sm:$0x1]
      %v974 = vld [vmem:[%s427 + $0x8] sm:$0xe]
      %v975 = vld [vmem:[%s427 + $0xc] sm:$0x1]
      %v976 = vld [vmem:[%s427 + $0x10] sm:$0xe]
      %v977 = vld [vmem:[%s427 + $0x14] sm:$0x1]
      %v978 = vld [vmem:[%s427 + $0x18] sm:$0xe]
      %v979 = vld [vmem:[%s427 + $0x1c] sm:$0x1]
      %v980 = vld [vmem:[%s427 + $0x20] sm:$0xe]
      %v981 = vld [vmem:[%s427 + $0x24] sm:$0x1]
      %v982 = vld [vmem:[%s427 + $0x28] sm:$0xe]
      %v983 = vld [vmem:[%s427 + $0x2c] sm:$0x1]
      %v984 = vld [vmem:[%s427 + $0x30] sm:$0xe]
      %v985 = vld [vmem:[%s427 + $0x34] sm:$0x1]
      %v986 = vld [vmem:[%s427 + $0x38] sm:$0xe]
      %v987 = vld [vmem:[%s427 + $0x3c] sm:$0x1]
      %v1004 = vrot.slane %v972, 5
      %v1005 = vrot.slane %v1004, 4
      %v1006 = vrot.slane %v973, 5
      %v1007 = vsel %vm696, %v1005, %v1006
      %v1008 = vrot.slane %v974, 5
      %v1009 = vrot.slane %v1008, 4
      %v1010 = vrot.slane %v975, 5
      %v1011 = vsel %vm696, %v1009, %v1010
      %v1012 = vrot.slane %v976, 5
      %v1013 = vrot.slane %v1012, 4
      %v1014 = vrot.slane %v977, 5
      %v1015 = vsel %vm696, %v1013, %v1014
      %v1016 = vrot.slane %v978, 5
      %v1017 = vrot.slane %v1016, 4
      %v1018 = vrot.slane %v979, 5
      %v1019 = vsel %vm696, %v1017, %v1018
      %v1020 = vrot.slane %v980, 5
      %v1021 = vrot.slane %v1020, 4
      %v1022 = vrot.slane %v981, 5
      %v1023 = vsel %vm696, %v1021, %v1022
      %v1024 = vrot.slane %v982, 5
      %v1025 = vrot.slane %v1024, 4
      %v1026 = vrot.slane %v983, 5
      %v1027 = vsel %vm696, %v1025, %v1026
      %v1028 = vrot.slane %v984, 5
      %v1029 = vrot.slane %v1028, 4
      %v1030 = vrot.slane %v985, 5
      %v1031 = vsel %vm696, %v1029, %v1030
      %v1032 = vrot.slane %v986, 5
      %v1033 = vrot.slane %v1032, 4
      %v1034 = vrot.slane %v987, 5
      %v1035 = vsel %vm696, %v1033, %v1034
      %1036 = vrot.lane.b32.xlu0 %v1007, 20
      %v1037 = vpop.permute.xlu0 %1036
      %1038 = vrot.lane.b32.xlu0 %v1011, 20
      %v1039 = vpop.permute.xlu0 %1038
      %1040 = vrot.lane.b32.xlu0 %v1015, 20
      %v1041 = vpop.permute.xlu0 %1040
      %1042 = vrot.lane.b32.xlu0 %v1019, 20
      %v1043 = vpop.permute.xlu0 %1042
      %1044 = vrot.lane.b32.xlu0 %v1023, 20
      %v1045 = vpop.permute.xlu0 %1044
      %1046 = vrot.lane.b32.xlu0 %v1027, 20
      %v1047 = vpop.permute.xlu0 %1046
      %1048 = vrot.lane.b32.xlu0 %v1031, 20
      %v1049 = vpop.permute.xlu0 %1048
      %1050 = vrot.lane.b32.xlu0 %v1035, 20
      %v1051 = vpop.permute.xlu0 %1050
      %vm1060 = vcmask 191648
      %1061 = vst.msk [vmem:[#allocation3] sm:$0xf] %vm1060, %v1037
      %1062 = vst.msk [vmem:[#allocation3 + $0x4] sm:$0xf] %vm1060, %v1039
      %1063 = vst.msk [vmem:[#allocation3 + $0x8] sm:$0xf] %vm1060, %v1041
      %1064 = vst.msk [vmem:[#allocation3 + $0xc] sm:$0xf] %vm1060, %v1043
      %1065 = vst.msk [vmem:[#allocation3 + $0x10] sm:$0xf] %vm1060, %v1045
      %1066 = vst.msk [vmem:[#allocation3 + $0x14] sm:$0xf] %vm1060, %v1047
      %1067 = vst.msk [vmem:[#allocation3 + $0x18] sm:$0xf] %vm1060, %v1049
      %1068 = vst.msk [vmem:[#allocation3 + $0x1c] sm:$0xf] %vm1060, %v1051
      %s1069 = scalar_lea.vmem [#allocation2], 16
      %v1070 = vld [vmem:[%s1069] sm:$0xf]
      %v1071 = vld [vmem:[%s1069 + $0x8] sm:$0xf]
      %v1072 = vld [vmem:[%s1069 + $0x10] sm:$0xf]
      %v1073 = vld [vmem:[%s1069 + $0x18] sm:$0xf]
      %v1074 = vld [vmem:[%s1069 + $0x20] sm:$0xf]
      %v1075 = vld [vmem:[%s1069 + $0x28] sm:$0xf]
      %v1076 = vld [vmem:[%s1069 + $0x30] sm:$0xf]
      %v1077 = vld [vmem:[%s1069 + $0x38] sm:$0xf]
      %1086 = vrot.lane.b32.xlu0 %v1070, 24
      %v1087 = vpop.permute.xlu0 %1086
      %1088 = vrot.lane.b32.xlu0 %v1071, 24
      %v1089 = vpop.permute.xlu0 %1088
      %1090 = vrot.lane.b32.xlu0 %v1072, 24
      %v1091 = vpop.permute.xlu0 %1090
      %1092 = vrot.lane.b32.xlu0 %v1073, 24
      %v1093 = vpop.permute.xlu0 %1092
      %1094 = vrot.lane.b32.xlu0 %v1074, 24
      %v1095 = vpop.permute.xlu0 %1094
      %1096 = vrot.lane.b32.xlu0 %v1075, 24
      %v1097 = vpop.permute.xlu0 %1096
      %1098 = vrot.lane.b32.xlu0 %v1076, 24
      %v1099 = vpop.permute.xlu0 %1098
      %1100 = vrot.lane.b32.xlu0 %v1077, 24
      %v1101 = vpop.permute.xlu0 %1100
      %vm1110 = vcmask 224448
      %1111 = vst.msk [vmem:[#allocation3] sm:$0xf] %vm1110, %v1087
      %1112 = vst.msk [vmem:[#allocation3 + $0x4] sm:$0xf] %vm1110, %v1089
      %1113 = vst.msk [vmem:[#allocation3 + $0x8] sm:$0xf] %vm1110, %v1091
      %1114 = vst.msk [vmem:[#allocation3 + $0xc] sm:$0xf] %vm1110, %v1093
      %1115 = vst.msk [vmem:[#allocation3 + $0x10] sm:$0xf] %vm1110, %v1095
      %1116 = vst.msk [vmem:[#allocation3 + $0x14] sm:$0xf] %vm1110, %v1097
      %1117 = vst.msk [vmem:[#allocation3 + $0x18] sm:$0xf] %vm1110, %v1099
      %1118 = vst.msk [vmem:[#allocation3 + $0x1c] sm:$0xf] %vm1110, %v1101
      %v1119 = vld [vmem:[%s1069] sm:$0xf]
      %v1120 = vld [vmem:[%s1069 + $0x4] sm:$0x1]
      %v1121 = vld [vmem:[%s1069 + $0x8] sm:$0xf]
      %v1122 = vld [vmem:[%s1069 + $0xc] sm:$0x1]
      %v1123 = vld [vmem:[%s1069 + $0x10] sm:$0xf]
      %v1124 = vld [vmem:[%s1069 + $0x14] sm:$0x1]
      %v1125 = vld [vmem:[%s1069 + $0x18] sm:$0xf]
      %v1126 = vld [vmem:[%s1069 + $0x1c] sm:$0x1]
      %v1127 = vld [vmem:[%s1069 + $0x20] sm:$0xf]
      %v1128 = vld [vmem:[%s1069 + $0x24] sm:$0x1]
      %v1129 = vld [vmem:[%s1069 + $0x28] sm:$0xf]
      %v1130 = vld [vmem:[%s1069 + $0x2c] sm:$0x1]
      %v1131 = vld [vmem:[%s1069 + $0x30] sm:$0xf]
      %v1132 = vld [vmem:[%s1069 + $0x34] sm:$0x1]
      %v1133 = vld [vmem:[%s1069 + $0x38] sm:$0xf]
      %v1134 = vld [vmem:[%s1069 + $0x3c] sm:$0x1]
      %v1136 = vshrl.u32 %v1119, 16
      %v1138 = vrot.slane %v1136, 4
      %v1139 = vshll.u32 %v1119, 16
      %v1141 = vrot.slane %v1139, 5
      %v1142 = vor.u32 %v1138, %v1141
      %v1143 = vrot.slane %v1142, 4
      %v1145 = vshll.u32 %v1120, 16
      %v1147 = vrot.slane %v1145, 5
      %v1148 = vsel %vm516, %v1143, %v1147
      %v1150 = vshrl.u32 %v1121, 16
      %v1152 = vrot.slane %v1150, 4
      %v1153 = vshll.u32 %v1121, 16
      %v1155 = vrot.slane %v1153, 5
      %v1156 = vor.u32 %v1152, %v1155
      %v1157 = vrot.slane %v1156, 4
      %v1159 = vshll.u32 %v1122, 16
      %v1161 = vrot.slane %v1159, 5
      %v1162 = vsel %vm516, %v1157, %v1161
      %v1164 = vshrl.u32 %v1123, 16
      %v1166 = vrot.slane %v1164, 4
      %v1167 = vshll.u32 %v1123, 16
      %v1169 = vrot.slane %v1167, 5
      %v1170 = vor.u32 %v1166, %v1169
      %v1171 = vrot.slane %v1170, 4
      %v1173 = vshll.u32 %v1124, 16
      %v1175 = vrot.slane %v1173, 5
      %v1176 = vsel %vm516, %v1171, %v1175
      %v1178 = vshrl.u32 %v1125, 16
      %v1180 = vrot.slane %v1178, 4
      %v1181 = vshll.u32 %v1125, 16
      %v1183 = vrot.slane %v1181, 5
      %v1184 = vor.u32 %v1180, %v1183
      %v1185 = vrot.slane %v1184, 4
      %v1187 = vshll.u32 %v1126, 16
      %v1189 = vrot.slane %v1187, 5
      %v1190 = vsel %vm516, %v1185, %v1189
      %v1192 = vshrl.u32 %v1127, 16
      %v1194 = vrot.slane %v1192, 4
      %v1195 = vshll.u32 %v1127, 16
      %v1197 = vrot.slane %v1195, 5
      %v1198 = vor.u32 %v1194, %v1197
      %v1199 = vrot.slane %v1198, 4
      %v1201 = vshll.u32 %v1128, 16
      %v1203 = vrot.slane %v1201, 5
      %v1204 = vsel %vm516, %v1199, %v1203
      %v1206 = vshrl.u32 %v1129, 16
      %v1208 = vrot.slane %v1206, 4
      %v1209 = vshll.u32 %v1129, 16
      %v1211 = vrot.slane %v1209, 5
      %v1212 = vor.u32 %v1208, %v1211
      %v1213 = vrot.slane %v1212, 4
      %v1215 = vshll.u32 %v1130, 16
      %v1217 = vrot.slane %v1215, 5
      %v1218 = vsel %vm516, %v1213, %v1217
      %v1220 = vshrl.u32 %v1131, 16
      %v1222 = vrot.slane %v1220, 4
      %v1223 = vshll.u32 %v1131, 16
      %v1225 = vrot.slane %v1223, 5
      %v1226 = vor.u32 %v1222, %v1225
      %v1227 = vrot.slane %v1226, 4
      %v1229 = vshll.u32 %v1132, 16
      %v1231 = vrot.slane %v1229, 5
      %v1232 = vsel %vm516, %v1227, %v1231
      %v1234 = vshrl.u32 %v1133, 16
      %v1236 = vrot.slane %v1234, 4
      %v1237 = vshll.u32 %v1133, 16
      %v1239 = vrot.slane %v1237, 5
      %v1240 = vor.u32 %v1236, %v1239
      %v1241 = vrot.slane %v1240, 4
      %v1243 = vshll.u32 %v1134, 16
      %v1245 = vrot.slane %v1243, 5
      %v1246 = vsel %vm516, %v1241, %v1245
      %1247 = vrot.lane.b32.xlu0 %v1148, 28
      %v1248 = vpop.permute.xlu0 %1247
      %1249 = vrot.lane.b32.xlu0 %v1162, 28
      %v1250 = vpop.permute.xlu0 %1249
      %1251 = vrot.lane.b32.xlu0 %v1176, 28
      %v1252 = vpop.permute.xlu0 %1251
      %1253 = vrot.lane.b32.xlu0 %v1190, 28
      %v1254 = vpop.permute.xlu0 %1253
      %1255 = vrot.lane.b32.xlu0 %v1204, 28
      %v1256 = vpop.permute.xlu0 %1255
      %1257 = vrot.lane.b32.xlu0 %v1218, 28
      %v1258 = vpop.permute.xlu0 %1257
      %1259 = vrot.lane.b32.xlu0 %v1232, 28
      %v1260 = vpop.permute.xlu0 %1259
      %1261 = vrot.lane.b32.xlu0 %v1246, 28
      %v1262 = vpop.permute.xlu0 %1261
      %vm1271 = vcmask 257248
      %1272 = vst.msk [vmem:[#allocation3] sm:$0xf] %vm1271, %v1248
      %1273 = vst.msk [vmem:[#allocation3 + $0x4] sm:$0xf] %vm1271, %v1250
      %1274 = vst.msk [vmem:[#allocation3 + $0x8] sm:$0xf] %vm1271, %v1252
      %1275 = vst.msk [vmem:[#allocation3 + $0xc] sm:$0xf] %vm1271, %v1254
      %1276 = vst.msk [vmem:[#allocation3 + $0x10] sm:$0xf] %vm1271, %v1256
      %1277 = vst.msk [vmem:[#allocation3 + $0x14] sm:$0xf] %vm1271, %v1258
      %1278 = vst.msk [vmem:[#allocation3 + $0x18] sm:$0xf] %vm1271, %v1260
      %1279 = vst.msk [vmem:[#allocation3 + $0x1c] sm:$0xf] %vm1271, %v1262
      %v1280 = vld [vmem:[%s1069] sm:$0xe]
      %v1281 = vld [vmem:[%s1069 + $0x4] sm:$0x1]
      %v1282 = vld [vmem:[%s1069 + $0x8] sm:$0xe]
      %v1283 = vld [vmem:[%s1069 + $0xc] sm:$0x1]
      %v1284 = vld [vmem:[%s1069 + $0x10] sm:$0xe]
      %v1285 = vld [vmem:[%s1069 + $0x14] sm:$0x1]
      %v1286 = vld [vmem:[%s1069 + $0x18] sm:$0xe]
      %v1287 = vld [vmem:[%s1069 + $0x1c] sm:$0x1]
      %v1288 = vld [vmem:[%s1069 + $0x20] sm:$0xe]
      %v1289 = vld [vmem:[%s1069 + $0x24] sm:$0x1]
      %v1290 = vld [vmem:[%s1069 + $0x28] sm:$0xe]
      %v1291 = vld [vmem:[%s1069 + $0x2c] sm:$0x1]
      %v1292 = vld [vmem:[%s1069 + $0x30] sm:$0xe]
      %v1293 = vld [vmem:[%s1069 + $0x34] sm:$0x1]
      %v1294 = vld [vmem:[%s1069 + $0x38] sm:$0xe]
      %v1295 = vld [vmem:[%s1069 + $0x3c] sm:$0x1]
      %v1312 = vrot.slane %v1280, 5
      %v1313 = vrot.slane %v1312, 4
      %v1314 = vrot.slane %v1281, 5
      %v1315 = vsel %vm696, %v1313, %v1314
      %v1316 = vrot.slane %v1282, 5
      %v1317 = vrot.slane %v1316, 4
      %v1318 = vrot.slane %v1283, 5
      %v1319 = vsel %vm696, %v1317, %v1318
      %v1320 = vrot.slane %v1284, 5
      %v1321 = vrot.slane %v1320, 4
      %v1322 = vrot.slane %v1285, 5
      %v1323 = vsel %vm696, %v1321, %v1322
      %v1324 = vrot.slane %v1286, 5
      %v1325 = vrot.slane %v1324, 4
      %v1326 = vrot.slane %v1287, 5
      %v1327 = vsel %vm696, %v1325, %v1326
      %v1328 = vrot.slane %v1288, 5
      %v1329 = vrot.slane %v1328, 4
      %v1330 = vrot.slane %v1289, 5
      %v1331 = vsel %vm696, %v1329, %v1330
      %v1332 = vrot.slane %v1290, 5
      %v1333 = vrot.slane %v1332, 4
      %v1334 = vrot.slane %v1291, 5
      %v1335 = vsel %vm696, %v1333, %v1334
      %v1336 = vrot.slane %v1292, 5
      %v1337 = vrot.slane %v1336, 4
      %v1338 = vrot.slane %v1293, 5
      %v1339 = vsel %vm696, %v1337, %v1338
      %v1340 = vrot.slane %v1294, 5
      %v1341 = vrot.slane %v1340, 4
      %v1342 = vrot.slane %v1295, 5
      %v1343 = vsel %vm696, %v1341, %v1342
      %1344 = vrot.lane.b32.xlu0 %v1315, 32
      %v1345 = vpop.permute.xlu0 %1344
      %1346 = vrot.lane.b32.xlu0 %v1319, 32
      %v1347 = vpop.permute.xlu0 %1346
      %1348 = vrot.lane.b32.xlu0 %v1323, 32
      %v1349 = vpop.permute.xlu0 %1348
      %1350 = vrot.lane.b32.xlu0 %v1327, 32
      %v1351 = vpop.permute.xlu0 %1350
      %1352 = vrot.lane.b32.xlu0 %v1331, 32
      %v1353 = vpop.permute.xlu0 %1352
      %1354 = vrot.lane.b32.xlu0 %v1335, 32
      %v1355 = vpop.permute.xlu0 %1354
      %1356 = vrot.lane.b32.xlu0 %v1339, 32
      %v1357 = vpop.permute.xlu0 %1356
      %1358 = vrot.lane.b32.xlu0 %v1343, 32
      %v1359 = vpop.permute.xlu0 %1358
      %vm1368 = vcmask 290048
      %1369 = vst.msk [vmem:[#allocation3] sm:$0xf] %vm1368, %v1345
      %1370 = vst.msk [vmem:[#allocation3 + $0x4] sm:$0xf] %vm1368, %v1347
      %1371 = vst.msk [vmem:[#allocation3 + $0x8] sm:$0xf] %vm1368, %v1349
      %1372 = vst.msk [vmem:[#allocation3 + $0xc] sm:$0xf] %vm1368, %v1351
      %1373 = vst.msk [vmem:[#allocation3 + $0x10] sm:$0xf] %vm1368, %v1353
      %1374 = vst.msk [vmem:[#allocation3 + $0x14] sm:$0xf] %vm1368, %v1355
      %1375 = vst.msk [vmem:[#allocation3 + $0x18] sm:$0xf] %vm1368, %v1357
      %1376 = vst.msk [vmem:[#allocation3 + $0x1c] sm:$0xf] %vm1368, %v1359
      %v1377 = vld [vmem:[#allocation3] sm:$0xf]
      %v1378 = vld [vmem:[#allocation3 + $0x4] sm:$0xf]
      %v1379 = vld [vmem:[#allocation3 + $0x8] sm:$0xf]
      %v1380 = vld [vmem:[#allocation3 + $0xc] sm:$0xf]
      %v1381 = vld [vmem:[#allocation3 + $0x10] sm:$0xf]
      %v1382 = vld [vmem:[#allocation3 + $0x14] sm:$0xf]
      %v1383 = vld [vmem:[#allocation3 + $0x18] sm:$0xf]
      %v1384 = vld [vmem:[#allocation3 + $0x1c] sm:$0xf]
      %v1385 = vld [vmem:[%s1] sm:$0xf]
      %v1386 = vld [vmem:[%s1 + $0x4] sm:$0xf]
      %v1387 = vld [vmem:[%s1 + $0x8] sm:$0xf]
      %v1388 = vld [vmem:[%s1 + $0xc] sm:$0xf]
      %v1389 = vld [vmem:[%s1 + $0x10] sm:$0x3]
      %v1398 = vunpack.c.l.b16 %v1377
      %v1399 = vunpack.c.l.b16 %v1378
      %v1400 = vunpack.c.l.b16 %v1379
      %v1401 = vunpack.c.l.b16 %v1380
      %v1402 = vunpack.c.l.b16 %v1381
      %v1403 = vunpack.c.l.b16 %v1382
      %v1404 = vunpack.c.l.b16 %v1383
      %v1405 = vunpack.c.l.b16 %v1384
      %v1406 = vpack.c.b16 %v1399, %v1398
      %v1407 = vpack.c.b16 %v1401, %v1400
      %v1408 = vpack.c.b16 %v1403, %v1402
      %v1409 = vpack.c.b16 %v1405, %v1404
      %v1415 = vunpack.c.l.b16 %v1385
      %v1416 = vunpack.c.l.b16 %v1386
      %v1417 = vunpack.c.l.b16 %v1387
      %v1418 = vunpack.c.l.b16 %v1388
      %v1419 = vunpack.c.l.b16 %v1389
      %v1420 = vpack.c.b16 %v1416, %v1415
      %v1421 = vpack.c.b16 %v1418, %v1417
      %v1422 = vpack.c.b16 %v1419, %v1419
      %vm1425 = vcmask 293888
      %v1427 = vsel %vm1425, %v1406, 0
      %v1430 = vsel %vm1425, %v1407, 0
      %v1433 = vsel %vm1425, %v1408, 0
      %v1436 = vsel %vm1425, %v1409, 0
      %vm1438 = vcmask 1041408
      %v1440 = vsel %vm1438, %v1422, 0
      %1442 = vmatprep.subr.bf16.mxu0 0
      %1443 = vmatpush1.bf16.msra.mxu0 %v1420
      %1444 = vmatprep.subr.bf16.mxu0 0
      %1445 = vmatpush1.bf16.msra.mxu0 %v1421
      %1446 = vmatprep.subr.bf16.mxu0 0
      %1447 = vmatpush1.bf16.msra.mxu0 %v1440
      %1448 = vmatprep.subr.bf16.mxu0 0
      %1449 = vmatpush1.bf16.msra.mxu0 0
      %1450 = vmatprep.subr.bf16.mxu0 0
      %1451 = vmatpush1.bf16.msra.mxu0 0
      %1452 = vmatprep.subr.bf16.mxu0 0
      %1453 = vmatpush1.bf16.msra.mxu0 0
      %1454 = vmatprep.subr.bf16.mxu0 0
      %1455 = vmatpush1.bf16.msra.mxu0 0
      %1456 = vmatprep.subr.bf16.mxu0 0
      %1457 = vmatpush1.bf16.msra.mxu0 0
      %1458 = vmatprep.subr.bf16.mxu0 0
      %1459 = vmatpush1.bf16.msra.mxu0 0
      %1460 = vmatprep.subr.bf16.mxu0 0
      %1461 = vmatpush1.bf16.msra.mxu0 0
      %1462 = vmatprep.subr.bf16.mxu0 0
      %1463 = vmatpush1.bf16.msra.mxu0 0
      %1464 = vmatprep.subr.bf16.mxu0 0
      %1465 = vmatpush1.bf16.msra.mxu0 0
      %1466 = vmatprep.subr.bf16.mxu0 0
      %1467 = vmatpush1.bf16.msra.mxu0 0
      %1468 = vmatprep.subr.bf16.mxu0 0
      %1469 = vmatpush1.bf16.msra.mxu0 0
      %1470 = vmatprep.subr.bf16.mxu0 0
      %1471 = vmatpush1.bf16.msra.mxu0 0
      %1472 = vmatprep.subr.bf16.mxu0 0
      %1473 = vmatpush1.bf16.msra.mxu0 0
      %1474 = vmatprep.mubr.bf16.mxu0 0
      %1475 = vmatmul.mubr.bf16.gmra.mrb[0].mxu0 %v1427
      %v1476 = vpop.f32.mrb[0].mxu0
      %v1477 = vadd.f32 0.0, %v1476
      %v1478 = vpop.f32.mrb[0].mxu0
      %v1479 = vpop.f32.mrb[0].mxu0
      %v1480 = vadd.f32 0.0, %v1479
      %v1481 = vpop.f32.mrb[0].mxu0
      %1482 = vmatprep.mubr.bf16.mxu0 0
      %1483 = vmatmul.mubr.bf16.gmra.mrb[0].mxu0 %v1430
      %v1484 = vpop.f32.mrb[0].mxu0
      %v1485 = vadd.f32 0.0, %v1484
      %v1486 = vpop.f32.mrb[0].mxu0
      %v1487 = vpop.f32.mrb[0].mxu0
      %v1488 = vadd.f32 0.0, %v1487
      %v1489 = vpop.f32.mrb[0].mxu0
      %1490 = vmatprep.mubr.bf16.mxu0 0
      %1491 = vmatmul.mubr.bf16.gmra.mrb[0].mxu0 %v1433
      %v1492 = vpop.f32.mrb[0].mxu0
      %v1493 = vadd.f32 0.0, %v1492
      %v1494 = vpop.f32.mrb[0].mxu0
      %v1495 = vpop.f32.mrb[0].mxu0
      %v1496 = vadd.f32 0.0, %v1495
      %v1497 = vpop.f32.mrb[0].mxu0
      %1498 = vmatprep.mubr.bf16.mxu0 0
      %1499 = vmatmul.mubr.bf16.gmra.mrb[0].mxu0 %v1436
      %v1500 = vpop.f32.mrb[0].mxu0
      %v1501 = vadd.f32 0.0, %v1500
      %v1502 = vpop.f32.mrb[0].mxu0
      %v1503 = vpop.f32.mrb[0].mxu0
      %v1504 = vadd.f32 0.0, %v1503
      %v1505 = vpop.f32.mrb[0].mxu0
      %1506 = vdwg.mxu0
      %vm1507 = vcmask 64512
      %1508 = vst.msk [vmem:[%s182] sm:$0xff] %vm1507, %v1477
      %1509 = vst.msk [vmem:[%s182 + $0x8] sm:$0xff] %vm1507, %v1480
      %1510 = vst.msk [vmem:[%s182 + $0x10] sm:$0xff] %vm1507, %v1485
      %1511 = vst.msk [vmem:[%s182 + $0x18] sm:$0xff] %vm1507, %v1488
      %1512 = vst.msk [vmem:[%s182 + $0x20] sm:$0xff] %vm1507, %v1493
      %1513 = vst.msk [vmem:[%s182 + $0x28] sm:$0xff] %vm1507, %v1496
      %1514 = vst.msk [vmem:[%s182 + $0x30] sm:$0xff] %vm1507, %v1501
      %1515 = vst.msk [vmem:[%s182 + $0x38] sm:$0xff] %vm1507, %v1504
      %v1516 = vsel %vm1507, %v1477, 0.0
      %v1517 = vsel %vm1507, %v1480, 0.0
      %v1518 = vadd.f32 %v1516, %v1517
      %v1519 = vsel %vm1507, %v1485, 0.0
      %v1520 = vadd.f32 %v1518, %v1519
      %v1521 = vsel %vm1507, %v1488, 0.0
      %v1522 = vadd.f32 %v1520, %v1521
      %v1523 = vsel %vm1507, %v1493, 0.0
      %v1524 = vadd.f32 %v1522, %v1523
      %v1525 = vsel %vm1507, %v1496, 0.0
      %v1526 = vadd.f32 %v1524, %v1525
      %v1527 = vsel %vm1507, %v1501, 0.0
      %v1528 = vadd.f32 %v1526, %v1527
      %v1529 = vsel %vm1507, %v1504, 0.0
      %v1530 = vadd.f32 %v1528, %v1529
      %v1531 = vrot.slane %v1530, 4
      %v1532 = vadd.f32 %v1530, %v1531
      %v1533 = vrot.slane %v1532, 2
      %v1534 = vadd.f32 %v1532, %v1533
      %v1535 = vrot.slane %v1534, 1
      %v1536 = vadd.f32 %v1534, %v1535
      %vm1537 = vcmask 57344
      %1538 = vst.msk [vmem:[%s186] sm:$0x1] %vm1537, %v1536
      %v1539 = vmul.f32 %v1477, %v1477
      %v1540 = vmul.f32 %v1480, %v1480
      %v1541 = vmul.f32 %v1485, %v1485
      %v1542 = vmul.f32 %v1488, %v1488
      %v1543 = vmul.f32 %v1493, %v1493
      %v1544 = vmul.f32 %v1496, %v1496
      %v1545 = vmul.f32 %v1501, %v1501
      %v1546 = vmul.f32 %v1504, %v1504
      %v1547 = vsel %vm1507, %v1539, 0.0
      %v1548 = vsel %vm1507, %v1540, 0.0
      %v1549 = vadd.f32 %v1547, %v1548
      %v1550 = vsel %vm1507, %v1541, 0.0
      %v1551 = vadd.f32 %v1549, %v1550
      %v1552 = vsel %vm1507, %v1542, 0.0
      %v1553 = vadd.f32 %v1551, %v1552
      %v1554 = vsel %vm1507, %v1543, 0.0
      %v1555 = vadd.f32 %v1553, %v1554
      %v1556 = vsel %vm1507, %v1544, 0.0
      %v1557 = vadd.f32 %v1555, %v1556
      %v1558 = vsel %vm1507, %v1545, 0.0
      %v1559 = vadd.f32 %v1557, %v1558
      %v1560 = vsel %vm1507, %v1546, 0.0
      %v1561 = vadd.f32 %v1559, %v1560
      %v1562 = vrot.slane %v1561, 4
      %v1563 = vadd.f32 %v1561, %v1562
      %v1564 = vrot.slane %v1563, 2
      %v1565 = vadd.f32 %v1563, %v1564
      %v1566 = vrot.slane %v1565, 1
      %v1567 = vadd.f32 %v1565, %v1566
      %1568 = vst.msk [vmem:[%s186 + $0x1] sm:$0x1] %vm1537, %v1567
      %p1569 = scmp.lt.s32.totalorder %s15, 1
      %s1570 = scalar_select %p1569, %s15, 1
      %s1571 = smul.addr %s1570, 8
      %s1572 = smul.addr %s1571, 8
      %s1573 = scalar_lea.vmem %s2, %s1572
      %p1574 = scmp.lt.s32.totalorder %s15, 1
      %s1575 = scalar_select %p1574, %s15, 1
      %s1576 = smul.addr %s1575, 2
      %s1577 = scalar_lea.vmem %s3, %s1576
      // Predicated region
      $region29: #{down_forward.3} parent=27 // pred_check
        %p1578 = pneg %p80
      $region30: #{down_forward.3} parent=27 // pred_check_branch
        %1580 = sbr.rel (%p1578) target = $region32
      $region31: #{down_forward.3} parent=27 // pred_region
        _
      $region32: #{down_forward.3} parent=27 // pred_fallthru
        _
      // Predicated region
      $region33: #{down_forward.3} parent=27 // pred_check
        %p1581 = pneg %p106
      $region34: #{down_forward.3} parent=27 // pred_check_branch
        %1583 = sbr.rel (%p1581) target = $region36
      $region35: #{down_forward.3} parent=27 // pred_region
        _
      $region36: #{down_forward.3} parent=27 // pred_fallthru
        _
    $region28: #{down_forward.3} parent=5 // pred_fallthru
      _
    %p1584 = scmp.le.s32.totalorder 2, %s10
    // Predicated region
    $region37: #{down_forward.3} parent=5 // pred_check
      %p1585 = pneg %p1584
    $region38: #{down_forward.3} parent=5 // pred_check_branch
      %1587 = sbr.rel (%p1585) target = $region40
    $region39: #{down_forward.3} parent=5 // pred_region
      %s1588 = ssub.s32 %s10, 2
      // Predicated region
      $region41: #{down_forward.3} parent=39 // pred_check
        %p1589 = pneg %p86
      $region42: #{down_forward.3} parent=39 // pred_check_branch
        %1591 = sbr.rel (%p1589) target = $region44
      $region43: #{down_forward.3} parent=39 // pred_region
        %p1592 = scmp.lt.s32.totalorder %s16, 1
        %s1593 = scalar_select %p1592, %s16, 1
        %s1594 = smul.addr %s1593, 8
        %s1595 = smul.addr %s1594, 8
        %s1596 = scalar_lea.vmem %s2, %s1595
      $region44: #{down_forward.3} parent=39 // pred_fallthru
        _
      // Predicated region
      $region45: #{down_forward.3} parent=39 // pred_check
        %p1597 = pneg %p112
      $region46: #{down_forward.3} parent=39 // pred_check_branch
        %1599 = sbr.rel (%p1597) target = $region48
      $region47: #{down_forward.3} parent=39 // pred_region
        %p1600 = scmp.lt.s32.totalorder %s16, 1
        %s1601 = scalar_select %p1600, %s16, 1
        %s1602 = smul.addr %s1601, 2
        %s1603 = scalar_lea.vmem %s3, %s1602
      $region48: #{down_forward.3} parent=39 // pred_fallthru
        _
    $region40: #{down_forward.3} parent=5 // pred_fallthru
      _
  $region6: #{down_forward.3} parent=0 // loop_footer
    %s14 = sadd.s32 1, %s10
  $region7: #{down_forward.3} parent=0 // loop_footer_branch
    %9 = sbr.rel target = $region3
  $region8: #{down_forward.3} parent=0 // loop_exit
    _

// kernel: down_forward.4
$region0: #{down_forward.4}
  #allocation0 [shape = 'u32[]', space=smem, size = 0x4, offset = 0x4, fixed_abs, tag = 'smem constant byte address 0x4 - core index']
  #allocation1 [shape = 'u32[144,128]{1,0:T(1,128)}', space=vmem, size = 0x12000, scoped, tag = 'internal scratch']
  #allocation2 [shape = 'bf16[10,10,8]{2,1,0:T(8,128)(2,1)}', space=vmem, size = 0xa000, scoped, tag = 'scratch operand']
  #allocation3 [shape = 'bf16[8,8,72]{2,1,0:T(8,128)(2,1)}', space=vmem, size = 0x4000, scoped, tag = 'scratch operand']
  %s0 = inlined_call_operand.vmem [shape: f32[2,8,8,8], index: 0, kind: input, shape index: {}]
  %s1 = inlined_call_operand.vmem [shape: f32[2,2,8], index: 1, kind: input, shape index: {}]
  %s2 = inlined_call_operand.vmem [shape: f32[1,8], index: 2, kind: input, shape index: {}]
  %s3 = inlined_call_operand.vmem [shape: f32[1,8], index: 3, kind: input, shape index: {}]
  %s4 = inlined_call_operand.vmem [shape: bf16[72,8], index: 4, kind: input, shape index: {}]
  %s5 = inlined_call_operand.vmem [shape: f32[2,8,8,8], index: 5, kind: output, shape index: {0}]
  %s6 = inlined_call_operand.vmem [shape: f32[2,2,8], index: 6, kind: output, shape index: {1}]
  %7 = xla_tuple %s5, %s6
  %s8 = sld [smem:[#allocation0]]
  $region61: #{down_forward.4} parent=0
    _
  %s10 = ssub.s32 1, %s8
  %s11 = scalar_select 0, %s10, %s8
  loop: start=0, step=1, limit=4
  $region2: #{down_forward.4} parent=0 // loop_pre_header
    _
  $region3: #{down_forward.4} parent=0 // loop_header
    %s13 = sphi 0, %s17
    %p14 = scmp.ge.s32.totalorder %s13, 4
    %s23 = sphi 0, %s25
    %s26 = sphi 0, %s23
    %s27 = sphi 0, %s26
    %s43 = sphi 0, %s27
    %s47 = sphi 0, %s47
    %s49 = sphi 0, %s47
    %s50 = sphi 0, %s49
    %s64 = sphi 0, %s50
    %s68 = sphi 0, %s68
    %s70 = sphi 0, %s68
    %s71 = sphi 0, %s70
    %s85 = sphi 0, %s71
    %s89 = sphi 0, %s89
    %s91 = sphi 0, %s89
    %s92 = sphi 0, %s91
    %s106 = sphi 0, %s92
    %s110 = sphi 0, %s110
    %s112 = sphi 0, %s110
    %s113 = sphi 0, %s112
    %s127 = sphi 0, %s113
    %s133 = sphi 0, %s135
    %s136 = sphi 0, %s133
    %s137 = sphi 0, %s136
    %s153 = sphi 0, %s137
    %s159 = sphi 0, %s161
    %s162 = sphi 0, %s159
    %s163 = sphi 0, %s162
    %s179 = sphi 0, %s163
  $region4: #{down_forward.4} parent=0 // loop_header_branch
    %16 = sbr.rel (%p14) target = $region8
  $region5: #{down_forward.4} parent=0 // loop_body
    %s18 = ssub.s32 %s13, 1
    %s19 = ssub.s32 %s13, 2
    %s20 = sadd.s32 %s13, 1
    %s21 = ssub.s32 %s13, %s20
    %p22 = scmp.eq.s32.totalorder %s21, 0
    %s24 = sadd.s32 %s23, 1
    %s25 = scalar_select %p22, %s23, %s24
    %p28 = pneg %p22
    %p29 = scmp.eq.s32.totalorder %s13, 1
    %p30 = por %p28, %p29
    %p31 = scmp.ne.s32.totalorder %s23, %s26
    %p32 = scmp.eq.s32.totalorder %s13, 0
    %p33 = por %p31, %p32
    %p34 = scmp.ne.s32.totalorder %s23, %s26
    %p35 = scmp.eq.s32.totalorder %s18, 1
    %p36 = por %p34, %p35
    %p37 = scmp.ne.s32.totalorder %s26, %s27
    %p38 = scmp.eq.s32.totalorder %s18, 0
    %p39 = por %p37, %p38
    %p40 = scmp.ne.s32.totalorder %s26, %s27
    %p41 = scmp.eq.s32.totalorder %s19, 1
    %p42 = por %p40, %p41
    %p44 = scmp.ne.s32.totalorder %s27, %s43
    %p45 = scmp.eq.s32.totalorder %s19, 0
    %p46 = por %p44, %p45
    %s48 = sadd.s32 %s47, 1
    %p51 = scmp.eq.s32.totalorder %s13, 1
    %p52 = scmp.ne.s32.totalorder %s47, %s49
    %p53 = scmp.eq.s32.totalorder %s13, 0
    %p54 = por %p52, %p53
    %p55 = scmp.ne.s32.totalorder %s47, %s49
    %p56 = scmp.eq.s32.totalorder %s18, 1
    %p57 = por %p55, %p56
    %p58 = scmp.ne.s32.totalorder %s49, %s50
    %p59 = scmp.eq.s32.totalorder %s18, 0
    %p60 = por %p58, %p59
    %p61 = scmp.ne.s32.totalorder %s49, %s50
    %p62 = scmp.eq.s32.totalorder %s19, 1
    %p63 = por %p61, %p62
    %p65 = scmp.ne.s32.totalorder %s50, %s64
    %p66 = scmp.eq.s32.totalorder %s19, 0
    %p67 = por %p65, %p66
    %s69 = sadd.s32 %s68, 1
    %p72 = scmp.eq.s32.totalorder %s13, 1
    %p73 = scmp.ne.s32.totalorder %s68, %s70
    %p74 = scmp.eq.s32.totalorder %s13, 0
    %p75 = por %p73, %p74
    %p76 = scmp.ne.s32.totalorder %s68, %s70
    %p77 = scmp.eq.s32.totalorder %s18, 1
    %p78 = por %p76, %p77
    %p79 = scmp.ne.s32.totalorder %s70, %s71
    %p80 = scmp.eq.s32.totalorder %s18, 0
    %p81 = por %p79, %p80
    %p82 = scmp.ne.s32.totalorder %s70, %s71
    %p83 = scmp.eq.s32.totalorder %s19, 1
    %p84 = por %p82, %p83
    %p86 = scmp.ne.s32.totalorder %s71, %s85
    %p87 = scmp.eq.s32.totalorder %s19, 0
    %p88 = por %p86, %p87
    %s90 = sadd.s32 %s89, 1
    %p93 = scmp.eq.s32.totalorder %s13, 1
    %p94 = scmp.ne.s32.totalorder %s89, %s91
    %p95 = scmp.eq.s32.totalorder %s13, 0
    %p96 = por %p94, %p95
    %p97 = scmp.ne.s32.totalorder %s89, %s91
    %p98 = scmp.eq.s32.totalorder %s18, 1
    %p99 = por %p97, %p98
    %p100 = scmp.ne.s32.totalorder %s91, %s92
    %p101 = scmp.eq.s32.totalorder %s18, 0
    %p102 = por %p100, %p101
    %p103 = scmp.ne.s32.totalorder %s91, %s92
    %p104 = scmp.eq.s32.totalorder %s19, 1
    %p105 = por %p103, %p104
    %p107 = scmp.ne.s32.totalorder %s92, %s106
    %p108 = scmp.eq.s32.totalorder %s19, 0
    %p109 = por %p107, %p108
    %s111 = sadd.s32 %s110, 1
    %p114 = scmp.eq.s32.totalorder %s13, 1
    %p115 = scmp.ne.s32.totalorder %s110, %s112
    %p116 = scmp.eq.s32.totalorder %s13, 0
    %p117 = por %p115, %p116
    %p118 = scmp.ne.s32.totalorder %s110, %s112
    %p119 = scmp.eq.s32.totalorder %s18, 1
    %p120 = por %p118, %p119
    %p121 = scmp.ne.s32.totalorder %s112, %s113
    %p122 = scmp.eq.s32.totalorder %s18, 0
    %p123 = por %p121, %p122
    %p124 = scmp.ne.s32.totalorder %s112, %s113
    %p125 = scmp.eq.s32.totalorder %s19, 1
    %p126 = por %p124, %p125
    %p128 = scmp.ne.s32.totalorder %s113, %s127
    %p129 = scmp.eq.s32.totalorder %s19, 0
    %p130 = por %p128, %p129
    %s131 = ssub.s32 %s13, %s20
    %p132 = scmp.eq.s32.totalorder %s131, 0
    %s134 = sadd.s32 %s133, 1
    %s135 = scalar_select %p132, %s133, %s134
    %p138 = pneg %p132
    %p139 = scmp.eq.s32.totalorder %s13, 1
    %p140 = por %p138, %p139
    %p141 = scmp.ne.s32.totalorder %s133, %s136
    %p142 = scmp.eq.s32.totalorder %s13, 0
    %p143 = por %p141, %p142
    %p144 = scmp.ne.s32.totalorder %s133, %s136
    %p145 = scmp.eq.s32.totalorder %s18, 1
    %p146 = por %p144, %p145
    %p147 = scmp.ne.s32.totalorder %s136, %s137
    %p148 = scmp.eq.s32.totalorder %s18, 0
    %p149 = por %p147, %p148
    %p150 = scmp.ne.s32.totalorder %s136, %s137
    %p151 = scmp.eq.s32.totalorder %s19, 1
    %p152 = por %p150, %p151
    %p154 = scmp.ne.s32.totalorder %s137, %s153
    %p155 = scmp.eq.s32.totalorder %s19, 0
    %p156 = por %p154, %p155
    %s157 = ssub.s32 %s13, %s20
    %p158 = scmp.eq.s32.totalorder %s157, 0
    %s160 = sadd.s32 %s159, 1
    %s161 = scalar_select %p158, %s159, %s160
    %p164 = pneg %p158
    %p165 = scmp.eq.s32.totalorder %s13, 1
    %p166 = por %p164, %p165
    %p167 = scmp.ne.s32.totalorder %s159, %s162
    %p168 = scmp.eq.s32.totalorder %s13, 0
    %p169 = por %p167, %p168
    %p170 = scmp.ne.s32.totalorder %s159, %s162
    %p171 = scmp.eq.s32.totalorder %s18, 1
    %p172 = por %p170, %p171
    %p173 = scmp.ne.s32.totalorder %s162, %s163
    %p174 = scmp.eq.s32.totalorder %s18, 0
    %p175 = por %p173, %p174
    %p176 = scmp.ne.s32.totalorder %s162, %s163
    %p177 = scmp.eq.s32.totalorder %s19, 1
    %p178 = por %p176, %p177
    %p180 = scmp.ne.s32.totalorder %s163, %s179
    %p181 = scmp.eq.s32.totalorder %s19, 0
    %p182 = por %p180, %p181
    %p183 = scmp.le.s32.totalorder 1, %s13
    %p184 = scmp.lt.s32.totalorder %s13, 3
    %p185 = pnand %p183, %p184
    %p186 = pneg %p185
    // Predicated region
    $region9: #{down_forward.4} parent=5 // pred_check
      _
    $region10: #{down_forward.4} parent=5 // pred_check_branch
      %188 = sbr.rel (%p185) target = $region12
    $region11: #{down_forward.4} parent=5 // pred_region
      %s189 = ssub.s32 %s13, 1
      // Predicated region
      $region13: #{down_forward.4} parent=11 // pred_check
        %p190 = pneg %p60
      $region14: #{down_forward.4} parent=11 // pred_check_branch
        %192 = sbr.rel (%p190) target = $region16
      $region15: #{down_forward.4} parent=11 // pred_region
        _
      $region16: #{down_forward.4} parent=11 // pred_fallthru
        _
      // Predicated region
      $region17: #{down_forward.4} parent=11 // pred_check
        %p193 = pneg %p81
      $region18: #{down_forward.4} parent=11 // pred_check_branch
        %195 = sbr.rel (%p193) target = $region20
      $region19: #{down_forward.4} parent=11 // pred_region
        _
      $region20: #{down_forward.4} parent=11 // pred_fallthru
        _
      // Predicated region
      $region21: #{down_forward.4} parent=11 // pred_check
        %p196 = pneg %p102
      $region22: #{down_forward.4} parent=11 // pred_check_branch
        %198 = sbr.rel (%p196) target = $region24
      $region23: #{down_forward.4} parent=11 // pred_region
        _
      $region24: #{down_forward.4} parent=11 // pred_fallthru
        _
      // Predicated region
      $region25: #{down_forward.4} parent=11 // pred_check
        %p199 = pneg %p123
      $region26: #{down_forward.4} parent=11 // pred_check_branch
        %201 = sbr.rel (%p199) target = $region28
      $region27: #{down_forward.4} parent=11 // pred_region
        _
      $region28: #{down_forward.4} parent=11 // pred_fallthru
        _
    $region12: #{down_forward.4} parent=5 // pred_fallthru
      _
    %p202 = scmp.lt.s32.totalorder %s13, 2
    // Predicated region
    $region29: #{down_forward.4} parent=5 // pred_check
      %p203 = pneg %p202
    $region30: #{down_forward.4} parent=5 // pred_check_branch
      %205 = sbr.rel (%p203) target = $region32
    $region31: #{down_forward.4} parent=5 // pred_region
      // Predicated region
      $region33: #{down_forward.4} parent=31 // pred_check
        %p206 = pneg %p33
      $region34: #{down_forward.4} parent=31 // pred_check_branch
        %208 = sbr.rel (%p206) target = $region36
      $region35: #{down_forward.4} parent=31 // pred_region
        %p209 = scmp.lt.s32.totalorder %s13, 1
        %s210 = scalar_select %p209, %s13, 1
        %s211 = smul.addr %s210, 8
        %s212 = smul.addr %s211, 8
        %s213 = scalar_lea.vmem %s0, %s212
      $region36: #{down_forward.4} parent=31 // pred_fallthru
        _
    $region32: #{down_forward.4} parent=5 // pred_fallthru
      _
    %p214 = scmp.le.s32.totalorder 1, %s13
    %p215 = scmp.lt.s32.totalorder %s13, 3
    %p216 = pnand %p214, %p215
    %p217 = pneg %p216
    // Predicated region
    $region37: #{down_forward.4} parent=5 // pred_check
      _
    $region38: #{down_forward.4} parent=5 // pred_check_branch
      %219 = sbr.rel (%p216) target = $region40
    $region39: #{down_forward.4} parent=5 // pred_region
      %s220 = ssub.s32 %s13, 1
      %p221 = scmp.lt.s32.totalorder %s18, 1
      %s222 = scalar_select %p221, %s18, 1
      %s223 = smul.addr %s222, 8
      %s224 = smul.addr %s223, 8
      %s225 = scalar_lea.vmem %s0, %s224
      %p226 = pneg %p39
      %p227 = pneg %p36
      %p228 = pneg %p60
      %p229 = pneg %p57
      %p230 = pneg %p81
      %p231 = pneg %p78
      %p232 = pneg %p102
      %p233 = pneg %p99
      %p234 = pneg %p123
      %p235 = pneg %p120
      %p236 = pneg %p149
      %p237 = pneg %p146
      %p238 = scmp.lt.s32.totalorder %s18, 1
      %s239 = scalar_select %p238, %s18, 1
      %s240 = smul.addr %s239, 8
      %s241 = smul.addr %s240, 8
      %s242 = scalar_lea.vmem %s5, %s241
      %p243 = pneg %p175
      %p244 = pneg %p172
      %p245 = scmp.lt.s32.totalorder %s18, 1
      %s246 = scalar_select %p245, %s18, 1
      %s247 = smul.addr %s246, 2
      %s248 = scalar_lea.vmem %s6, %s247
      %p249 = scmp.lt.s32.totalorder %s18, 1
      %s250 = scalar_select %p249, %s18, 1
      %s251 = smul.addr %s250, 8
      %s252 = smul.addr %s251, 8
      %s253 = scalar_lea.vmem %s0, %s252
      %p254 = scmp.lt.s32.totalorder %s18, 1
      %s255 = scalar_select %p254, %s18, 1
      %s256 = smul.addr %s255, 8
      %s257 = smul.addr %s256, 8
      %s258 = scalar_lea.vmem %s5, %s257
      %p259 = scmp.lt.s32.totalorder %s18, 1
      %s260 = scalar_select %p259, %s18, 1
      %s261 = smul.addr %s260, 2
      %s262 = scalar_lea.vmem %s6, %s261
      %v264 = vld [vmem:[%s1] sm:$0x3]
      %v265 = vld [vmem:[%s1 + $0x2] sm:$0x3]
      %v266 = vld [vmem:[%s2] sm:$0x1]
      %v267 = vld [vmem:[%s3] sm:$0x1]
      %vm268 = vcmask 58368
      %v269 = vsel %vm268, %v264, 0.0
      %v270 = vsel %vm268, %v265, 0.0
      %v271 = vadd.f32 %v269, %v270
      %v272 = vmul.f32 %v271, 0.0078125
      %v273 = vmul.f32 %v272, %v272
      %v275 = vrot.slane %v273, 7
      %v277 = vsub.f32 %v272, %v275
      %v278 = vmax.f32 %v277, 0.0
      %v279 = vadd.f32 %v278, 1e-05
      %v280 = vrsqrt.pop %v279
      %v283 = vunpack.c.l.s4 1966171168
      %v284 = vunpack.c.0.s8 %v283
      %v285 = vlaneseq
      %v286 = vshrl.u32 %v285, 7
      %v287 = vsub.s32 %v284, %v286
      %v288 = vrot.slane %v280, %v287
      %v289 = vcombine.high %v288, %v288
      %v291 = vunpack.c.l.s4 1966171168
      %v292 = vunpack.c.0.s8 %v291
      %v293 = vlaneseq
      %v294 = vshrl.u32 %v293, 7
      %v295 = vsub.s32 %v292, %v294
      %v296 = vrot.slane %v289, %v295
      %v298 = vmul.f32 %v266, %v296
      %v299 = vmul.f32 %v272, %v298
      %v300 = vsub.f32 %v267, %v299
      %v301 = vld [vmem:[%s253] sm:$0xff]
      %v302 = vld [vmem:[%s253 + $0x8] sm:$0xff]
      %v303 = vld [vmem:[%s253 + $0x10] sm:$0xff]
      %v304 = vld [vmem:[%s253 + $0x18] sm:$0xff]
      %v305 = vld [vmem:[%s253 + $0x20] sm:$0xff]
      %v306 = vld [vmem:[%s253 + $0x28] sm:$0xff]
      %v307 = vld [vmem:[%s253 + $0x30] sm:$0xff]
      %v308 = vld [vmem:[%s253 + $0x38] sm:$0xff]
      %v310 = vlaneseq
      %v311 = vshrl.u32 %v310, 7
      %v312 = vsub.s32 0, %v311
      %v313 = vrot.slane %v298, %v312
      %v315 = vmul.f32 %v301, %v313
      %v316 = vmul.f32 %v302, %v313
      %v317 = vmul.f32 %v303, %v313
      %v318 = vmul.f32 %v304, %v313
      %v319 = vmul.f32 %v305, %v313
      %v320 = vmul.f32 %v306, %v313
      %v321 = vmul.f32 %v307, %v313
      %v322 = vmul.f32 %v308, %v313
      %v324 = vlaneseq
      %v325 = vshrl.u32 %v324, 7
      %v326 = vsub.s32 0, %v325
      %v327 = vrot.slane %v300, %v326
      %v329 = vadd.f32 %v315, %v327
      %v330 = vadd.f32 %v316, %v327
      %v331 = vadd.f32 %v317, %v327
      %v332 = vadd.f32 %v318, %v327
      %v333 = vadd.f32 %v319, %v327
      %v334 = vadd.f32 %v320, %v327
      %v335 = vadd.f32 %v321, %v327
      %v336 = vadd.f32 %v322, %v327
      %v337 = vmax.f32 %v329, 0.0
      %v338 = vmax.f32 %v330, 0.0
      %v339 = vmax.f32 %v331, 0.0
      %v340 = vmax.f32 %v332, 0.0
      %v341 = vmax.f32 %v333, 0.0
      %v342 = vmax.f32 %v334, 0.0
      %v343 = vmax.f32 %v335, 0.0
      %v344 = vmax.f32 %v336, 0.0
      %vm345 = vcmask 60416
      %346 = vst.msk [vmem:[#allocation2] sm:$0xf] %vm345, 0
      %vm347 = vcmask 57344
      %348 = vst.msk [vmem:[#allocation2 + $0x4] sm:$0x1] %vm347, 0
      %349 = vst.msk [vmem:[#allocation2 + $0x8] sm:$0xf] %vm345, 0
      %350 = vst.msk [vmem:[#allocation2 + $0xc] sm:$0x1] %vm347, 0
      %351 = vst.msk [vmem:[#allocation2 + $0x10] sm:$0xf] %vm345, 0
      %352 = vst.msk [vmem:[#allocation2 + $0x14] sm:$0x1] %vm347, 0
      %353 = vst.msk [vmem:[#allocation2 + $0x18] sm:$0xf] %vm345, 0
      %354 = vst.msk [vmem:[#allocation2 + $0x1c] sm:$0x1] %vm347, 0
      %355 = vst.msk [vmem:[#allocation2 + $0x20] sm:$0xf] %vm345, 0
      %356 = vst.msk [vmem:[#allocation2 + $0x24] sm:$0x1] %vm347, 0
      %357 = vst.msk [vmem:[#allocation2 + $0x28] sm:$0xf] %vm345, 0
      %358 = vst.msk [vmem:[#allocation2 + $0x2c] sm:$0x1] %vm347, 0
      %359 = vst.msk [vmem:[#allocation2 + $0x30] sm:$0xf] %vm345, 0
      %360 = vst.msk [vmem:[#allocation2 + $0x34] sm:$0x1] %vm347, 0
      %361 = vst.msk [vmem:[#allocation2 + $0x38] sm:$0xf] %vm345, 0
      %362 = vst.msk [vmem:[#allocation2 + $0x3c] sm:$0x1] %vm347, 0
      %363 = vst.msk [vmem:[#allocation2 + $0x40] sm:$0xf] %vm345, 0
      %364 = vst.msk [vmem:[#allocation2 + $0x44] sm:$0x1] %vm347, 0
      %365 = vst.msk [vmem:[#allocation2 + $0x48] sm:$0xf] %vm345, 0
      %366 = vst.msk [vmem:[#allocation2 + $0x4c] sm:$0x1] %vm347, 0
      %v367 = vpack.c.bf16 %v337, %v337
      %v368 = vpack.c.bf16 %v338, %v338
      %v369 = vpack.c.bf16 %v339, %v339
      %v370 = vpack.c.bf16 %v340, %v340
      %v371 = vpack.c.bf16 %v341, %v341
      %v372 = vpack.c.bf16 %v342, %v342
      %v373 = vpack.c.bf16 %v343, %v343
      %v374 = vpack.c.bf16 %v344, %v344
      %v383 = vunpack.c.l.b16 %v367
      %v384 = vunpack.c.l.b16 %v368
      %v385 = vunpack.c.l.b16 %v369
      %v386 = vunpack.c.l.b16 %v370
      %v387 = vunpack.c.l.b16 %v371
      %v388 = vunpack.c.l.b16 %v372
      %v389 = vunpack.c.l.b16 %v373
      %v390 = vunpack.c.l.b16 %v374
      %v391 = vpack.c.b16 %v383, %v383
      %v392 = vpack.c.b16 %v384, %v384
      %v393 = vpack.c.b16 %v385, %v385
      %v394 = vpack.c.b16 %v386, %v386
      %v395 = vpack.c.b16 %v387, %v387
      %v396 = vpack.c.b16 %v388, %v388
      %v397 = vpack.c.b16 %v389, %v389
      %v398 = vpack.c.b16 %v390, %v390
      %v400 = vshrl.u32 %v391, 16
      %v402 = vrot.slane %v400, 7
      %v403 = vshll.u32 %v391, 16
      %v405 = vor.u32 %v402, %v403
      %v406 = vrot.slane %v402, 4
      %v408 = vshrl.u32 %v392, 16
      %v410 = vrot.slane %v408, 7
      %v411 = vshll.u32 %v392, 16
      %v413 = vor.u32 %v410, %v411
      %v414 = vrot.slane %v410, 4
      %v416 = vshrl.u32 %v393, 16
      %v418 = vrot.slane %v416, 7
      %v419 = vshll.u32 %v393, 16
      %v421 = vor.u32 %v418, %v419
      %v422 = vrot.slane %v418, 4
      %v424 = vshrl.u32 %v394, 16
      %v426 = vrot.slane %v424, 7
      %v427 = vshll.u32 %v394, 16
      %v429 = vor.u32 %v426, %v427
      %v430 = vrot.slane %v426, 4
      %v432 = vshrl.u32 %v395, 16
      %v434 = vrot.slane %v432, 7
      %v435 = vshll.u32 %v395, 16
      %v437 = vor.u32 %v434, %v435
      %v438 = vrot.slane %v434, 4
      %v440 = vshrl.u32 %v396, 16
      %v442 = vrot.slane %v440, 7
      %v443 = vshll.u32 %v396, 16
      %v445 = vor.u32 %v442, %v443
      %v446 = vrot.slane %v442, 4
      %v448 = vshrl.u32 %v397, 16
      %v450 = vrot.slane %v448, 7
      %v451 = vshll.u32 %v397, 16
      %v453 = vor.u32 %v450, %v451
      %v454 = vrot.slane %v450, 4
      %v456 = vshrl.u32 %v398, 16
      %v458 = vrot.slane %v456, 7
      %v459 = vshll.u32 %v398, 16
      %v461 = vor.u32 %v458, %v459
      %v462 = vrot.slane %v458, 4
      %s479 = scalar_lea.vmem [#allocation2], 8
      %vm480 = vcmask 60416
      %vm481 = vsmask.f32 7938
      %vm482 = vmand %vm480, %vm481
      %v483 = vld [vmem:[%s479] sm:$0xf]
      %v484 = vsel %vm482, %v405, %v483
      %485 = vst [vmem:[%s479] sm:$0xf] %v484
      %vm486 = vcmask 57344
      %vm487 = vsmask.f32 256
      %vm488 = vmand %vm486, %vm487
      %v489 = vld [vmem:[%s479 + $0x4] sm:$0x1]
      %v490 = vsel %vm488, %v406, %v489
      %491 = vst [vmem:[%s479 + $0x4] sm:$0x1] %v490
      %v492 = vld [vmem:[%s479 + $0x8] sm:$0xf]
      %v493 = vsel %vm482, %v413, %v492
      %494 = vst [vmem:[%s479 + $0x8] sm:$0xf] %v493
      %v495 = vld [vmem:[%s479 + $0xc] sm:$0x1]
      %v496 = vsel %vm488, %v414, %v495
      %497 = vst [vmem:[%s479 + $0xc] sm:$0x1] %v496
      %v498 = vld [vmem:[%s479 + $0x10] sm:$0xf]
      %v499 = vsel %vm482, %v421, %v498
      %500 = vst [vmem:[%s479 + $0x10] sm:$0xf] %v499
      %v501 = vld [vmem:[%s479 + $0x14] sm:$0x1]
      %v502 = vsel %vm488, %v422, %v501
      %503 = vst [vmem:[%s479 + $0x14] sm:$0x1] %v502
      %v504 = vld [vmem:[%s479 + $0x18] sm:$0xf]
      %v505 = vsel %vm482, %v429, %v504
      %506 = vst [vmem:[%s479 + $0x18] sm:$0xf] %v505
      %v507 = vld [vmem:[%s479 + $0x1c] sm:$0x1]
      %v508 = vsel %vm488, %v430, %v507
      %509 = vst [vmem:[%s479 + $0x1c] sm:$0x1] %v508
      %v510 = vld [vmem:[%s479 + $0x20] sm:$0xf]
      %v511 = vsel %vm482, %v437, %v510
      %512 = vst [vmem:[%s479 + $0x20] sm:$0xf] %v511
      %v513 = vld [vmem:[%s479 + $0x24] sm:$0x1]
      %v514 = vsel %vm488, %v438, %v513
      %515 = vst [vmem:[%s479 + $0x24] sm:$0x1] %v514
      %v516 = vld [vmem:[%s479 + $0x28] sm:$0xf]
      %v517 = vsel %vm482, %v445, %v516
      %518 = vst [vmem:[%s479 + $0x28] sm:$0xf] %v517
      %v519 = vld [vmem:[%s479 + $0x2c] sm:$0x1]
      %v520 = vsel %vm488, %v446, %v519
      %521 = vst [vmem:[%s479 + $0x2c] sm:$0x1] %v520
      %v522 = vld [vmem:[%s479 + $0x30] sm:$0xf]
      %v523 = vsel %vm482, %v453, %v522
      %524 = vst [vmem:[%s479 + $0x30] sm:$0xf] %v523
      %v525 = vld [vmem:[%s479 + $0x34] sm:$0x1]
      %v526 = vsel %vm488, %v454, %v525
      %527 = vst [vmem:[%s479 + $0x34] sm:$0x1] %v526
      %v528 = vld [vmem:[%s479 + $0x38] sm:$0xf]
      %v529 = vsel %vm482, %v461, %v528
      %530 = vst [vmem:[%s479 + $0x38] sm:$0xf] %v529
      %v531 = vld [vmem:[%s479 + $0x3c] sm:$0x1]
      %v532 = vsel %vm488, %v462, %v531
      %533 = vst [vmem:[%s479 + $0x3c] sm:$0x1] %v532
      %v534 = vld [vmem:[#allocation2] sm:$0xf]
      %v535 = vld [vmem:[#allocation2 + $0x8] sm:$0xf]
      %v536 = vld [vmem:[#allocation2 + $0x10] sm:$0xf]
      %v537 = vld [vmem:[#allocation2 + $0x18] sm:$0xf]
      %v538 = vld [vmem:[#allocation2 + $0x20] sm:$0xf]
      %v539 = vld [vmem:[#allocation2 + $0x28] sm:$0xf]
      %v540 = vld [vmem:[#allocation2 + $0x30] sm:$0xf]
      %v541 = vld [vmem:[#allocation2 + $0x38] sm:$0xf]
      %542 = vst.msk [vmem:[#allocation3] sm:$0xf] %vm345, %v534
      %543 = vst.msk [vmem:[#allocation3 + $0x4] sm:$0xf] %vm345, %v535
      %544 = vst.msk [vmem:[#allocation3 + $0x8] sm:$0xf] %vm345, %v536
      %545 = vst.msk [vmem:[#allocation3 + $0xc] sm:$0xf] %vm345, %v537
      %546 = vst.msk [vmem:[#allocation3 + $0x10] sm:$0xf] %vm345, %v538
      %547 = vst.msk [vmem:[#allocation3 + $0x14] sm:$0xf] %vm345, %v539
      %548 = vst.msk [vmem:[#allocation3 + $0x18] sm:$0xf] %vm345, %v540
      %549 = vst.msk [vmem:[#allocation3 + $0x1c] sm:$0xf] %vm345, %v541
      %v550 = vld [vmem:[#allocation2] sm:$0xf]
      %v551 = vld [vmem:[#allocation2 + $0x4] sm:$0x1]
      %v552 = vld [vmem:[#allocation2 + $0x8] sm:$0xf]
      %v553 = vld [vmem:[#allocation2 + $0xc] sm:$0x1]
      %v554 = vld [vmem:[#allocation2 + $0x10] sm:$0xf]
      %v555 = vld [vmem:[#allocation2 + $0x14] sm:$0x1]
      %v556 = vld [vmem:[#allocation2 + $0x18] sm:$0xf]
      %v557 = vld [vmem:[#allocation2 + $0x1c] sm:$0x1]
      %v558 = vld [vmem:[#allocation2 + $0x20] sm:$0xf]
      %v559 = vld [vmem:[#allocation2 + $0x24] sm:$0x1]
      %v560 = vld [vmem:[#allocation2 + $0x28] sm:$0xf]
      %v561 = vld [vmem:[#allocation2 + $0x2c] sm:$0x1]
      %v562 = vld [vmem:[#allocation2 + $0x30] sm:$0xf]
      %v563 = vld [vmem:[#allocation2 + $0x34] sm:$0x1]
      %v564 = vld [vmem:[#allocation2 + $0x38] sm:$0xf]
      %v565 = vld [vmem:[#allocation2 + $0x3c] sm:$0x1]
      %vm566 = vsmask.f32 3328
      %vm567 = vsmask.f32 7440
      %vm568 = vmor %vm566, %vm567
      %v570 = vshrl.u32 %v550, 16
      %v572 = vrot.slane %v570, 4
      %v573 = vshll.u32 %v550, 16
      %v575 = vrot.slane %v573, 5
      %v576 = vor.u32 %v572, %v575
      %v577 = vrot.slane %v576, 4
      %v579 = vshll.u32 %v551, 16
      %v581 = vrot.slane %v579, 5
      %v582 = vsel %vm568, %v577, %v581
      %v584 = vshrl.u32 %v552, 16
      %v586 = vrot.slane %v584, 4
      %v587 = vshll.u32 %v552, 16
      %v589 = vrot.slane %v587, 5
      %v590 = vor.u32 %v586, %v589
      %v591 = vrot.slane %v590, 4
      %v593 = vshll.u32 %v553, 16
      %v595 = vrot.slane %v593, 5
      %v596 = vsel %vm568, %v591, %v595
      %v598 = vshrl.u32 %v554, 16
      %v600 = vrot.slane %v598, 4
      %v601 = vshll.u32 %v554, 16
      %v603 = vrot.slane %v601, 5
      %v604 = vor.u32 %v600, %v603
      %v605 = vrot.slane %v604, 4
      %v607 = vshll.u32 %v555, 16
      %v609 = vrot.slane %v607, 5
      %v610 = vsel %vm568, %v605, %v609
      %v612 = vshrl.u32 %v556, 16
      %v614 = vrot.slane %v612, 4
      %v615 = vshll.u32 %v556, 16
      %v617 = vrot.slane %v615, 5
      %v618 = vor.u32 %v614, %v617
      %v619 = vrot.slane %v618, 4
      %v621 = vshll.u32 %v557, 16
      %v623 = vrot.slane %v621, 5
      %v624 = vsel %vm568, %v619, %v623
      %v626 = vshrl.u32 %v558, 16
      %v628 = vrot.slane %v626, 4
      %v629 = vshll.u32 %v558, 16
      %v631 = vrot.slane %v629, 5
      %v632 = vor.u32 %v628, %v631
      %v633 = vrot.slane %v632, 4
      %v635 = vshll.u32 %v559, 16
      %v637 = vrot.slane %v635, 5
      %v638 = vsel %vm568, %v633, %v637
      %v640 = vshrl.u32 %v560, 16
      %v642 = vrot.slane %v640, 4
      %v643 = vshll.u32 %v560, 16
      %v645 = vrot.slane %v643, 5
      %v646 = vor.u32 %v642, %v645
      %v647 = vrot.slane %v646, 4
      %v649 = vshll.u32 %v561, 16
      %v651 = vrot.slane %v649, 5
      %v652 = vsel %vm568, %v647, %v651
      %v654 = vshrl.u32 %v562, 16
      %v656 = vrot.slane %v654, 4
      %v657 = vshll.u32 %v562, 16
      %v659 = vrot.slane %v657, 5
      %v660 = vor.u32 %v656, %v659
      %v661 = vrot.slane %v660, 4
      %v663 = vshll.u32 %v563, 16
      %v665 = vrot.slane %v663, 5
      %v666 = vsel %vm568, %v661, %v665
      %v668 = vshrl.u32 %v564, 16
      %v670 = vrot.slane %v668, 4
      %v671 = vshll.u32 %v564, 16
      %v673 = vrot.slane %v671, 5
      %v674 = vor.u32 %v670, %v673
      %v675 = vrot.slane %v674, 4
      %v677 = vshll.u32 %v565, 16
      %v679 = vrot.slane %v677, 5
      %v680 = vsel %vm568, %v675, %v679
      %681 = vrot.lane.b32.xlu0 %v582, 8
      %v682 = vpop.permute.xlu0 %681
      %683 = vrot.lane.b32.xlu0 %v596, 8
      %v684 = vpop.permute.xlu0 %683
      %685 = vrot.lane.b32.xlu0 %v610, 8
      %v686 = vpop.permute.xlu0 %685
      %687 = vrot.lane.b32.xlu0 %v624, 8
      %v688 = vpop.permute.xlu0 %687
      %689 = vrot.lane.b32.xlu0 %v638, 8
      %v690 = vpop.permute.xlu0 %689
      %691 = vrot.lane.b32.xlu0 %v652, 8
      %v692 = vpop.permute.xlu0 %691
      %693 = vrot.lane.b32.xlu0 %v666, 8
      %v694 = vpop.permute.xlu0 %693
      %695 = vrot.lane.b32.xlu0 %v680, 8
      %v696 = vpop.permute.xlu0 %695
      %vm705 = vcmask 126016
      %706 = vst.msk [vmem:[#allocation3] sm:$0xf] %vm705, %v682
      %707 = vst.msk [vmem:[#allocation3 + $0x4] sm:$0xf] %vm705, %v684
      %708 = vst.msk [vmem:[#allocation3 + $0x8] sm:$0xf] %vm705, %v686
      %709 = vst.msk [vmem:[#allocation3 + $0xc] sm:$0xf] %vm705, %v688
      %710 = vst.msk [vmem:[#allocation3 + $0x10] sm:$0xf] %vm705, %v690
      %711 = vst.msk [vmem:[#allocation3 + $0x14] sm:$0xf] %vm705, %v692
      %712 = vst.msk [vmem:[#allocation3 + $0x18] sm:$0xf] %vm705, %v694
      %713 = vst.msk [vmem:[#allocation3 + $0x1c] sm:$0xf] %vm705, %v696
      %v714 = vld [vmem:[#allocation2] sm:$0xe]
      %v715 = vld [vmem:[#allocation2 + $0x4] sm:$0x1]
      %v716 = vld [vmem:[#allocation2 + $0x8] sm:$0xe]
      %v717 = vld [vmem:[#allocation2 + $0xc] sm:$0x1]
      %v718 = vld [vmem:[#allocation2 + $0x10] sm:$0xe]
      %v719 = vld [vmem:[#allocation2 + $0x14] sm:$0x1]
      %v720 = vld [vmem:[#allocation2 + $0x18] sm:$0xe]
      %v721 = vld [vmem:[#allocation2 + $0x1c] sm:$0x1]
      %v722 = vld [vmem:[#allocation2 + $0x20] sm:$0xe]
      %v723 = vld [vmem:[#allocation2 + $0x24] sm:$0x1]
      %v724 = vld [vmem:[#allocation2 + $0x28] sm:$0xe]
      %v725 = vld [vmem:[#allocation2 + $0x2c] sm:$0x1]
      %v726 = vld [vmem:[#allocation2 + $0x30] sm:$0xe]
      %v727 = vld [vmem:[#allocation2 + $0x34] sm:$0x1]
      %v728 = vld [vmem:[#allocation2 + $0x38] sm:$0xe]
      %v729 = vld [vmem:[#allocation2 + $0x3c] sm:$0x1]
      %vm746 = vcmask 1042432
      %vm747 = vcmask 1046532
      %vm748 = vmor %vm746, %vm747
      %v749 = vrot.slane %v714, 5
      %v750 = vrot.slane %v749, 4
      %v751 = vrot.slane %v715, 5
      %v752 = vsel %vm748, %v750, %v751
      %v753 = vrot.slane %v716, 5
      %v754 = vrot.slane %v753, 4
      %v755 = vrot.slane %v717, 5
      %v756 = vsel %vm748, %v754, %v755
      %v757 = vrot.slane %v718, 5
      %v758 = vrot.slane %v757, 4
      %v759 = vrot.slane %v719, 5
      %v760 = vsel %vm748, %v758, %v759
      %v761 = vrot.slane %v720, 5
      %v762 = vrot.slane %v761, 4
      %v763 = vrot.slane %v721, 5
      %v764 = vsel %vm748, %v762, %v763
      %v765 = vrot.slane %v722, 5
      %v766 = vrot.slane %v765, 4
      %v767 = vrot.slane %v723, 5
      %v768 = vsel %vm748, %v766, %v767
      %v769 = vrot.slane %v724, 5
      %v770 = vrot.slane %v769, 4
      %v771 = vrot.slane %v725, 5
      %v772 = vsel %vm748, %v770, %v771
      %v773 = vrot.slane %v726, 5
      %v774 = vrot.slane %v773, 4
      %v775 = vrot.slane %v727, 5
      %v776 = vsel %vm748, %v774, %v775
      %v777 = vrot.slane %v728, 5
      %v778 = vrot.slane %v777, 4
      %v779 = vrot.slane %v729, 5
      %v780 = vsel %vm748, %v778, %v779
      %781 = vrot.lane.b32.xlu0 %v752, 16
      %v782 = vpop.permute.xlu0 %781
      %783 = vrot.lane.b32.xlu0 %v756, 16
      %v784 = vpop.permute.xlu0 %783
      %785 = vrot.lane.b32.xlu0 %v760, 16
      %v786 = vpop.permute.xlu0 %785
      %787 = vrot.lane.b32.xlu0 %v764, 16
      %v788 = vpop.permute.xlu0 %787
      %789 = vrot.lane.b32.xlu0 %v768, 16
      %v790 = vpop.permute.xlu0 %789
      %791 = vrot.lane.b32.xlu0 %v772, 16
      %v792 = vpop.permute.xlu0 %791
      %793 = vrot.lane.b32.xlu0 %v776, 16
      %v794 = vpop.permute.xlu0 %793
      %795 = vrot.lane.b32.xlu0 %v780, 16
      %v796 = vpop.permute.xlu0 %795
      %vm805 = vcmask 191616
      %806 = vst.msk [vmem:[#allocation3] sm:$0xf] %vm805, %v782
      %807 = vst.msk [vmem:[#allocation3 + $0x4] sm:$0xf] %vm805, %v784
      %808 = vst.msk [vmem:[#allocation3 + $0x8] sm:$0xf] %vm805, %v786
      %809 = vst.msk [vmem:[#allocation3 + $0xc] sm:$0xf] %vm805, %v788
      %810 = vst.msk [vmem:[#allocation3 + $0x10] sm:$0xf] %vm805, %v790
      %811 = vst.msk [vmem:[#allocation3 + $0x14] sm:$0xf] %vm805, %v792
      %812 = vst.msk [vmem:[#allocation3 + $0x18] sm:$0xf] %vm805, %v794
      %813 = vst.msk [vmem:[#allocation3 + $0x1c] sm:$0xf] %vm805, %v796
      %v814 = vld [vmem:[%s479] sm:$0xf]
      %v815 = vld [vmem:[%s479 + $0x8] sm:$0xf]
      %v816 = vld [vmem:[%s479 + $0x10] sm:$0xf]
      %v817 = vld [vmem:[%s479 + $0x18] sm:$0xf]
      %v818 = vld [vmem:[%s479 + $0x20] sm:$0xf]
      %v819 = vld [vmem:[%s479 + $0x28] sm:$0xf]
      %v820 = vld [vmem:[%s479 + $0x30] sm:$0xf]
      %v821 = vld [vmem:[%s479 + $0x38] sm:$0xf]
      %830 = vrot.lane.b32.xlu0 %v814, 24
      %v831 = vpop.permute.xlu0 %830
      %832 = vrot.lane.b32.xlu0 %v815, 24
      %v833 = vpop.permute.xlu0 %832
      %834 = vrot.lane.b32.xlu0 %v816, 24
      %v835 = vpop.permute.xlu0 %834
      %836 = vrot.lane.b32.xlu0 %v817, 24
      %v837 = vpop.permute.xlu0 %836
      %838 = vrot.lane.b32.xlu0 %v818, 24
      %v839 = vpop.permute.xlu0 %838
      %840 = vrot.lane.b32.xlu0 %v819, 24
      %v841 = vpop.permute.xlu0 %840
      %842 = vrot.lane.b32.xlu0 %v820, 24
      %v843 = vpop.permute.xlu0 %842
      %844 = vrot.lane.b32.xlu0 %v821, 24
      %v845 = vpop.permute.xlu0 %844
      %vm854 = vcmask 257216
      %855 = vst.msk [vmem:[#allocation3] sm:$0xf] %vm854, %v831
      %856 = vst.msk [vmem:[#allocation3 + $0x4] sm:$0xf] %vm854, %v833
      %857 = vst.msk [vmem:[#allocation3 + $0x8] sm:$0xf] %vm854, %v835
      %858 = vst.msk [vmem:[#allocation3 + $0xc] sm:$0xf] %vm854, %v837
      %859 = vst.msk [vmem:[#allocation3 + $0x10] sm:$0xf] %vm854, %v839
      %860 = vst.msk [vmem:[#allocation3 + $0x14] sm:$0xf] %vm854, %v841
      %861 = vst.msk [vmem:[#allocation3 + $0x18] sm:$0xf] %vm854, %v843
      %862 = vst.msk [vmem:[#allocation3 + $0x1c] sm:$0xf] %vm854, %v845
      %v863 = vld [vmem:[%s479] sm:$0xf]
      %v864 = vld [vmem:[%s479 + $0x4] sm:$0x1]
      %v865 = vld [vmem:[%s479 + $0x8] sm:$0xf]
      %v866 = vld [vmem:[%s479 + $0xc] sm:$0x1]
      %v867 = vld [vmem:[%s479 + $0x10] sm:$0xf]
      %v868 = vld [vmem:[%s479 + $0x14] sm:$0x1]
      %v869 = vld [vmem:[%s479 + $0x18] sm:$0xf]
      %v870 = vld [vmem:[%s479 + $0x1c] sm:$0x1]
      %v871 = vld [vmem:[%s479 + $0x20] sm:$0xf]
      %v872 = vld [vmem:[%s479 + $0x24] sm:$0x1]
      %v873 = vld [vmem:[%s479 + $0x28] sm:$0xf]
      %v874 = vld [vmem:[%s479 + $0x2c] sm:$0x1]
      %v875 = vld [vmem:[%s479 + $0x30] sm:$0xf]
      %v876 = vld [vmem:[%s479 + $0x34] sm:$0x1]
      %v877 = vld [vmem:[%s479 + $0x38] sm:$0xf]
      %v878 = vld [vmem:[%s479 + $0x3c] sm:$0x1]
      %v880 = vshrl.u32 %v863, 16
      %v882 = vrot.slane %v880, 4
      %v883 = vshll.u32 %v863, 16
      %v885 = vrot.slane %v883, 5
      %v886 = vor.u32 %v882, %v885
      %v887 = vrot.slane %v886, 4
      %v889 = vshll.u32 %v864, 16
      %v891 = vrot.slane %v889, 5
      %v892 = vsel %vm568, %v887, %v891
      %v894 = vshrl.u32 %v865, 16
      %v896 = vrot.slane %v894, 4
      %v897 = vshll.u32 %v865, 16
      %v899 = vrot.slane %v897, 5
      %v900 = vor.u32 %v896, %v899
      %v901 = vrot.slane %v900, 4
      %v903 = vshll.u32 %v866, 16
      %v905 = vrot.slane %v903, 5
      %v906 = vsel %vm568, %v901, %v905
      %v908 = vshrl.u32 %v867, 16
      %v910 = vrot.slane %v908, 4
      %v911 = vshll.u32 %v867, 16
      %v913 = vrot.slane %v911, 5
      %v914 = vor.u32 %v910, %v913
      %v915 = vrot.slane %v914, 4
      %v917 = vshll.u32 %v868, 16
      %v919 = vrot.slane %v917, 5
      %v920 = vsel %vm568, %v915, %v919
      %v922 = vshrl.u32 %v869, 16
      %v924 = vrot.slane %v922, 4
      %v925 = vshll.u32 %v869, 16
      %v927 = vrot.slane %v925, 5
      %v928 = vor.u32 %v924, %v927
      %v929 = vrot.slane %v928, 4
      %v931 = vshll.u32 %v870, 16
      %v933 = vrot.slane %v931, 5
      %v934 = vsel %vm568, %v929, %v933
      %v936 = vshrl.u32 %v871, 16
      %v938 = vrot.slane %v936, 4
      %v939 = vshll.u32 %v871, 16
      %v941 = vrot.slane %v939, 5
      %v942 = vor.u32 %v938, %v941
      %v943 = vrot.slane %v942, 4
      %v945 = vshll.u32 %v872, 16
      %v947 = vrot.slane %v945, 5
      %v948 = vsel %vm568, %v943, %v947
      %v950 = vshrl.u32 %v873, 16
      %v952 = vrot.slane %v950, 4
      %v953 = vshll.u32 %v873, 16
      %v955 = vrot.slane %v953, 5
      %v956 = vor.u32 %v952, %v955
      %v957 = vrot.slane %v956, 4
      %v959 = vshll.u32 %v874, 16
      %v961 = vrot.slane %v959, 5
      %v962 = vsel %vm568, %v957, %v961
      %v964 = vshrl.u32 %v875, 16
      %v966 = vrot.slane %v964, 4
      %v967 = vshll.u32 %v875, 16
      %v969 = vrot.slane %v967, 5
      %v970 = vor.u32 %v966, %v969
      %v971 = vrot.slane %v970, 4
      %v973 = vshll.u32 %v876, 16
      %v975 = vrot.slane %v973, 5
      %v976 = vsel %vm568, %v971, %v975
      %v978 = vshrl.u32 %v877, 16
      %v980 = vrot.slane %v978, 4
      %v981 = vshll.u32 %v877, 16
      %v983 = vrot.slane %v981, 5
      %v984 = vor.u32 %v980, %v983
      %v985 = vrot.slane %v984, 4
      %v987 = vshll.u32 %v878, 16
      %v989 = vrot.slane %v987, 5
      %v990 = vsel %vm568, %v985, %v989
      %991 = vrot.lane.b32.xlu0 %v892, 32
      %v992 = vpop.permute.xlu0 %991
      %993 = vrot.lane.b32.xlu0 %v906, 32
      %v994 = vpop.permute.xlu0 %993
      %995 = vrot.lane.b32.xlu0 %v920, 32
      %v996 = vpop.permute.xlu0 %995
      %997 = vrot.lane.b32.xlu0 %v934, 32
      %v998 = vpop.permute.xlu0 %997
      %999 = vrot.lane.b32.xlu0 %v948, 32
      %v1000 = vpop.permute.xlu0 %999
      %1001 = vrot.lane.b32.xlu0 %v962, 32
      %v1002 = vpop.permute.xlu0 %1001
      %1003 = vrot.lane.b32.xlu0 %v976, 32
      %v1004 = vpop.permute.xlu0 %1003
      %1005 = vrot.lane.b32.xlu0 %v990, 32
      %v1006 = vpop.permute.xlu0 %1005
      %vm1015 = vcmask 322816
      %1016 = vst.msk [vmem:[#allocation3] sm:$0xf] %vm1015, %v992
      %1017 = vst.msk [vmem:[#allocation3 + $0x4] sm:$0xf] %vm1015, %v994
      %1018 = vst.msk [vmem:[#allocation3 + $0x8] sm:$0xf] %vm1015, %v996
      %1019 = vst.msk [vmem:[#allocation3 + $0xc] sm:$0xf] %vm1015, %v998
      %1020 = vst.msk [vmem:[#allocation3 + $0x10] sm:$0xf] %vm1015, %v1000
      %1021 = vst.msk [vmem:[#allocation3 + $0x14] sm:$0xf] %vm1015, %v1002
      %1022 = vst.msk [vmem:[#allocation3 + $0x18] sm:$0xf] %vm1015, %v1004
      %1023 = vst.msk [vmem:[#allocation3 + $0x1c] sm:$0xf] %vm1015, %v1006
      %v1024 = vld [vmem:[%s479] sm:$0xe]
      %v1025 = vld [vmem:[%s479 + $0x4] sm:$0x1]
      %v1026 = vld [vmem:[%s479 + $0x8] sm:$0xe]
      %v1027 = vld [vmem:[%s479 + $0xc] sm:$0x1]
      %v1028 = vld [vmem:[%s479 + $0x10] sm:$0xe]
      %v1029 = vld [vmem:[%s479 + $0x14] sm:$0x1]
      %v1030 = vld [vmem:[%s479 + $0x18] sm:$0xe]
      %v1031 = vld [vmem:[%s479 + $0x1c] sm:$0x1]
      %v1032 = vld [vmem:[%s479 + $0x20] sm:$0xe]
      %v1033 = vld [vmem:[%s479 + $0x24] sm:$0x1]
      %v1034 = vld [vmem:[%s479 + $0x28] sm:$0xe]
      %v1035 = vld [vmem:[%s479 + $0x2c] sm:$0x1]
      %v1036 = vld [vmem:[%s479 + $0x30] sm:$0xe]
      %v1037 = vld [vmem:[%s479 + $0x34] sm:$0x1]
      %v1038 = vld [vmem:[%s479 + $0x38] sm:$0xe]
      %v1039 = vld [vmem:[%s479 + $0x3c] sm:$0x1]
      %v1056 = vrot.slane %v1024, 5
      %v1057 = vrot.slane %v1056, 4
      %v1058 = vrot.slane %v1025, 5
      %v1059 = vsel %vm748, %v1057, %v1058
      %v1060 = vrot.slane %v1026, 5
      %v1061 = vrot.slane %v1060, 4
      %v1062 = vrot.slane %v1027, 5
      %v1063 = vsel %vm748, %v1061, %v1062
      %v1064 = vrot.slane %v1028, 5
      %v1065 = vrot.slane %v1064, 4
      %v1066 = vrot.slane %v1029, 5
      %v1067 = vsel %vm748, %v1065, %v1066
      %v1068 = vrot.slane %v1030, 5
      %v1069 = vrot.slane %v1068, 4
      %v1070 = vrot.slane %v1031, 5
      %v1071 = vsel %vm748, %v1069, %v1070
      %v1072 = vrot.slane %v1032, 5
      %v1073 = vrot.slane %v1072, 4
      %v1074 = vrot.slane %v1033, 5
      %v1075 = vsel %vm748, %v1073, %v1074
      %v1076 = vrot.slane %v1034, 5
      %v1077 = vrot.slane %v1076, 4
      %v1078 = vrot.slane %v1035, 5
      %v1079 = vsel %vm748, %v1077, %v1078
      %v1080 = vrot.slane %v1036, 5
      %v1081 = vrot.slane %v1080, 4
      %v1082 = vrot.slane %v1037, 5
      %v1083 = vsel %vm748, %v1081, %v1082
      %v1084 = vrot.slane %v1038, 5
      %v1085 = vrot.slane %v1084, 4
      %v1086 = vrot.slane %v1039, 5
      %v1087 = vsel %vm748, %v1085, %v1086
      %1088 = vrot.lane.b32.xlu0 %v1059, 40
      %v1089 = vpop.permute.xlu0 %1088
      %1090 = vrot.lane.b32.xlu0 %v1063, 40
      %v1091 = vpop.permute.xlu0 %1090
      %1092 = vrot.lane.b32.xlu0 %v1067, 40
      %v1093 = vpop.permute.xlu0 %1092
      %1094 = vrot.lane.b32.xlu0 %v1071, 40
      %v1095 = vpop.permute.xlu0 %1094
      %1096 = vrot.lane.b32.xlu0 %v1075, 40
      %v1097 = vpop.permute.xlu0 %1096
      %1098 = vrot.lane.b32.xlu0 %v1079, 40
      %v1099 = vpop.permute.xlu0 %1098
      %1100 = vrot.lane.b32.xlu0 %v1083, 40
      %v1101 = vpop.permute.xlu0 %1100
      %1102 = vrot.lane.b32.xlu0 %v1087, 40
      %v1103 = vpop.permute.xlu0 %1102
      %vm1112 = vcmask 388416
      %1113 = vst.msk [vmem:[#allocation3] sm:$0xf] %vm1112, %v1089
      %1114 = vst.msk [vmem:[#allocation3 + $0x4] sm:$0xf] %vm1112, %v1091
      %1115 = vst.msk [vmem:[#allocation3 + $0x8] sm:$0xf] %vm1112, %v1093
      %1116 = vst.msk [vmem:[#allocation3 + $0xc] sm:$0xf] %vm1112, %v1095
      %1117 = vst.msk [vmem:[#allocation3 + $0x10] sm:$0xf] %vm1112, %v1097
      %1118 = vst.msk [vmem:[#allocation3 + $0x14] sm:$0xf] %vm1112, %v1099
      %1119 = vst.msk [vmem:[#allocation3 + $0x18] sm:$0xf] %vm1112, %v1101
      %1120 = vst.msk [vmem:[#allocation3 + $0x1c] sm:$0xf] %vm1112, %v1103
      %s1121 = scalar_lea.vmem [#allocation2], 16
      %v1122 = vld [vmem:[%s1121] sm:$0xf]
      %v1123 = vld [vmem:[%s1121 + $0x8] sm:$0xf]
      %v1124 = vld [vmem:[%s1121 + $0x10] sm:$0xf]
      %v1125 = vld [vmem:[%s1121 + $0x18] sm:$0xf]
      %v1126 = vld [vmem:[%s1121 + $0x20] sm:$0xf]
      %v1127 = vld [vmem:[%s1121 + $0x28] sm:$0xf]
      %v1128 = vld [vmem:[%s1121 + $0x30] sm:$0xf]
      %v1129 = vld [vmem:[%s1121 + $0x38] sm:$0xf]
      %1138 = vrot.lane.b32.xlu0 %v1122, 48
      %v1139 = vpop.permute.xlu0 %1138
      %1140 = vrot.lane.b32.xlu0 %v1123, 48
      %v1141 = vpop.permute.xlu0 %1140
      %1142 = vrot.lane.b32.xlu0 %v1124, 48
      %v1143 = vpop.permute.xlu0 %1142
      %1144 = vrot.lane.b32.xlu0 %v1125, 48
      %v1145 = vpop.permute.xlu0 %1144
      %1146 = vrot.lane.b32.xlu0 %v1126, 48
      %v1147 = vpop.permute.xlu0 %1146
      %1148 = vrot.lane.b32.xlu0 %v1127, 48
      %v1149 = vpop.permute.xlu0 %1148
      %1150 = vrot.lane.b32.xlu0 %v1128, 48
      %v1151 = vpop.permute.xlu0 %1150
      %1152 = vrot.lane.b32.xlu0 %v1129, 48
      %v1153 = vpop.permute.xlu0 %1152
      %vm1162 = vcmask 454016
      %1163 = vst.msk [vmem:[#allocation3] sm:$0xf] %vm1162, %v1139
      %1164 = vst.msk [vmem:[#allocation3 + $0x4] sm:$0xf] %vm1162, %v1141
      %1165 = vst.msk [vmem:[#allocation3 + $0x8] sm:$0xf] %vm1162, %v1143
      %1166 = vst.msk [vmem:[#allocation3 + $0xc] sm:$0xf] %vm1162, %v1145
      %1167 = vst.msk [vmem:[#allocation3 + $0x10] sm:$0xf] %vm1162, %v1147
      %1168 = vst.msk [vmem:[#allocation3 + $0x14] sm:$0xf] %vm1162, %v1149
      %1169 = vst.msk [vmem:[#allocation3 + $0x18] sm:$0xf] %vm1162, %v1151
      %1170 = vst.msk [vmem:[#allocation3 + $0x1c] sm:$0xf] %vm1162, %v1153
      %v1171 = vld [vmem:[%s1121] sm:$0xf]
      %v1172 = vld [vmem:[%s1121 + $0x4] sm:$0x1]
      %v1173 = vld [vmem:[%s1121 + $0x8] sm:$0xf]
      %v1174 = vld [vmem:[%s1121 + $0xc] sm:$0x1]
      %v1175 = vld [vmem:[%s1121 + $0x10] sm:$0xf]
      %v1176 = vld [vmem:[%s1121 + $0x14] sm:$0x1]
      %v1177 = vld [vmem:[%s1121 + $0x18] sm:$0xf]
      %v1178 = vld [vmem:[%s1121 + $0x1c] sm:$0x1]
      %v1179 = vld [vmem:[%s1121 + $0x20] sm:$0xf]
      %v1180 = vld [vmem:[%s1121 + $0x24] sm:$0x1]
      %v1181 = vld [vmem:[%s1121 + $0x28] sm:$0xf]
      %v1182 = vld [vmem:[%s1121 + $0x2c] sm:$0x1]
      %v1183 = vld [vmem:[%s1121 + $0x30] sm:$0xf]
      %v1184 = vld [vmem:[%s1121 + $0x34] sm:$0x1]
      %v1185 = vld [vmem:[%s1121 + $0x38] sm:$0xf]
      %v1186 = vld [vmem:[%s1121 + $0x3c] sm:$0x1]
      %v1188 = vshrl.u32 %v1171, 16
      %v1190 = vrot.slane %v1188, 4
      %v1191 = vshll.u32 %v1171, 16
      %v1193 = vrot.slane %v1191, 5
      %v1194 = vor.u32 %v1190, %v1193
      %v1195 = vrot.slane %v1194, 4
      %v1197 = vshll.u32 %v1172, 16
      %v1199 = vrot.slane %v1197, 5
      %v1200 = vsel %vm568, %v1195, %v1199
      %v1202 = vshrl.u32 %v1173, 16
      %v1204 = vrot.slane %v1202, 4
      %v1205 = vshll.u32 %v1173, 16
      %v1207 = vrot.slane %v1205, 5
      %v1208 = vor.u32 %v1204, %v1207
      %v1209 = vrot.slane %v1208, 4
      %v1211 = vshll.u32 %v1174, 16
      %v1213 = vrot.slane %v1211, 5
      %v1214 = vsel %vm568, %v1209, %v1213
      %v1216 = vshrl.u32 %v1175, 16
      %v1218 = vrot.slane %v1216, 4
      %v1219 = vshll.u32 %v1175, 16
      %v1221 = vrot.slane %v1219, 5
      %v1222 = vor.u32 %v1218, %v1221
      %v1223 = vrot.slane %v1222, 4
      %v1225 = vshll.u32 %v1176, 16
      %v1227 = vrot.slane %v1225, 5
      %v1228 = vsel %vm568, %v1223, %v1227
      %v1230 = vshrl.u32 %v1177, 16
      %v1232 = vrot.slane %v1230, 4
      %v1233 = vshll.u32 %v1177, 16
      %v1235 = vrot.slane %v1233, 5
      %v1236 = vor.u32 %v1232, %v1235
      %v1237 = vrot.slane %v1236, 4
      %v1239 = vshll.u32 %v1178, 16
      %v1241 = vrot.slane %v1239, 5
      %v1242 = vsel %vm568, %v1237, %v1241
      %v1244 = vshrl.u32 %v1179, 16
      %v1246 = vrot.slane %v1244, 4
      %v1247 = vshll.u32 %v1179, 16
      %v1249 = vrot.slane %v1247, 5
      %v1250 = vor.u32 %v1246, %v1249
      %v1251 = vrot.slane %v1250, 4
      %v1253 = vshll.u32 %v1180, 16
      %v1255 = vrot.slane %v1253, 5
      %v1256 = vsel %vm568, %v1251, %v1255
      %v1258 = vshrl.u32 %v1181, 16
      %v1260 = vrot.slane %v1258, 4
      %v1261 = vshll.u32 %v1181, 16
      %v1263 = vrot.slane %v1261, 5
      %v1264 = vor.u32 %v1260, %v1263
      %v1265 = vrot.slane %v1264, 4
      %v1267 = vshll.u32 %v1182, 16
      %v1269 = vrot.slane %v1267, 5
      %v1270 = vsel %vm568, %v1265, %v1269
      %v1272 = vshrl.u32 %v1183, 16
      %v1274 = vrot.slane %v1272, 4
      %v1275 = vshll.u32 %v1183, 16
      %v1277 = vrot.slane %v1275, 5
      %v1278 = vor.u32 %v1274, %v1277
      %v1279 = vrot.slane %v1278, 4
      %v1281 = vshll.u32 %v1184, 16
      %v1283 = vrot.slane %v1281, 5
      %v1284 = vsel %vm568, %v1279, %v1283
      %v1286 = vshrl.u32 %v1185, 16
      %v1288 = vrot.slane %v1286, 4
      %v1289 = vshll.u32 %v1185, 16
      %v1291 = vrot.slane %v1289, 5
      %v1292 = vor.u32 %v1288, %v1291
      %v1293 = vrot.slane %v1292, 4
      %v1295 = vshll.u32 %v1186, 16
      %v1297 = vrot.slane %v1295, 5
      %v1298 = vsel %vm568, %v1293, %v1297
      %1299 = vrot.lane.b32.xlu0 %v1200, 56
      %v1300 = vpop.permute.xlu0 %1299
      %1301 = vrot.lane.b32.xlu0 %v1214, 56
      %v1302 = vpop.permute.xlu0 %1301
      %1303 = vrot.lane.b32.xlu0 %v1228, 56
      %v1304 = vpop.permute.xlu0 %1303
      %1305 = vrot.lane.b32.xlu0 %v1242, 56
      %v1306 = vpop.permute.xlu0 %1305
      %1307 = vrot.lane.b32.xlu0 %v1256, 56
      %v1308 = vpop.permute.xlu0 %1307
      %1309 = vrot.lane.b32.xlu0 %v1270, 56
      %v1310 = vpop.permute.xlu0 %1309
      %1311 = vrot.lane.b32.xlu0 %v1284, 56
      %v1312 = vpop.permute.xlu0 %1311
      %1313 = vrot.lane.b32.xlu0 %v1298, 56
      %v1314 = vpop.permute.xlu0 %1313
      %vm1323 = vcmask 519616
      %1324 = vst.msk [vmem:[#allocation3] sm:$0xf] %vm1323, %v1300
      %1325 = vst.msk [vmem:[#allocation3 + $0x4] sm:$0xf] %vm1323, %v1302
      %1326 = vst.msk [vmem:[#allocation3 + $0x8] sm:$0xf] %vm1323, %v1304
      %1327 = vst.msk [vmem:[#allocation3 + $0xc] sm:$0xf] %vm1323, %v1306
      %1328 = vst.msk [vmem:[#allocation3 + $0x10] sm:$0xf] %vm1323, %v1308
      %1329 = vst.msk [vmem:[#allocation3 + $0x14] sm:$0xf] %vm1323, %v1310
      %1330 = vst.msk [vmem:[#allocation3 + $0x18] sm:$0xf] %vm1323, %v1312
      %1331 = vst.msk [vmem:[#allocation3 + $0x1c] sm:$0xf] %vm1323, %v1314
      %v1332 = vld [vmem:[%s1121] sm:$0xe]
      %v1333 = vld [vmem:[%s1121 + $0x4] sm:$0x1]
      %v1334 = vld [vmem:[%s1121 + $0x8] sm:$0xe]
      %v1335 = vld [vmem:[%s1121 + $0xc] sm:$0x1]
      %v1336 = vld [vmem:[%s1121 + $0x10] sm:$0xe]
      %v1337 = vld [vmem:[%s1121 + $0x14] sm:$0x1]
      %v1338 = vld [vmem:[%s1121 + $0x18] sm:$0xe]
      %v1339 = vld [vmem:[%s1121 + $0x1c] sm:$0x1]
      %v1340 = vld [vmem:[%s1121 + $0x20] sm:$0xe]
      %v1341 = vld [vmem:[%s1121 + $0x24] sm:$0x1]
      %v1342 = vld [vmem:[%s1121 + $0x28] sm:$0xe]
      %v1343 = vld [vmem:[%s1121 + $0x2c] sm:$0x1]
      %v1344 = vld [vmem:[%s1121 + $0x30] sm:$0xe]
      %v1345 = vld [vmem:[%s1121 + $0x34] sm:$0x1]
      %v1346 = vld [vmem:[%s1121 + $0x38] sm:$0xe]
      %v1347 = vld [vmem:[%s1121 + $0x3c] sm:$0x1]
      %v1364 = vrot.slane %v1332, 5
      %v1365 = vrot.slane %v1364, 4
      %v1366 = vrot.slane %v1333, 5
      %v1367 = vsel %vm748, %v1365, %v1366
      %v1368 = vrot.slane %v1334, 5
      %v1369 = vrot.slane %v1368, 4
      %v1370 = vrot.slane %v1335, 5
      %v1371 = vsel %vm748, %v1369, %v1370
      %v1372 = vrot.slane %v1336, 5
      %v1373 = vrot.slane %v1372, 4
      %v1374 = vrot.slane %v1337, 5
      %v1375 = vsel %vm748, %v1373, %v1374
      %v1376 = vrot.slane %v1338, 5
      %v1377 = vrot.slane %v1376, 4
      %v1378 = vrot.slane %v1339, 5
      %v1379 = vsel %vm748, %v1377, %v1378
      %v1380 = vrot.slane %v1340, 5
      %v1381 = vrot.slane %v1380, 4
      %v1382 = vrot.slane %v1341, 5
      %v1383 = vsel %vm748, %v1381, %v1382
      %v1384 = vrot.slane %v1342, 5
      %v1385 = vrot.slane %v1384, 4
      %v1386 = vrot.slane %v1343, 5
      %v1387 = vsel %vm748, %v1385, %v1386
      %v1388 = vrot.slane %v1344, 5
      %v1389 = vrot.slane %v1388, 4
      %v1390 = vrot.slane %v1345, 5
      %v1391 = vsel %vm748, %v1389, %v1390
      %v1392 = vrot.slane %v1346, 5
      %v1393 = vrot.slane %v1392, 4
      %v1394 = vrot.slane %v1347, 5
      %v1395 = vsel %vm748, %v1393, %v1394
      %1396 = vrot.lane.b32.xlu0 %v1367, 64
      %v1397 = vpop.permute.xlu0 %1396
      %1398 = vrot.lane.b32.xlu0 %v1371, 64
      %v1399 = vpop.permute.xlu0 %1398
      %1400 = vrot.lane.b32.xlu0 %v1375, 64
      %v1401 = vpop.permute.xlu0 %1400
      %1402 = vrot.lane.b32.xlu0 %v1379, 64
      %v1403 = vpop.permute.xlu0 %1402
      %1404 = vrot.lane.b32.xlu0 %v1383, 64
      %v1405 = vpop.permute.xlu0 %1404
      %1406 = vrot.lane.b32.xlu0 %v1387, 64
      %v1407 = vpop.permute.xlu0 %1406
      %1408 = vrot.lane.b32.xlu0 %v1391, 64
      %v1409 = vpop.permute.xlu0 %1408
      %1410 = vrot.lane.b32.xlu0 %v1395, 64
      %v1411 = vpop.permute.xlu0 %1410
      %vm1420 = vcmask 585216
      %1421 = vst.msk [vmem:[#allocation3] sm:$0xf] %vm1420, %v1397
      %1422 = vst.msk [vmem:[#allocation3 + $0x4] sm:$0xf] %vm1420, %v1399
      %1423 = vst.msk [vmem:[#allocation3 + $0x8] sm:$0xf] %vm1420, %v1401
      %1424 = vst.msk [vmem:[#allocation3 + $0xc] sm:$0xf] %vm1420, %v1403
      %1425 = vst.msk [vmem:[#allocation3 + $0x10] sm:$0xf] %vm1420, %v1405
      %1426 = vst.msk [vmem:[#allocation3 + $0x14] sm:$0xf] %vm1420, %v1407
      %1427 = vst.msk [vmem:[#allocation3 + $0x18] sm:$0xf] %vm1420, %v1409
      %1428 = vst.msk [vmem:[#allocation3 + $0x1c] sm:$0xf] %vm1420, %v1411
      %v1429 = vld [vmem:[#allocation3] sm:$0xf]
      %v1430 = vld [vmem:[#allocation3 + $0x4] sm:$0xf]
      %v1431 = vld [vmem:[#allocation3 + $0x8] sm:$0xf]
      %v1432 = vld [vmem:[#allocation3 + $0xc] sm:$0xf]
      %v1433 = vld [vmem:[#allocation3 + $0x10] sm:$0xf]
      %v1434 = vld [vmem:[#allocation3 + $0x14] sm:$0xf]
      %v1435 = vld [vmem:[#allocation3 + $0x18] sm:$0xf]
      %v1436 = vld [vmem:[#allocation3 + $0x1c] sm:$0xf]
      %v1437 = vld [vmem:[%s4] sm:$0xf]
      %v1438 = vld [vmem:[%s4 + $0x4] sm:$0xf]
      %v1439 = vld [vmem:[%s4 + $0x8] sm:$0xf]
      %v1440 = vld [vmem:[%s4 + $0xc] sm:$0xf]
      %v1441 = vld [vmem:[%s4 + $0x10] sm:$0xf]
      %v1442 = vld [vmem:[%s4 + $0x14] sm:$0xf]
      %v1443 = vld [vmem:[%s4 + $0x18] sm:$0xf]
      %v1444 = vld [vmem:[%s4 + $0x1c] sm:$0xf]
      %v1445 = vld [vmem:[%s4 + $0x20] sm:$0xf]
      %v1454 = vunpack.c.l.b16 %v1429
      %v1455 = vunpack.c.l.b16 %v1430
      %v1456 = vunpack.c.l.b16 %v1431
      %v1457 = vunpack.c.l.b16 %v1432
      %v1458 = vunpack.c.l.b16 %v1433
      %v1459 = vunpack.c.l.b16 %v1434
      %v1460 = vunpack.c.l.b16 %v1435
      %v1461 = vunpack.c.l.b16 %v1436
      %v1462 = vpack.c.b16 %v1455, %v1454
      %v1463 = vpack.c.b16 %v1457, %v1456
      %v1464 = vpack.c.b16 %v1459, %v1458
      %v1465 = vpack.c.b16 %v1461, %v1460
      %v1475 = vunpack.c.l.b16 %v1437
      %v1476 = vunpack.c.l.b16 %v1438
      %v1477 = vunpack.c.l.b16 %v1439
      %v1478 = vunpack.c.l.b16 %v1440
      %v1479 = vunpack.c.l.b16 %v1441
      %v1480 = vunpack.c.l.b16 %v1442
      %v1481 = vunpack.c.l.b16 %v1443
      %v1482 = vunpack.c.l.b16 %v1444
      %v1483 = vunpack.c.l.b16 %v1445
      %v1484 = vpack.c.b16 %v1476, %v1475
      %v1485 = vpack.c.b16 %v1478, %v1477
      %v1486 = vpack.c.b16 %v1480, %v1479
      %v1487 = vpack.c.b16 %v1482, %v1481
      %v1488 = vpack.c.b16 %v1483, %v1483
      %vm1493 = vcmask 588800
      %v1495 = vsel %vm1493, %v1462, 0
      %v1498 = vsel %vm1493, %v1463, 0
      %v1501 = vsel %vm1493, %v1464, 0
      %v1504 = vsel %vm1493, %v1465, 0
      %vm1506 = vcmask 1043456
      %v1508 = vsel %vm1506, %v1488, 0
      %1510 = vmatprep.subr.bf16.mxu0 0
      %1511 = vmatpush1.bf16.msra.mxu0 %v1484
      %1512 = vmatprep.subr.bf16.mxu0 0
      %1513 = vmatpush1.bf16.msra.mxu0 %v1485
      %1514 = vmatprep.subr.bf16.mxu0 0
      %1515 = vmatpush1.bf16.msra.mxu0 %v1486
      %1516 = vmatprep.subr.bf16.mxu0 0
      %1517 = vmatpush1.bf16.msra.mxu0 %v1487
      %1518 = vmatprep.subr.bf16.mxu0 0
      %1519 = vmatpush1.bf16.msra.mxu0 %v1508
      %1520 = vmatprep.subr.bf16.mxu0 0
      %1521 = vmatpush1.bf16.msra.mxu0 0
      %1522 = vmatprep.subr.bf16.mxu0 0
      %1523 = vmatpush1.bf16.msra.mxu0 0
      %1524 = vmatprep.subr.bf16.mxu0 0
      %1525 = vmatpush1.bf16.msra.mxu0 0
      %1526 = vmatprep.subr.bf16.mxu0 0
      %1527 = vmatpush1.bf16.msra.mxu0 0
      %1528 = vmatprep.subr.bf16.mxu0 0
      %1529 = vmatpush1.bf16.msra.mxu0 0
      %1530 = vmatprep.subr.bf16.mxu0 0
      %1531 = vmatpush1.bf16.msra.mxu0 0
      %1532 = vmatprep.subr.bf16.mxu0 0
      %1533 = vmatpush1.bf16.msra.mxu0 0
      %1534 = vmatprep.subr.bf16.mxu0 0
      %1535 = vmatpush1.bf16.msra.mxu0 0
      %1536 = vmatprep.subr.bf16.mxu0 0
      %1537 = vmatpush1.bf16.msra.mxu0 0
      %1538 = vmatprep.subr.bf16.mxu0 0
      %1539 = vmatpush1.bf16.msra.mxu0 0
      %1540 = vmatprep.subr.bf16.mxu0 0
      %1541 = vmatpush1.bf16.msra.mxu0 0
      %1542 = vmatprep.mubr.bf16.mxu0 0
      %1543 = vmatmul.mubr.bf16.gmra.mrb[0].mxu0 %v1495
      %v1544 = vpop.f32.mrb[0].mxu0
      %v1545 = vadd.f32 0.0, %v1544
      %v1546 = vpop.f32.mrb[0].mxu0
      %v1547 = vpop.f32.mrb[0].mxu0
      %v1548 = vadd.f32 0.0, %v1547
      %v1549 = vpop.f32.mrb[0].mxu0
      %1550 = vmatprep.mubr.bf16.mxu0 0
      %1551 = vmatmul.mubr.bf16.gmra.mrb[0].mxu0 %v1498
      %v1552 = vpop.f32.mrb[0].mxu0
      %v1553 = vadd.f32 0.0, %v1552
      %v1554 = vpop.f32.mrb[0].mxu0
      %v1555 = vpop.f32.mrb[0].mxu0
      %v1556 = vadd.f32 0.0, %v1555
      %v1557 = vpop.f32.mrb[0].mxu0
      %1558 = vmatprep.mubr.bf16.mxu0 0
      %1559 = vmatmul.mubr.bf16.gmra.mrb[0].mxu0 %v1501
      %v1560 = vpop.f32.mrb[0].mxu0
      %v1561 = vadd.f32 0.0, %v1560
      %v1562 = vpop.f32.mrb[0].mxu0
      %v1563 = vpop.f32.mrb[0].mxu0
      %v1564 = vadd.f32 0.0, %v1563
      %v1565 = vpop.f32.mrb[0].mxu0
      %1566 = vmatprep.mubr.bf16.mxu0 0
      %1567 = vmatmul.mubr.bf16.gmra.mrb[0].mxu0 %v1504
      %v1568 = vpop.f32.mrb[0].mxu0
      %v1569 = vadd.f32 0.0, %v1568
      %v1570 = vpop.f32.mrb[0].mxu0
      %v1571 = vpop.f32.mrb[0].mxu0
      %v1572 = vadd.f32 0.0, %v1571
      %v1573 = vpop.f32.mrb[0].mxu0
      %1574 = vdwg.mxu0
      %vm1575 = vcmask 64512
      %1576 = vst.msk [vmem:[%s258] sm:$0xff] %vm1575, %v1545
      %1577 = vst.msk [vmem:[%s258 + $0x8] sm:$0xff] %vm1575, %v1548
      %1578 = vst.msk [vmem:[%s258 + $0x10] sm:$0xff] %vm1575, %v1553
      %1579 = vst.msk [vmem:[%s258 + $0x18] sm:$0xff] %vm1575, %v1556
      %1580 = vst.msk [vmem:[%s258 + $0x20] sm:$0xff] %vm1575, %v1561
      %1581 = vst.msk [vmem:[%s258 + $0x28] sm:$0xff] %vm1575, %v1564
      %1582 = vst.msk [vmem:[%s258 + $0x30] sm:$0xff] %vm1575, %v1569
      %1583 = vst.msk [vmem:[%s258 + $0x38] sm:$0xff] %vm1575, %v1572
      %v1584 = vsel %vm1575, %v1545, 0.0
      %v1585 = vsel %vm1575, %v1548, 0.0
      %v1586 = vadd.f32 %v1584, %v1585
      %v1587 = vsel %vm1575, %v1553, 0.0
      %v1588 = vadd.f32 %v1586, %v1587
      %v1589 = vsel %vm1575, %v1556, 0.0
      %v1590 = vadd.f32 %v1588, %v1589
      %v1591 = vsel %vm1575, %v1561, 0.0
      %v1592 = vadd.f32 %v1590, %v1591
      %v1593 = vsel %vm1575, %v1564, 0.0
      %v1594 = vadd.f32 %v1592, %v1593
      %v1595 = vsel %vm1575, %v1569, 0.0
      %v1596 = vadd.f32 %v1594, %v1595
      %v1597 = vsel %vm1575, %v1572, 0.0
      %v1598 = vadd.f32 %v1596, %v1597
      %v1599 = vrot.slane %v1598, 4
      %v1600 = vadd.f32 %v1598, %v1599
      %v1601 = vrot.slane %v1600, 2
      %v1602 = vadd.f32 %v1600, %v1601
      %v1603 = vrot.slane %v1602, 1
      %v1604 = vadd.f32 %v1602, %v1603
      %1605 = vst.msk [vmem:[%s262] sm:$0x1] %vm347, %v1604
      %v1606 = vmul.f32 %v1545, %v1545
      %v1607 = vmul.f32 %v1548, %v1548
      %v1608 = vmul.f32 %v1553, %v1553
      %v1609 = vmul.f32 %v1556, %v1556
      %v1610 = vmul.f32 %v1561, %v1561
      %v1611 = vmul.f32 %v1564, %v1564
      %v1612 = vmul.f32 %v1569, %v1569
      %v1613 = vmul.f32 %v1572, %v1572
      %v1614 = vsel %vm1575, %v1606, 0.0
      %v1615 = vsel %vm1575, %v1607, 0.0
      %v1616 = vadd.f32 %v1614, %v1615
      %v1617 = vsel %vm1575, %v1608, 0.0
      %v1618 = vadd.f32 %v1616, %v1617
      %v1619 = vsel %vm1575, %v1609, 0.0
      %v1620 = vadd.f32 %v1618, %v1619
      %v1621 = vsel %vm1575, %v1610, 0.0
      %v1622 = vadd.f32 %v1620, %v1621
      %v1623 = vsel %vm1575, %v1611, 0.0
      %v1624 = vadd.f32 %v1622, %v1623
      %v1625 = vsel %vm1575, %v1612, 0.0
      %v1626 = vadd.f32 %v1624, %v1625
      %v1627 = vsel %vm1575, %v1613, 0.0
      %v1628 = vadd.f32 %v1626, %v1627
      %v1629 = vrot.slane %v1628, 4
      %v1630 = vadd.f32 %v1628, %v1629
      %v1631 = vrot.slane %v1630, 2
      %v1632 = vadd.f32 %v1630, %v1631
      %v1633 = vrot.slane %v1632, 1
      %v1634 = vadd.f32 %v1632, %v1633
      %1635 = vst.msk [vmem:[%s262 + $0x1] sm:$0x1] %vm347, %v1634
      %p1636 = scmp.lt.s32.totalorder %s18, 1
      %s1637 = scalar_select %p1636, %s18, 1
      %s1638 = smul.addr %s1637, 8
      %s1639 = smul.addr %s1638, 8
      %s1640 = scalar_lea.vmem %s5, %s1639
      %p1641 = scmp.lt.s32.totalorder %s18, 1
      %s1642 = scalar_select %p1641, %s18, 1
      %s1643 = smul.addr %s1642, 2
      %s1644 = scalar_lea.vmem %s6, %s1643
      // Predicated region
      $region41: #{down_forward.4} parent=39 // pred_check
        %p1645 = pneg %p146
      $region42: #{down_forward.4} parent=39 // pred_check_branch
        %1647 = sbr.rel (%p1645) target = $region44
      $region43: #{down_forward.4} parent=39 // pred_region
        _
      $region44: #{down_forward.4} parent=39 // pred_fallthru
        _
      // Predicated region
      $region45: #{down_forward.4} parent=39 // pred_check
        %p1648 = pneg %p172
      $region46: #{down_forward.4} parent=39 // pred_check_branch
        %1650 = sbr.rel (%p1648) target = $region48
      $region47: #{down_forward.4} parent=39 // pred_region
        _
      $region48: #{down_forward.4} parent=39 // pred_fallthru
        _
    $region40: #{down_forward.4} parent=5 // pred_fallthru
      _
    %p1651 = scmp.le.s32.totalorder 2, %s13
    // Predicated region
    $region49: #{down_forward.4} parent=5 // pred_check
      %p1652 = pneg %p1651
    $region50: #{down_forward.4} parent=5 // pred_check_branch
      %1654 = sbr.rel (%p1652) target = $region52
    $region51: #{down_forward.4} parent=5 // pred_region
      %s1655 = ssub.s32 %s13, 2
      // Predicated region
      $region53: #{down_forward.4} parent=51 // pred_check
        %p1656 = pneg %p152
      $region54: #{down_forward.4} parent=51 // pred_check_branch
        %1658 = sbr.rel (%p1656) target = $region56
      $region55: #{down_forward.4} parent=51 // pred_region
        %p1659 = scmp.lt.s32.totalorder %s19, 1
        %s1660 = scalar_select %p1659, %s19, 1
        %s1661 = smul.addr %s1660, 8
        %s1662 = smul.addr %s1661, 8
        %s1663 = scalar_lea.vmem %s5, %s1662
      $region56: #{down_forward.4} parent=51 // pred_fallthru
        _
      // Predicated region
      $region57: #{down_forward.4} parent=51 // pred_check
        %p1664 = pneg %p178
      $region58: #{down_forward.4} parent=51 // pred_check_branch
        %1666 = sbr.rel (%p1664) target = $region60
      $region59: #{down_forward.4} parent=51 // pred_region
        %p1667 = scmp.lt.s32.totalorder %s19, 1
        %s1668 = scalar_select %p1667, %s19, 1
        %s1669 = smul.addr %s1668, 2
        %s1670 = scalar_lea.vmem %s6, %s1669
      $region60: #{down_forward.4} parent=51 // pred_fallthru
        _
    $region52: #{down_forward.4} parent=5 // pred_fallthru
      _
  $region6: #{down_forward.4} parent=0 // loop_footer
    %s17 = sadd.s32 1, %s13
  $region7: #{down_forward.4} parent=0 // loop_footer_branch
    %12 = sbr.rel target = $region3
  $region8: #{down_forward.4} parent=0 // loop_exit
    _

</llo_original>
